<compile_context>
chip_gen: v6e
topology: v6e:2x2x1
jax: 0.10.0
libtpu: 0.0.40
codegen_flags: <defaults>
</compile_context>

<pallas_src>
import numpy as np
import jax
import jax.numpy as jnp
from jax.experimental import pallas as pl
from jax.experimental.pallas import tpu as pltpu

BETA = 0.5          # snn.Leaky beta (inert for a single step from mem=0)
THRESHOLD = 1.0     # snn.Leaky default threshold

# Static geometry implied by fc1 = 64*4*4 -> 28x28 single-channel input.
K = 5                        # conv kernel size
H_IN = W_IN = 28
C1 = 12                      # conv1 out channels
C1P = 16                     # conv1 channels zero-padded to 16 (vreg-friendly)
C2 = 64                      # conv2 out channels
HO1 = H_IN - K + 1           # 24  conv1 output side
HP1 = HO1 // 2               # 12  after 2x2 max-pool
HO2 = HP1 - K + 1            # 8   conv2 output side
HP2 = HO2 // 2               # 4   after 2x2 max-pool
NCLS = 10

CONV1_K = K * W_IN           # 140  conv1 LHS lanes: kh*28 + j
SPK1_W = HP1 * C1P           # 192  spk1 lanes: jp*16 + c
CONV1_N = 2 * SPK1_W         # 384  conv1 output lanes: s*192 + ojp*16 + c
CONV2_N = HO2 * C2           # 512  conv2 output lanes: oj*64 + co
POOL2_W = CONV2_N - C2       # 448  width after column-pair max (valid at ojp*128+co)
W2T_ROWS = K * SPK1_W        # 960  stacked conv2 Toeplitz weight rows
WFC_ROWS = HP2 * POOL2_W     # 1792 fc weight rows (zero rows at garbage lanes)


# ---------------------------------------------------------------------------
# Static (numpy) index / placement tables — wrapper-side layout plumbing only.
# ---------------------------------------------------------------------------
def _conv1_row_gather():
    # x1[b, r*12+oip, kh*28+j] = x[b, 2*oip + r + kh, j]
    r = np.arange(2)[:, None, None]
    oip = np.arange(HP1)[None, :, None]
    kh = np.arange(K)[None, None, :]
    return (2 * oip + r + kh).reshape(2 * HP1, K).astype(np.int32)        # (24, 5)


def _conv1_placement():
    # P1[j, s, ojp, kw] = 1  iff  j == 2*ojp + s + kw
    P = np.zeros((W_IN, 2, HP1, K), np.float32)
    for s in range(2):
        for ojp in range(HP1):
            for kw in range(K):
                P[2 * ojp + s + kw, s, ojp, kw] = 1.0
    return P


def _conv2_placement():
    # P2[jp, oj, kw] = 1  iff  jp == oj + kw
    P = np.zeros((HP1, HO2, K), np.float32)
    for oj in range(HO2):
        for kw in range(K):
            P[oj + kw, oj, kw] = 1.0
    return P


_ROWS1 = _conv1_row_gather()
_P1 = _conv1_placement()
_P2 = _conv2_placement()


# ---------------------------------------------------------------------------
# Kernel: one grid step = one sample, everything kept as wide VMEM values.
# ---------------------------------------------------------------------------
def fused_net_kernel(x1_ref, w1t_ref, b1t_ref, w2t_ref, b2t_ref, wfc_ref, bfc_ref,
                     spk3_ref, mem3_ref):
    f32 = jnp.float32

    # ---- conv1: ONE matmul covers all 4 pool phases (row phase r in rows,
    # column phase s in lanes).  acc1[r*12+oip, s*192+ojp*16+c].
    acc1 = jnp.dot(x1_ref[0], w1t_ref[...], preferred_element_type=f32)    # (24, 384)
    # 2x2 maxpool = max over row phase then column phase; bias after the max
    # (per-channel constant, commutes with max).
    mr = jnp.maximum(acc1[0:HP1, :], acc1[HP1:2 * HP1, :])                 # (12, 384)
    cur1 = jnp.maximum(mr[:, 0:SPK1_W], mr[:, SPK1_W:2 * SPK1_W]) + b1t_ref[...]
    spk1 = (cur1 > THRESHOLD).astype(f32)                                  # (12, 192) [ip, jp*16+c]

    # ---- conv2: 5 accumulating row-shifted Toeplitz matmuls, no im2col scatter.
    acc2 = jnp.dot(spk1[0:HO2, :], w2t_ref[0:SPK1_W, :],
                   preferred_element_type=f32)
    for kh in range(1, K):
        acc2 = acc2 + jnp.dot(spk1[kh:kh + HO2, :],
                              w2t_ref[kh * SPK1_W:(kh + 1) * SPK1_W, :],
                              preferred_element_type=f32)
    acc2 = acc2 + b2t_ref[...]                                             # (8, 512) [oi, oj*64+co]

    # ---- maxpool2 + LIF2, fully vectorized (no per-position stores).
    # Row pairs: pooled row oip lives at row 2*oip of m.
    m = jnp.maximum(acc2[0:HO2 - 1, :], acc2[1:HO2, :])                    # (7, 512)
    # Column pairs: pooled col ojp lives at lanes ojp*128 + co; other lanes are
    # garbage and get multiplied by zero rows of wfc below.
    m = jnp.maximum(m[:, 0:POOL2_W], m[:, C2:CONV2_N])                     # (7, 448)
    spk2 = (m > THRESHOLD).astype(f32)

    # ---- fc1 + LIF3: 4 accumulating (1,448)@(448,10) dots on single spk2 rows.
    cur3 = bfc_ref[...]
    for oip in range(HP2):
        cur3 = cur3 + jnp.dot(spk2[2 * oip:2 * oip + 1, :],
                              wfc_ref[oip * POOL2_W:(oip + 1) * POOL2_W, :],
                              preferred_element_type=f32)                  # (1, 10)
    mem3 = cur3                    # mem0 = 0 (init_leaky) => beta/reset inert
    mem3_ref[0] = mem3
    spk3_ref[0] = (mem3 > THRESHOLD).astype(f32)


# ---------------------------------------------------------------------------
# Wrapper: weight re-layout (Toeplitz / zero-padding) + pallas_call.
# ---------------------------------------------------------------------------
@jax.jit
def net_forward(x_nchw, params):
    """Pallas version of Net.forward; returns (spk3, mem3)."""
    f32 = jnp.float32
    B = x_nchw.shape[0]
    x = x_nchw[:, 0, :, :]                                                 # (B, 28, 28), Cin=1

    # Row-phase im2col of the input (layout plumbing only, no FLOPs).
    x1 = x[:, _ROWS1, :].reshape(B, 2 * HP1, CONV1_K)                      # (B, 24, 140)

    # conv1 weight as a pooled-output column-Toeplitz: (140, 384),
    # row kh*28+j, col s*192 + ojp*16 + c (channels zero-padded 12->16).
    w1p = jnp.zeros((K, K, C1P), f32).at[:, :, :C1].set(params["w1"].reshape(K, K, C1))
    w1t = jnp.einsum("jsok,hkc->hjsoc", _P1, w1p).reshape(CONV1_K, CONV1_N)
    b1p = jnp.zeros((C1P,), f32).at[:C1].set(params["b1"])
    b1t = jnp.tile(b1p, HP1).reshape(1, SPK1_W)                            # (1, 192)

    # conv2 weight as 5 stacked row-Toeplitz blocks: (960, 512),
    # row kh*192 + jp*16 + c, col oj*64 + co (zero rows for padded channels).
    w2p = jnp.zeros((K, K, C1P, C2), f32).at[:, :, :C1, :].set(params["w2"])
    w2t = jnp.einsum("pqk,hkcd->hpcqd", _P2, w2p).reshape(W2T_ROWS, CONV2_N)
    b2t = jnp.tile(params["b2"], HO2).reshape(1, CONV2_N)                  # (1, 512)

    # fc weight scattered to the kernel's wide spk2 layout: (1792, 10),
    # row oip*448 + ojp*128 + co holds wfc[co*16 + oip*4 + ojp]; all rows that
    # correspond to pooling-garbage lanes are zero.
    wfc_r = jnp.transpose(params["wfc"].reshape(C2, HP2, HP2, NCLS), (1, 2, 0, 3))
    wfc_big = jnp.zeros((HP2, HP2, 2 * C2, NCLS), f32).at[:, :, :C2, :].set(wfc_r)
    wfc_big = wfc_big.reshape(HP2, HP2 * 2 * C2, NCLS)[:, :POOL2_W, :]
    wfc_big = wfc_big.reshape(WFC_ROWS, NCLS)
    bfc = params["bfc"].reshape(1, NCLS)

    out_sds = jax.ShapeDtypeStruct((B, 1, NCLS), jnp.float32)
    spk3, mem3 = pl.pallas_call(
        fused_net_kernel,
        out_shape=(out_sds, out_sds),
        grid=(B,),
        in_specs=[
            pl.BlockSpec((1, 2 * HP1, CONV1_K), lambda b: (b, 0, 0)),
            pl.BlockSpec((CONV1_K, CONV1_N), lambda b: (0, 0)),
            pl.BlockSpec((1, SPK1_W), lambda b: (0, 0)),
            pl.BlockSpec((W2T_ROWS, CONV2_N), lambda b: (0, 0)),
            pl.BlockSpec((1, CONV2_N), lambda b: (0, 0)),
            pl.BlockSpec((WFC_ROWS, NCLS), lambda b: (0, 0)),
            pl.BlockSpec((1, NCLS), lambda b: (0, 0)),
        ],
        out_specs=(
            pl.BlockSpec((1, 1, NCLS), lambda b: (b, 0, 0)),
            pl.BlockSpec((1, 1, NCLS), lambda b: (b, 0, 0)),
        ),
        compiler_params=pltpu.CompilerParams(
            dimension_semantics=("parallel",)),      # v7x: batch across 2 TCs
    )(x1, w1t, b1t, w2t, b2t, wfc_big, bfc)
    return spk3[:, 0, :], mem3[:, 0, :]


# ---------------------------------------------------------------------------
# Pure-JAX reference of the same forward pass (for validation).
# ---------------------------------------------------------------------------
def reference_forward(x_nchw, params):
    hi = jax.lax.Precision.HIGHEST
    x = jnp.transpose(x_nchw, (0, 2, 3, 1))

    def conv(a, w, b):
        y = jax.lax.conv_general_dilated(
            a, w, (1, 1), "VALID",
            dimension_numbers=("NHWC", "HWIO", "NHWC"), precision=hi)
        return y + b[None, None, None, :]

    def pool(a):
        return jax.lax.reduce_window(a, -jnp.inf, jax.lax.max,
                                     (1, 2, 2, 1), (1, 2, 2, 1), "VALID")

    def lif(cur):
        mem = BETA * 0.0 + cur
        return (mem > THRESHOLD).astype(jnp.float32), mem

    spk1, _ = lif(pool(conv(x, params["w1"], params["b1"])))
    spk2, _ = lif(pool(conv(spk1, params["w2"], params["b2"])))
    feat = jnp.transpose(spk2, (0, 3, 1, 2)).reshape(x.shape[0], -1)
    cur3 = jnp.dot(feat, params["wfc"], precision=hi) + params["bfc"]
    return lif(cur3)


if __name__ == "__main__":
    key = jax.random.PRNGKey(0)
    k1, k2, k3, k4, k5, k6, kx = jax.random.split(key, 7)

    def uinit(k, shape, fan_in, gain=1.0):
        bound = gain / np.sqrt(fan_in)
        return jax.random.uniform(k, shape, jnp.float32, -bound, bound)

    # Deterministic synthetic parameters (shapes from Net.__init__); gain>1 so
    # some spikes actually propagate through the untrained net.
    params = {
        "w1": uinit(k1, (5, 5, 1, 12), 5 * 5 * 1, gain=3.0),       # conv1, HWIO
        "b1": uinit(k2, (12,), 5 * 5 * 1),
        "w2": uinit(k3, (5, 5, 12, 64), 5 * 5 * 12, gain=3.0),     # conv2, HWIO
        "b2": uinit(k4, (64,), 5 * 5 * 12),
        "wfc": uinit(k5, (64 * 4 * 4, 10), 64 * 4 * 4, gain=3.0),  # fc1 (in, out)
        "bfc": uinit(k6, (10,), 64 * 4 * 4),
    }
    # MNIST-style input implied by fc1 = 64*4*4: (B, 1, 28, 28) NCHW, small B.
    x = jax.random.uniform(kx, (2, 1, 28, 28), jnp.float32)

    spk3, mem3 = net_forward(x, params)
    jax.block_until_ready((spk3, mem3))

    ref_spk3, ref_mem3 = reference_forward(x, params)
    np.testing.assert_allclose(np.asarray(mem3), np.asarray(ref_mem3),
                               rtol=1e-4, atol=1e-4)
    # Tolerance-aware spike check: ignore potentials within 1e-3 of threshold,
    # where accumulation-order differences could legitimately flip the spike.
    safe = np.abs(np.asarray(ref_mem3) - THRESHOLD) > 1e-3
    np.testing.assert_array_equal(np.asarray(spk3)[safe], np.asarray(ref_spk3)[safe])
    assert spk3.shape == (2, 10) and mem3.shape == (2, 10)
    print("KERNEL_OK")
</pallas_src>

<mosaic_0001>
module attributes {stable_mosaic.version = 11 : i64} {
  func.func @fused_net_kernel(%arg0: i32, %arg1: memref<1x24x140xf32, #tpu.memory_space<vmem>>, %arg2: memref<140x384xf32, #tpu.memory_space<vmem>>, %arg3: memref<1x192xf32, #tpu.memory_space<vmem>>, %arg4: memref<960x512xf32, #tpu.memory_space<vmem>>, %arg5: memref<1x512xf32, #tpu.memory_space<vmem>>, %arg6: memref<1792x10xf32, #tpu.memory_space<vmem>>, %arg7: memref<1x10xf32, #tpu.memory_space<vmem>>, %arg8: memref<1x1x10xf32, #tpu.memory_space<vmem>>, %arg9: memref<1x1x10xf32, #tpu.memory_space<vmem>>) attributes {dimension_semantics = [#tpu.dimension_semantics<parallel>], iteration_bounds = array<i64: 2>, scalar_prefetch = 0 : i64, scratch_operands = 0 : i64, tpu.core_type = #tpu.core_type<tc>, window_params = [{transform_indices = @transform_0, window_bounds = array<i64: 1, 24, 140>}, {pipeline_mode = #tpu.pipeline_mode<synchronous>, transform_indices = @transform_1, window_bounds = array<i64: 140, 384>}, {pipeline_mode = #tpu.pipeline_mode<synchronous>, transform_indices = @transform_2, window_bounds = array<i64: 1, 192>}, {pipeline_mode = #tpu.pipeline_mode<synchronous>, transform_indices = @transform_3, window_bounds = array<i64: 960, 512>}, {pipeline_mode = #tpu.pipeline_mode<synchronous>, transform_indices = @transform_4, window_bounds = array<i64: 1, 512>}, {pipeline_mode = #tpu.pipeline_mode<synchronous>, transform_indices = @transform_5, window_bounds = array<i64: 1792, 10>}, {pipeline_mode = #tpu.pipeline_mode<synchronous>, transform_indices = @transform_6, window_bounds = array<i64: 1, 10>}, {transform_indices = @transform_7, window_bounds = array<i64: 1, 1, 10>}, {transform_indices = @transform_8, window_bounds = array<i64: 1, 1, 10>}]} {
    %c0 = arith.constant 0 : index
    %c0_0 = arith.constant 0 : index
    %c0_1 = arith.constant 0 : index
    %0 = vector.load %arg1[%c0, %c0_0, %c0_1] : memref<1x24x140xf32, #tpu.memory_space<vmem>>, vector<1x24x140xf32>
    %1 = vector.shape_cast %0 : vector<1x24x140xf32> to vector<24x140xf32>
    %c0_2 = arith.constant 0 : index
    %c0_3 = arith.constant 0 : index
    %2 = vector.load %arg2[%c0_2, %c0_3] : memref<140x384xf32, #tpu.memory_space<vmem>>, vector<140x384xf32>
    %cst = arith.constant dense<0.000000e+00> : vector<24x384xf32>
    %3 = tpu.matmul %1, %2, %cst {dimension_numbers = #tpu.dot_dimension_numbers<[1], [0], [0], [1], [0, 0, 1, 1], [], []>} : vector<24x140xf32>, vector<140x384xf32>, vector<24x384xf32> -> vector<24x384xf32>
    %4 = vector.extract_strided_slice %3 {offsets = [0, 0], sizes = [12, 384], strides = [1, 1]} : vector<24x384xf32> to vector<12x384xf32>
    %5 = vector.extract_strided_slice %3 {offsets = [12, 0], sizes = [12, 384], strides = [1, 1]} : vector<24x384xf32> to vector<12x384xf32>
    %6 = arith.maximumf %4, %5 : vector<12x384xf32>
    %7 = vector.extract_strided_slice %6 {offsets = [0, 0], sizes = [12, 192], strides = [1, 1]} : vector<12x384xf32> to vector<12x192xf32>
    %8 = vector.extract_strided_slice %6 {offsets = [0, 192], sizes = [12, 192], strides = [1, 1]} : vector<12x384xf32> to vector<12x192xf32>
    %9 = arith.maximumf %7, %8 : vector<12x192xf32>
    %c0_4 = arith.constant 0 : index
    %c0_5 = arith.constant 0 : index
    %10 = vector.load %arg3[%c0_4, %c0_5] : memref<1x192xf32, #tpu.memory_space<vmem>>, vector<1x192xf32>
    %11 = vector.broadcast %10 : vector<1x192xf32> to vector<12x192xf32>
    %12 = arith.addf %9, %11 : vector<12x192xf32>
    %cst_6 = arith.constant 1.000000e+00 : f32
    %13 = vector.broadcast %cst_6 : f32 to vector<12x192xf32>
    %14 = arith.cmpf ogt, %12, %13 : vector<12x192xf32>
    %15 = arith.extui %14 : vector<12x192xi1> to vector<12x192xi32>
    %16 = arith.sitofp %15 : vector<12x192xi32> to vector<12x192xf32>
    %17 = vector.extract_strided_slice %16 {offsets = [0, 0], sizes = [8, 192], strides = [1, 1]} : vector<12x192xf32> to vector<8x192xf32>
    %c0_7 = arith.constant 0 : index
    %c0_8 = arith.constant 0 : index
    %18 = vector.load %arg4[%c0_7, %c0_8] : memref<960x512xf32, #tpu.memory_space<vmem>>, vector<192x512xf32>
    %cst_9 = arith.constant dense<0.000000e+00> : vector<8x512xf32>
    %19 = tpu.matmul %17, %18, %cst_9 {dimension_numbers = #tpu.dot_dimension_numbers<[1], [0], [0], [1], [0, 0, 1, 1], [], []>} : vector<8x192xf32>, vector<192x512xf32>, vector<8x512xf32> -> vector<8x512xf32>
    %20 = vector.extract_strided_slice %16 {offsets = [1, 0], sizes = [8, 192], strides = [1, 1]} : vector<12x192xf32> to vector<8x192xf32>
    %c192 = arith.constant 192 : index
    %c0_10 = arith.constant 0 : index
    %21 = vector.load %arg4[%c192, %c0_10] : memref<960x512xf32, #tpu.memory_space<vmem>>, vector<192x512xf32>
    %cst_11 = arith.constant dense<0.000000e+00> : vector<8x512xf32>
    %22 = tpu.matmul %20, %21, %cst_11 {dimension_numbers = #tpu.dot_dimension_numbers<[1], [0], [0], [1], [0, 0, 1, 1], [], []>} : vector<8x192xf32>, vector<192x512xf32>, vector<8x512xf32> -> vector<8x512xf32>
    %23 = arith.addf %19, %22 : vector<8x512xf32>
    %24 = vector.extract_strided_slice %16 {offsets = [2, 0], sizes = [8, 192], strides = [1, 1]} : vector<12x192xf32> to vector<8x192xf32>
    %c384 = arith.constant 384 : index
    %c0_12 = arith.constant 0 : index
    %25 = vector.load %arg4[%c384, %c0_12] : memref<960x512xf32, #tpu.memory_space<vmem>>, vector<192x512xf32>
    %cst_13 = arith.constant dense<0.000000e+00> : vector<8x512xf32>
    %26 = tpu.matmul %24, %25, %cst_13 {dimension_numbers = #tpu.dot_dimension_numbers<[1], [0], [0], [1], [0, 0, 1, 1], [], []>} : vector<8x192xf32>, vector<192x512xf32>, vector<8x512xf32> -> vector<8x512xf32>
    %27 = arith.addf %23, %26 : vector<8x512xf32>
    %28 = vector.extract_strided_slice %16 {offsets = [3, 0], sizes = [8, 192], strides = [1, 1]} : vector<12x192xf32> to vector<8x192xf32>
    %c576 = arith.constant 576 : index
    %c0_14 = arith.constant 0 : index
    %29 = vector.load %arg4[%c576, %c0_14] : memref<960x512xf32, #tpu.memory_space<vmem>>, vector<192x512xf32>
    %cst_15 = arith.constant dense<0.000000e+00> : vector<8x512xf32>
    %30 = tpu.matmul %28, %29, %cst_15 {dimension_numbers = #tpu.dot_dimension_numbers<[1], [0], [0], [1], [0, 0, 1, 1], [], []>} : vector<8x192xf32>, vector<192x512xf32>, vector<8x512xf32> -> vector<8x512xf32>
    %31 = arith.addf %27, %30 : vector<8x512xf32>
    %32 = vector.extract_strided_slice %16 {offsets = [4, 0], sizes = [8, 192], strides = [1, 1]} : vector<12x192xf32> to vector<8x192xf32>
    %c768 = arith.constant 768 : index
    %c0_16 = arith.constant 0 : index
    %33 = vector.load %arg4[%c768, %c0_16] : memref<960x512xf32, #tpu.memory_space<vmem>>, vector<192x512xf32>
    %cst_17 = arith.constant dense<0.000000e+00> : vector<8x512xf32>
    %34 = tpu.matmul %32, %33, %cst_17 {dimension_numbers = #tpu.dot_dimension_numbers<[1], [0], [0], [1], [0, 0, 1, 1], [], []>} : vector<8x192xf32>, vector<192x512xf32>, vector<8x512xf32> -> vector<8x512xf32>
    %35 = arith.addf %31, %34 : vector<8x512xf32>
    %c0_18 = arith.constant 0 : index
    %c0_19 = arith.constant 0 : index
    %36 = vector.load %arg5[%c0_18, %c0_19] : memref<1x512xf32, #tpu.memory_space<vmem>>, vector<1x512xf32>
    %37 = vector.broadcast %36 : vector<1x512xf32> to vector<8x512xf32>
    %38 = arith.addf %35, %37 : vector<8x512xf32>
    %39 = vector.extract_strided_slice %38 {offsets = [0, 0], sizes = [7, 512], strides = [1, 1]} : vector<8x512xf32> to vector<7x512xf32>
    %40 = vector.extract_strided_slice %38 {offsets = [1, 0], sizes = [7, 512], strides = [1, 1]} : vector<8x512xf32> to vector<7x512xf32>
    %41 = arith.maximumf %39, %40 : vector<7x512xf32>
    %42 = vector.extract_strided_slice %41 {offsets = [0, 0], sizes = [7, 448], strides = [1, 1]} : vector<7x512xf32> to vector<7x448xf32>
    %43 = vector.extract_strided_slice %41 {offsets = [0, 64], sizes = [7, 448], strides = [1, 1]} : vector<7x512xf32> to vector<7x448xf32>
    %44 = arith.maximumf %42, %43 : vector<7x448xf32>
    %cst_20 = arith.constant 1.000000e+00 : f32
    %45 = vector.broadcast %cst_20 : f32 to vector<7x448xf32>
    %46 = arith.cmpf ogt, %44, %45 : vector<7x448xf32>
    %47 = arith.extui %46 : vector<7x448xi1> to vector<7x448xi32>
    %48 = arith.sitofp %47 : vector<7x448xi32> to vector<7x448xf32>
    %c0_21 = arith.constant 0 : index
    %c0_22 = arith.constant 0 : index
    %49 = vector.load %arg7[%c0_21, %c0_22] : memref<1x10xf32, #tpu.memory_space<vmem>>, vector<1x10xf32>
    %50 = vector.extract_strided_slice %48 {offsets = [0, 0], sizes = [1, 448], strides = [1, 1]} : vector<7x448xf32> to vector<1x448xf32>
    %c0_23 = arith.constant 0 : index
    %c0_24 = arith.constant 0 : index
    %51 = vector.load %arg6[%c0_23, %c0_24] : memref<1792x10xf32, #tpu.memory_space<vmem>>, vector<448x10xf32>
    %cst_25 = arith.constant dense<0.000000e+00> : vector<1x10xf32>
    %52 = tpu.matmul %50, %51, %cst_25 {dimension_numbers = #tpu.dot_dimension_numbers<[1], [0], [0], [1], [0, 0, 1, 1], [], []>} : vector<1x448xf32>, vector<448x10xf32>, vector<1x10xf32> -> vector<1x10xf32>
    %53 = arith.addf %49, %52 : vector<1x10xf32>
    %54 = vector.extract_strided_slice %48 {offsets = [2, 0], sizes = [1, 448], strides = [1, 1]} : vector<7x448xf32> to vector<1x448xf32>
    %c448 = arith.constant 448 : index
    %c0_26 = arith.constant 0 : index
    %55 = vector.load %arg6[%c448, %c0_26] : memref<1792x10xf32, #tpu.memory_space<vmem>>, vector<448x10xf32>
    %cst_27 = arith.constant dense<0.000000e+00> : vector<1x10xf32>
    %56 = tpu.matmul %54, %55, %cst_27 {dimension_numbers = #tpu.dot_dimension_numbers<[1], [0], [0], [1], [0, 0, 1, 1], [], []>} : vector<1x448xf32>, vector<448x10xf32>, vector<1x10xf32> -> vector<1x10xf32>
    %57 = arith.addf %53, %56 : vector<1x10xf32>
    %58 = vector.extract_strided_slice %48 {offsets = [4, 0], sizes = [1, 448], strides = [1, 1]} : vector<7x448xf32> to vector<1x448xf32>
    %c896 = arith.constant 896 : index
    %c0_28 = arith.constant 0 : index
    %59 = vector.load %arg6[%c896, %c0_28] : memref<1792x10xf32, #tpu.memory_space<vmem>>, vector<448x10xf32>
    %cst_29 = arith.constant dense<0.000000e+00> : vector<1x10xf32>
    %60 = tpu.matmul %58, %59, %cst_29 {dimension_numbers = #tpu.dot_dimension_numbers<[1], [0], [0], [1], [0, 0, 1, 1], [], []>} : vector<1x448xf32>, vector<448x10xf32>, vector<1x10xf32> -> vector<1x10xf32>
    %61 = arith.addf %57, %60 : vector<1x10xf32>
    %62 = vector.extract_strided_slice %48 {offsets = [6, 0], sizes = [1, 448], strides = [1, 1]} : vector<7x448xf32> to vector<1x448xf32>
    %c1344 = arith.constant 1344 : index
    %c0_30 = arith.constant 0 : index
    %63 = vector.load %arg6[%c1344, %c0_30] : memref<1792x10xf32, #tpu.memory_space<vmem>>, vector<448x10xf32>
    %cst_31 = arith.constant dense<0.000000e+00> : vector<1x10xf32>
    %64 = tpu.matmul %62, %63, %cst_31 {dimension_numbers = #tpu.dot_dimension_numbers<[1], [0], [0], [1], [0, 0, 1, 1], [], []>} : vector<1x448xf32>, vector<448x10xf32>, vector<1x10xf32> -> vector<1x10xf32>
    %65 = arith.addf %61, %64 : vector<1x10xf32>
    %c0_32 = arith.constant 0 : index
    %c0_33 = arith.constant 0 : index
    %c0_34 = arith.constant 0 : index
    %66 = vector.load %arg9[%c0_32, %c0_33, %c0_34] : memref<1x1x10xf32, #tpu.memory_space<vmem>>, vector<1x1x10xf32>
    %67 = vector.shape_cast %66 : vector<1x1x10xf32> to vector<1x10xf32>
    %68 = vector.shape_cast %65 : vector<1x10xf32> to vector<1x1x10xf32>
    tpu.vector_store %arg9[%c0_32, %c0_33, %c0_34], %68 {strides = array<i32>} : memref<1x1x10xf32, #tpu.memory_space<vmem>>, vector<1x1x10xf32>,
    %cst_35 = arith.constant 1.000000e+00 : f32
    %69 = vector.broadcast %cst_35 : f32 to vector<1x10xf32>
    %70 = arith.cmpf ogt, %65, %69 : vector<1x10xf32>
    %71 = arith.extui %70 : vector<1x10xi1> to vector<1x10xi32>
    %72 = arith.sitofp %71 : vector<1x10xi32> to vector<1x10xf32>
    %c0_36 = arith.constant 0 : index
    %c0_37 = arith.constant 0 : index
    %c0_38 = arith.constant 0 : index
    %73 = vector.load %arg8[%c0_36, %c0_37, %c0_38] : memref<1x1x10xf32, #tpu.memory_space<vmem>>, vector<1x1x10xf32>
    %74 = vector.shape_cast %73 : vector<1x1x10xf32> to vector<1x10xf32>
    %75 = vector.shape_cast %72 : vector<1x10xf32> to vector<1x1x10xf32>
    tpu.vector_store %arg8[%c0_36, %c0_37, %c0_38], %75 {strides = array<i32>} : memref<1x1x10xf32, #tpu.memory_space<vmem>>, vector<1x1x10xf32>,
    return
  }
  func.func @transform_0(%arg0: i32) -> (i32, i32, i32) {
    %c0_i32 = arith.constant 0 : i32
    %c0_i32_0 = arith.constant 0 : i32
    %c0_i32_1 = arith.constant 0 : i32
    return %arg0, %c0_i32, %c0_i32_0 : i32, i32, i32
  }
  func.func @transform_1(%arg0: i32) -> (i32, i32) {
    %c0_i32 = arith.constant 0 : i32
    %c0_i32_0 = arith.constant 0 : i32
    %c0_i32_1 = arith.constant 0 : i32
    return %c0_i32, %c0_i32_0 : i32, i32
  }
  func.func @transform_2(%arg0: i32) -> (i32, i32) {
    %c0_i32 = arith.constant 0 : i32
    %c0_i32_0 = arith.constant 0 : i32
    %c0_i32_1 = arith.constant 0 : i32
    return %c0_i32, %c0_i32_0 : i32, i32
  }
  func.func @transform_3(%arg0: i32) -> (i32, i32) {
    %c0_i32 = arith.constant 0 : i32
    %c0_i32_0 = arith.constant 0 : i32
    %c0_i32_1 = arith.constant 0 : i32
    return %c0_i32, %c0_i32_0 : i32, i32
  }
  func.func @transform_4(%arg0: i32) -> (i32, i32) {
    %c0_i32 = arith.constant 0 : i32
    %c0_i32_0 = arith.constant 0 : i32
    %c0_i32_1 = arith.constant 0 : i32
    return %c0_i32, %c0_i32_0 : i32, i32
  }
  func.func @transform_5(%arg0: i32) -> (i32, i32) {
    %c0_i32 = arith.constant 0 : i32
    %c0_i32_0 = arith.constant 0 : i32
    %c0_i32_1 = arith.constant 0 : i32
    return %c0_i32, %c0_i32_0 : i32, i32
  }
  func.func @transform_6(%arg0: i32) -> (i32, i32) {
    %c0_i32 = arith.constant 0 : i32
    %c0_i32_0 = arith.constant 0 : i32
    %c0_i32_1 = arith.constant 0 : i32
    return %c0_i32, %c0_i32_0 : i32, i32
  }
  func.func @transform_7(%arg0: i32) -> (i32, i32, i32) {
    %c0_i32 = arith.constant 0 : i32
    %c0_i32_0 = arith.constant 0 : i32
    %c0_i32_1 = arith.constant 0 : i32
    return %arg0, %c0_i32, %c0_i32_0 : i32, i32, i32
  }
  func.func @transform_8(%arg0: i32) -> (i32, i32, i32) {
    %c0_i32 = arith.constant 0 : i32
    %c0_i32_0 = arith.constant 0 : i32
    %c0_i32_1 = arith.constant 0 : i32
    return %arg0, %c0_i32, %c0_i32_0 : i32, i32, i32
  }
}

</mosaic_0001>

<llo_original>
// kernel: tile.13
$region0: #{tile.13}
  #allocation0 [shape = 's32[1]{0}', space=sflag, size = 0x4, scoped, tag = 'scoped memory for tile.13']
  %s0 = inlined_call_operand.vmem [shape: f32[16], index: 0, kind: input, shape index: {}]
  %s1 = inlined_call_operand.vmem [shape: f32[12,16], index: 1, kind: output, shape index: {}]
  // Predicated region
  $region2: #{tile.13} parent=0 // pred_check
    _
  $region3: #{tile.13} parent=0 // pred_check_branch
    %3 = sbr.rel (0) target = $region5
  $region4: #{tile.13} parent=0 // pred_region
    _
  $region5: #{tile.13} parent=0 // pred_fallthru
    _
  %v4 = vld [vmem:[%s0] ss:$0 sm:$0xff]
  %5 = vst [vmem:[%s1] sm:$0xff] %v4
  %s6 = scalar_lea.vmem %s1, 8
  %7 = vst [vmem:[%s6] sm:$0xff] %v4

// kernel: tile.14
$region0: #{tile.14}
  %s0 = inlined_call_operand.vmem [shape: f32[12,16], index: 0, kind: input, shape index: {}]
  %s1 = inlined_call_operand.vmem [shape: f32[1,192], index: 1, kind: output, shape index: {}]
  $region1: #{tile.14} parent=0
    #allocation0 [shape = 'u8[8192]{0}', space=vmem, size = 0x2000, scoped, tag = 'scoped mem for output reshape']
    %s2 = smov 3
    %v3 = vld [vmem:[%s0] ss:$8 sm:%s2]
    %vm4 = vcmask 130048
    %5 = vst.msk [vmem:[#allocation0] ss:$8 sm:$0x3] %vm4, %v3
    %s6 = scalar_lea.vmem %s0, 7
    %v7 = vld [vmem:[%s6] sm:$0x1]
    %8 = vrot.lane.b32.xlu0 %v7, 112
    %v9 = vpop.permute.xlu0 %8
    %vm10 = vcmask 1048448
    %11 = vst.msk [vmem:[#allocation0] sm:$0x1] %vm10, %v9
    %s12 = scalar_lea.vmem %s0, 6
    %v13 = vld [vmem:[%s12] sm:$0x1]
    %14 = vrot.lane.b32.xlu0 %v13, 96
    %v15 = vpop.permute.xlu0 %14
    %vm16 = vcmask 917248
    %17 = vst.msk [vmem:[#allocation0] sm:$0x1] %vm16, %v15
    %s18 = scalar_lea.vmem %s0, 5
    %v19 = vld [vmem:[%s18] sm:$0x1]
    %20 = vrot.lane.b32.xlu0 %v19, 80
    %v21 = vpop.permute.xlu0 %20
    %vm22 = vcmask 786048
    %23 = vst.msk [vmem:[#allocation0] sm:$0x1] %vm22, %v21
    %s24 = scalar_lea.vmem %s0, 4
    %v25 = vld [vmem:[%s24] sm:$0x1]
    %26 = vrot.lane.b32.xlu0 %v25, 64
    %v27 = vpop.permute.xlu0 %26
    %vm28 = vcmask 654848
    %29 = vst.msk [vmem:[#allocation0] sm:$0x1] %vm28, %v27
    %s30 = scalar_lea.vmem %s0, 3
    %s31 = smov 3
    %v32 = vld [vmem:[%s30] ss:$8 sm:%s31]
    %33 = vrot.lane.b32.xlu0 %v32, 48
    %v34 = vpop.permute.xlu0 %33
    %vm35 = vcmask 523648
    %36 = vst.msk [vmem:[#allocation0] ss:$8 sm:$0x3] %vm35, %v34
    %s37 = scalar_lea.vmem %s0, 2
    %s38 = smov 3
    %v39 = vld [vmem:[%s37] ss:$8 sm:%s38]
    %40 = vrot.lane.b32.xlu0 %v39, 32
    %v41 = vpop.permute.xlu0 %40
    %vm42 = vcmask 392448
    %43 = vst.msk [vmem:[#allocation0] ss:$8 sm:$0x3] %vm42, %v41
    %s44 = scalar_lea.vmem %s0, 1
    %s45 = smov 3
    %v46 = vld [vmem:[%s44] ss:$8 sm:%s45]
    %47 = vrot.lane.b32.xlu0 %v46, 16
    %v48 = vpop.permute.xlu0 %47
    %vm49 = vcmask 261248
    %50 = vst.msk [vmem:[#allocation0] ss:$8 sm:$0x3] %vm49, %v48
    %s52 = sshll.u32 1, 1
    %s53 = ssub.s32 %s52, 1
    %v55 = vld [vmem:[#allocation0] sm:%s53]
    %s56 = sshll.u32 1, 1
    %s57 = ssub.s32 %s56, 1
    %58 = vst [vmem:[%s1] sm:%s57] %v55
    %s59 = scalar_lea.vmem [#allocation0], 8
    %v60 = vld [vmem:[%s59] sm:%s53]
    %s61 = sshll.u32 1, 1
    %s62 = ssub.s32 %s61, 1
    %s63 = scalar_lea.vmem %s1, 1
    %64 = vst [vmem:[%s63] sm:%s62] %v60

// kernel: tile.18
$region0: #{tile.18}
  #allocation0 [shape = 's32[1]{0}', space=sflag, size = 0x4, scoped, tag = 'scoped memory for tile.18']
  %s0 = inlined_call_operand.vmem [shape: f32[64], index: 0, kind: input, shape index: {}]
  %s1 = inlined_call_operand.vmem [shape: f32[8,64], index: 1, kind: output, shape index: {}]
  // Predicated region
  $region2: #{tile.18} parent=0 // pred_check
    _
  $region3: #{tile.18} parent=0 // pred_check_branch
    %3 = sbr.rel (0) target = $region5
  $region4: #{tile.18} parent=0 // pred_region
    _
  $region5: #{tile.18} parent=0 // pred_fallthru
    _
  %v4 = vld [vmem:[%s0] ss:$0 sm:$0xff]
  %5 = vst [vmem:[%s1] sm:$0xff] %v4

// kernel: tile.19
$region0: #{tile.19}
  %s0 = inlined_call_operand.vmem [shape: f32[8,64], index: 0, kind: input, shape index: {}]
  %s1 = inlined_call_operand.vmem [shape: f32[1,512], index: 1, kind: output, shape index: {}]
  $region1: #{tile.19} parent=0
    #allocation0 [shape = 'u8[16384]{0}', space=vmem, size = 0x4000, scoped, tag = 'scoped mem for output reshape']
    %v2 = vld [vmem:[%s0] ss:$2 sm:$0xf]
    %vm3 = vcmask 523264
    %4 = vst.msk [vmem:[#allocation0] ss:$8 sm:$0xf] %vm3, %v2
    %s5 = scalar_lea.vmem %s0, 1
    %v6 = vld [vmem:[%s5] ss:$2 sm:$0xf]
    %7 = vrot.lane.b32.xlu0 %v6, 64
    %v8 = vpop.permute.xlu0 %7
    %vm9 = vcmask 1048064
    %10 = vst.msk [vmem:[#allocation0] ss:$8 sm:$0xf] %vm9, %v8
    %s12 = sshll.u32 1, 1
    %s13 = ssub.s32 %s12, 1
    %v15 = vld [vmem:[#allocation0] sm:%s13]
    %s16 = sshll.u32 1, 1
    %s17 = ssub.s32 %s16, 1
    %18 = vst [vmem:[%s1] sm:%s17] %v15
    %s19 = scalar_lea.vmem [#allocation0], 8
    %v20 = vld [vmem:[%s19] sm:%s13]
    %s21 = sshll.u32 1, 1
    %s22 = ssub.s32 %s21, 1
    %s23 = scalar_lea.vmem %s1, 1
    %24 = vst [vmem:[%s23] sm:%s22] %v20
    %s25 = scalar_lea.vmem [#allocation0], 16
    %v26 = vld [vmem:[%s25] sm:%s13]
    %s27 = sshll.u32 1, 1
    %s28 = ssub.s32 %s27, 1
    %s29 = smul.addr 1, 2
    %s30 = scalar_lea.vmem %s1, %s29
    %31 = vst [vmem:[%s30] sm:%s28] %v26
    %s32 = scalar_lea.vmem [#allocation0], 24
    %v33 = vld [vmem:[%s32] sm:%s13]
    %s34 = sshll.u32 1, 1
    %s35 = ssub.s32 %s34, 1
    %s36 = smul.addr 1, 3
    %s37 = scalar_lea.vmem %s1, %s36
    %38 = vst [vmem:[%s37] sm:%s35] %v33

// kernel: net_forward.1
$region0: #{net_forward.1}
  #allocation0 [shape = 'u32[]', space=smem, size = 0x4, offset = 0x4, fixed_abs, tag = 'smem constant byte address 0x4 - core index']
  #allocation1 [shape = 'u32[144,128]{1,0:T(1,128)}', space=vmem, size = 0x12000, scoped, tag = 'internal scratch']
  %s0 = inlined_call_operand.vmem [shape: f32[2,24,140], index: 0, kind: input, shape index: {}]
  %s1 = inlined_call_operand.vmem [shape: f32[140,384], index: 1, kind: input, shape index: {}]
  %s2 = inlined_call_operand.vmem [shape: f32[1,192], index: 2, kind: input, shape index: {}]
  %s3 = inlined_call_operand.vmem [shape: f32[960,512], index: 3, kind: input, shape index: {}]
  %s4 = inlined_call_operand.vmem [shape: f32[1,512], index: 4, kind: input, shape index: {}]
  %s5 = inlined_call_operand.vmem [shape: f32[1792,10], index: 5, kind: input, shape index: {}]
  %s6 = inlined_call_operand.vmem [shape: f32[1,10], index: 6, kind: input, shape index: {}]
  %s7 = inlined_call_operand.hbm [shape: f32[2,1,10], index: 7, kind: output, shape index: {0}]
  %s8 = inlined_call_operand.hbm [shape: f32[2,1,10], index: 8, kind: output, shape index: {1}]
  %9 = xla_tuple %s7, %s8
  %s10 = sld [smem:[#allocation0]]
  $region69: #{net_forward.1} parent=0
    _
  %s12 = ssub.s32 1, %s10
  %s13 = scalar_select 0, %s12, %s10
  $region1: #{net_forward.1} parent=0
    #allocation2 [shape = 'u8[1024]{0}', space=vmem, size = 0x400, scoped, tag = 'output window, operand 0']
    #allocation3 [shape = 's32[2]{0}', space=sflag, size = 0x8, scoped, tag = 'scoped memory for net_forward.1']
    #allocation4 [shape = 'u8[1024]{0}', space=vmem, size = 0x400, scoped, tag = 'output window, operand 1']
    #allocation5 [shape = 's32[2]{0}', space=sflag, size = 0x8, scoped, tag = 'scoped memory for net_forward.1']
    %14 = vsyncpa [#allocation3], 0
    %s15 = scalar_lea.sflag [#allocation3], 1
    %16 = vsyncpa %s15, 0
    %17 = vsyncpa [#allocation5], 0
    %s18 = scalar_lea.sflag [#allocation5], 1
    %19 = vsyncpa %s18, 0
    loop: start=0, step=1, limit=4
    $region2: #{net_forward.1} parent=1 // loop_pre_header
      _
    $region3: #{net_forward.1} parent=1 // loop_header
      %s21 = sphi 0, %s25
      %p22 = scmp.ge.s32.totalorder %s21, 4
      %s31 = sphi 0, %s33
      %s34 = sphi 0, %s31
      %s35 = sphi 0, %s34
      %s51 = sphi 0, %s35
      %s55 = sphi 0, %s55
      %s57 = sphi 0, %s55
      %s58 = sphi 0, %s57
      %s72 = sphi 0, %s58
      %s76 = sphi 0, %s76
      %s78 = sphi 0, %s76
      %s79 = sphi 0, %s78
      %s93 = sphi 0, %s79
      %s97 = sphi 0, %s97
      %s99 = sphi 0, %s97
      %s100 = sphi 0, %s99
      %s114 = sphi 0, %s100
      %s118 = sphi 0, %s118
      %s120 = sphi 0, %s118
      %s121 = sphi 0, %s120
      %s135 = sphi 0, %s121
      %s139 = sphi 0, %s139
      %s141 = sphi 0, %s139
      %s142 = sphi 0, %s141
      %s156 = sphi 0, %s142
      %s160 = sphi 0, %s160
      %s162 = sphi 0, %s160
      %s163 = sphi 0, %s162
      %s177 = sphi 0, %s163
      %s183 = sphi 0, %s185
      %s186 = sphi 0, %s183
      %s187 = sphi 0, %s186
      %s203 = sphi 0, %s187
      %s209 = sphi 0, %s211
      %s212 = sphi 0, %s209
      %s213 = sphi 0, %s212
      %s229 = sphi 0, %s213
    $region4: #{net_forward.1} parent=1 // loop_header_branch
      %24 = sbr.rel (%p22) target = $region8
    $region5: #{net_forward.1} parent=1 // loop_body
      %s26 = ssub.s32 %s21, 1
      %s27 = ssub.s32 %s21, 2
      %s28 = sadd.s32 %s21, 1
      %s29 = ssub.s32 %s21, %s28
      %p30 = scmp.eq.s32.totalorder %s29, 0
      %s32 = sadd.s32 %s31, 1
      %s33 = scalar_select %p30, %s31, %s32
      %p36 = pneg %p30
      %p37 = scmp.eq.s32.totalorder %s21, 1
      %p38 = por %p36, %p37
      %p39 = scmp.ne.s32.totalorder %s31, %s34
      %p40 = scmp.eq.s32.totalorder %s21, 0
      %p41 = por %p39, %p40
      %p42 = scmp.ne.s32.totalorder %s31, %s34
      %p43 = scmp.eq.s32.totalorder %s26, 1
      %p44 = por %p42, %p43
      %p45 = scmp.ne.s32.totalorder %s34, %s35
      %p46 = scmp.eq.s32.totalorder %s26, 0
      %p47 = por %p45, %p46
      %p48 = scmp.ne.s32.totalorder %s34, %s35
      %p49 = scmp.eq.s32.totalorder %s27, 1
      %p50 = por %p48, %p49
      %p52 = scmp.ne.s32.totalorder %s35, %s51
      %p53 = scmp.eq.s32.totalorder %s27, 0
      %p54 = por %p52, %p53
      %s56 = sadd.s32 %s55, 1
      %p59 = scmp.eq.s32.totalorder %s21, 1
      %p60 = scmp.ne.s32.totalorder %s55, %s57
      %p61 = scmp.eq.s32.totalorder %s21, 0
      %p62 = por %p60, %p61
      %p63 = scmp.ne.s32.totalorder %s55, %s57
      %p64 = scmp.eq.s32.totalorder %s26, 1
      %p65 = por %p63, %p64
      %p66 = scmp.ne.s32.totalorder %s57, %s58
      %p67 = scmp.eq.s32.totalorder %s26, 0
      %p68 = por %p66, %p67
      %p69 = scmp.ne.s32.totalorder %s57, %s58
      %p70 = scmp.eq.s32.totalorder %s27, 1
      %p71 = por %p69, %p70
      %p73 = scmp.ne.s32.totalorder %s58, %s72
      %p74 = scmp.eq.s32.totalorder %s27, 0
      %p75 = por %p73, %p74
      %s77 = sadd.s32 %s76, 1
      %p80 = scmp.eq.s32.totalorder %s21, 1
      %p81 = scmp.ne.s32.totalorder %s76, %s78
      %p82 = scmp.eq.s32.totalorder %s21, 0
      %p83 = por %p81, %p82
      %p84 = scmp.ne.s32.totalorder %s76, %s78
      %p85 = scmp.eq.s32.totalorder %s26, 1
      %p86 = por %p84, %p85
      %p87 = scmp.ne.s32.totalorder %s78, %s79
      %p88 = scmp.eq.s32.totalorder %s26, 0
      %p89 = por %p87, %p88
      %p90 = scmp.ne.s32.totalorder %s78, %s79
      %p91 = scmp.eq.s32.totalorder %s27, 1
      %p92 = por %p90, %p91
      %p94 = scmp.ne.s32.totalorder %s79, %s93
      %p95 = scmp.eq.s32.totalorder %s27, 0
      %p96 = por %p94, %p95
      %s98 = sadd.s32 %s97, 1
      %p101 = scmp.eq.s32.totalorder %s21, 1
      %p102 = scmp.ne.s32.totalorder %s97, %s99
      %p103 = scmp.eq.s32.totalorder %s21, 0
      %p104 = por %p102, %p103
      %p105 = scmp.ne.s32.totalorder %s97, %s99
      %p106 = scmp.eq.s32.totalorder %s26, 1
      %p107 = por %p105, %p106
      %p108 = scmp.ne.s32.totalorder %s99, %s100
      %p109 = scmp.eq.s32.totalorder %s26, 0
      %p110 = por %p108, %p109
      %p111 = scmp.ne.s32.totalorder %s99, %s100
      %p112 = scmp.eq.s32.totalorder %s27, 1
      %p113 = por %p111, %p112
      %p115 = scmp.ne.s32.totalorder %s100, %s114
      %p116 = scmp.eq.s32.totalorder %s27, 0
      %p117 = por %p115, %p116
      %s119 = sadd.s32 %s118, 1
      %p122 = scmp.eq.s32.totalorder %s21, 1
      %p123 = scmp.ne.s32.totalorder %s118, %s120
      %p124 = scmp.eq.s32.totalorder %s21, 0
      %p125 = por %p123, %p124
      %p126 = scmp.ne.s32.totalorder %s118, %s120
      %p127 = scmp.eq.s32.totalorder %s26, 1
      %p128 = por %p126, %p127
      %p129 = scmp.ne.s32.totalorder %s120, %s121
      %p130 = scmp.eq.s32.totalorder %s26, 0
      %p131 = por %p129, %p130
      %p132 = scmp.ne.s32.totalorder %s120, %s121
      %p133 = scmp.eq.s32.totalorder %s27, 1
      %p134 = por %p132, %p133
      %p136 = scmp.ne.s32.totalorder %s121, %s135
      %p137 = scmp.eq.s32.totalorder %s27, 0
      %p138 = por %p136, %p137
      %s140 = sadd.s32 %s139, 1
      %p143 = scmp.eq.s32.totalorder %s21, 1
      %p144 = scmp.ne.s32.totalorder %s139, %s141
      %p145 = scmp.eq.s32.totalorder %s21, 0
      %p146 = por %p144, %p145
      %p147 = scmp.ne.s32.totalorder %s139, %s141
      %p148 = scmp.eq.s32.totalorder %s26, 1
      %p149 = por %p147, %p148
      %p150 = scmp.ne.s32.totalorder %s141, %s142
      %p151 = scmp.eq.s32.totalorder %s26, 0
      %p152 = por %p150, %p151
      %p153 = scmp.ne.s32.totalorder %s141, %s142
      %p154 = scmp.eq.s32.totalorder %s27, 1
      %p155 = por %p153, %p154
      %p157 = scmp.ne.s32.totalorder %s142, %s156
      %p158 = scmp.eq.s32.totalorder %s27, 0
      %p159 = por %p157, %p158
      %s161 = sadd.s32 %s160, 1
      %p164 = scmp.eq.s32.totalorder %s21, 1
      %p165 = scmp.ne.s32.totalorder %s160, %s162
      %p166 = scmp.eq.s32.totalorder %s21, 0
      %p167 = por %p165, %p166
      %p168 = scmp.ne.s32.totalorder %s160, %s162
      %p169 = scmp.eq.s32.totalorder %s26, 1
      %p170 = por %p168, %p169
      %p171 = scmp.ne.s32.totalorder %s162, %s163
      %p172 = scmp.eq.s32.totalorder %s26, 0
      %p173 = por %p171, %p172
      %p174 = scmp.ne.s32.totalorder %s162, %s163
      %p175 = scmp.eq.s32.totalorder %s27, 1
      %p176 = por %p174, %p175
      %p178 = scmp.ne.s32.totalorder %s163, %s177
      %p179 = scmp.eq.s32.totalorder %s27, 0
      %p180 = por %p178, %p179
      %s181 = ssub.s32 %s21, %s28
      %p182 = scmp.eq.s32.totalorder %s181, 0
      %s184 = sadd.s32 %s183, 1
      %s185 = scalar_select %p182, %s183, %s184
      %p188 = pneg %p182
      %p189 = scmp.eq.s32.totalorder %s21, 1
      %p190 = por %p188, %p189
      %p191 = scmp.ne.s32.totalorder %s183, %s186
      %p192 = scmp.eq.s32.totalorder %s21, 0
      %p193 = por %p191, %p192
      %p194 = scmp.ne.s32.totalorder %s183, %s186
      %p195 = scmp.eq.s32.totalorder %s26, 1
      %p196 = por %p194, %p195
      %p197 = scmp.ne.s32.totalorder %s186, %s187
      %p198 = scmp.eq.s32.totalorder %s26, 0
      %p199 = por %p197, %p198
      %p200 = scmp.ne.s32.totalorder %s186, %s187
      %p201 = scmp.eq.s32.totalorder %s27, 1
      %p202 = por %p200, %p201
      %p204 = scmp.ne.s32.totalorder %s187, %s203
      %p205 = scmp.eq.s32.totalorder %s27, 0
      %p206 = por %p204, %p205
      %s207 = ssub.s32 %s21, %s28
      %p208 = scmp.eq.s32.totalorder %s207, 0
      %s210 = sadd.s32 %s209, 1
      %s211 = scalar_select %p208, %s209, %s210
      %p214 = pneg %p208
      %p215 = scmp.eq.s32.totalorder %s21, 1
      %p216 = por %p214, %p215
      %p217 = scmp.ne.s32.totalorder %s209, %s212
      %p218 = scmp.eq.s32.totalorder %s21, 0
      %p219 = por %p217, %p218
      %p220 = scmp.ne.s32.totalorder %s209, %s212
      %p221 = scmp.eq.s32.totalorder %s26, 1
      %p222 = por %p220, %p221
      %p223 = scmp.ne.s32.totalorder %s212, %s213
      %p224 = scmp.eq.s32.totalorder %s26, 0
      %p225 = por %p223, %p224
      %p226 = scmp.ne.s32.totalorder %s212, %s213
      %p227 = scmp.eq.s32.totalorder %s27, 1
      %p228 = por %p226, %p227
      %p230 = scmp.ne.s32.totalorder %s213, %s229
      %p231 = scmp.eq.s32.totalorder %s27, 0
      %p232 = por %p230, %p231
      %p233 = scmp.le.s32.totalorder 1, %s21
      %p234 = scmp.lt.s32.totalorder %s21, 3
      %p235 = pnand %p233, %p234
      %p236 = pneg %p235
      // Predicated region
      $region9: #{net_forward.1} parent=5 // pred_check
        _
      $region10: #{net_forward.1} parent=5 // pred_check_branch
        %238 = sbr.rel (%p235) target = $region12
      $region11: #{net_forward.1} parent=5 // pred_region
        %s239 = ssub.s32 %s21, 1
        // Predicated region
        $region13: #{net_forward.1} parent=11 // pred_check
          %p240 = pneg %p68
        $region14: #{net_forward.1} parent=11 // pred_check_branch
          %242 = sbr.rel (%p240) target = $region16
        $region15: #{net_forward.1} parent=11 // pred_region
          _
        $region16: #{net_forward.1} parent=11 // pred_fallthru
          _
        // Predicated region
        $region17: #{net_forward.1} parent=11 // pred_check
          %p243 = pneg %p89
        $region18: #{net_forward.1} parent=11 // pred_check_branch
          %245 = sbr.rel (%p243) target = $region20
        $region19: #{net_forward.1} parent=11 // pred_region
          _
        $region20: #{net_forward.1} parent=11 // pred_fallthru
          _
        // Predicated region
        $region21: #{net_forward.1} parent=11 // pred_check
          %p246 = pneg %p110
        $region22: #{net_forward.1} parent=11 // pred_check_branch
          %248 = sbr.rel (%p246) target = $region24
        $region23: #{net_forward.1} parent=11 // pred_region
          _
        $region24: #{net_forward.1} parent=11 // pred_fallthru
          _
        // Predicated region
        $region25: #{net_forward.1} parent=11 // pred_check
          %p249 = pneg %p131
        $region26: #{net_forward.1} parent=11 // pred_check_branch
          %251 = sbr.rel (%p249) target = $region28
        $region27: #{net_forward.1} parent=11 // pred_region
          _
        $region28: #{net_forward.1} parent=11 // pred_fallthru
          _
        // Predicated region
        $region29: #{net_forward.1} parent=11 // pred_check
          %p252 = pneg %p152
        $region30: #{net_forward.1} parent=11 // pred_check_branch
          %254 = sbr.rel (%p252) target = $region32
        $region31: #{net_forward.1} parent=11 // pred_region
          _
        $region32: #{net_forward.1} parent=11 // pred_fallthru
          _
        // Predicated region
        $region33: #{net_forward.1} parent=11 // pred_check
          %p255 = pneg %p173
        $region34: #{net_forward.1} parent=11 // pred_check_branch
          %257 = sbr.rel (%p255) target = $region36
        $region35: #{net_forward.1} parent=11 // pred_region
          _
        $region36: #{net_forward.1} parent=11 // pred_fallthru
          _
      $region12: #{net_forward.1} parent=5 // pred_fallthru
        _
      %p258 = scmp.lt.s32.totalorder %s21, 2
      // Predicated region
      $region37: #{net_forward.1} parent=5 // pred_check
        %p259 = pneg %p258
      $region38: #{net_forward.1} parent=5 // pred_check_branch
        %261 = sbr.rel (%p259) target = $region40
      $region39: #{net_forward.1} parent=5 // pred_region
        // Predicated region
        $region41: #{net_forward.1} parent=39 // pred_check
          %p262 = pneg %p41
        $region42: #{net_forward.1} parent=39 // pred_check_branch
          %264 = sbr.rel (%p262) target = $region44
        $region43: #{net_forward.1} parent=39 // pred_region
          %p265 = scmp.lt.s32.totalorder %s21, 1
          %s266 = scalar_select %p265, %s21, 1
          %s267 = smul.addr %s266, 6
          %s268 = smul.addr %s267, 8
          %s269 = scalar_lea.vmem %s0, %s268
        $region44: #{net_forward.1} parent=39 // pred_fallthru
          _
      $region40: #{net_forward.1} parent=5 // pred_fallthru
        _
      %p270 = scmp.le.s32.totalorder 1, %s21
      %p271 = scmp.lt.s32.totalorder %s21, 3
      %p272 = pnand %p270, %p271
      %p273 = pneg %p272
      // Predicated region
      $region45: #{net_forward.1} parent=5 // pred_check
        _
      $region46: #{net_forward.1} parent=5 // pred_check_branch
        %275 = sbr.rel (%p272) target = $region48
      $region47: #{net_forward.1} parent=5 // pred_region
        %s276 = ssub.s32 %s21, 1
        %p277 = scmp.lt.s32.totalorder %s26, 1
        %s278 = scalar_select %p277, %s26, 1
        %s279 = smul.addr %s278, 6
        %s280 = smul.addr %s279, 8
        %s281 = scalar_lea.vmem %s0, %s280
        %p282 = pneg %p47
        %p283 = pneg %p44
        %p284 = pneg %p68
        %p285 = pneg %p65
        %p286 = pneg %p89
        %p287 = pneg %p86
        %p288 = pneg %p110
        %p289 = pneg %p107
        %p290 = pneg %p131
        %p291 = pneg %p128
        %p292 = pneg %p152
        %p293 = pneg %p149
        %p294 = pneg %p173
        %p295 = pneg %p170
        %p296 = pneg %p199
        %p297 = pneg %p196
        %s298 = sand.u32 %s186, 1
        %s299 = scalar_lea.sflag [#allocation3], %s298
        %s300 = sand.u32 %s186, 1
        %s301 = scalar_lea.vmem [#allocation2], %s300
        %p302 = pneg %p225
        %p303 = pneg %p222
        %s304 = sand.u32 %s212, 1
        %s305 = scalar_lea.sflag [#allocation5], %s304
        %s306 = sand.u32 %s212, 1
        %s307 = scalar_lea.vmem [#allocation4], %s306
        %p308 = scmp.lt.s32.totalorder %s26, 1
        %s309 = scalar_select %p308, %s26, 1
        %s310 = smul.addr %s309, 6
        %s311 = smul.addr %s310, 8
        %s312 = scalar_lea.vmem %s0, %s311
        %v313 = vld [vmem:[%s312] sm:$0xff]
        %v314 = vld [vmem:[%s312 + $0x8] sm:$0xff]
        %v315 = vld [vmem:[%s312 + $0x10] sm:$0xff]
        %v316 = vld [vmem:[%s312 + $0x18] sm:$0xff]
        %v317 = vld [vmem:[%s312 + $0x20] sm:$0xff]
        %v318 = vld [vmem:[%s312 + $0x28] sm:$0xff]
        %v319 = vld [vmem:[%s1] sm:$0xff]
        %v320 = vld [vmem:[%s1 + $0x8] sm:$0xff]
        %v321 = vld [vmem:[%s1 + $0x10] sm:$0xff]
        %v322 = vld [vmem:[%s1 + $0x18] sm:$0xff]
        %v323 = vld [vmem:[%s1 + $0x20] sm:$0xff]
        %v324 = vld [vmem:[%s1 + $0x28] sm:$0xff]
        %v325 = vld [vmem:[%s1 + $0x30] sm:$0xff]
        %v326 = vld [vmem:[%s1 + $0x38] sm:$0xff]
        %v327 = vld [vmem:[%s1 + $0x40] sm:$0xff]
        %v328 = vld [vmem:[%s1 + $0x48] sm:$0xff]
        %v329 = vld [vmem:[%s1 + $0x50] sm:$0xff]
        %v330 = vld [vmem:[%s1 + $0x58] sm:$0xff]
        %v331 = vld [vmem:[%s1 + $0x60] sm:$0xff]
        %v332 = vld [vmem:[%s1 + $0x68] sm:$0xff]
        %v333 = vld [vmem:[%s1 + $0x70] sm:$0xff]
        %v334 = vld [vmem:[%s1 + $0x78] sm:$0xff]
        %v335 = vld [vmem:[%s1 + $0x80] sm:$0xff]
        %v336 = vld [vmem:[%s1 + $0x88] sm:$0xff]
        %v337 = vld [vmem:[%s1 + $0x90] sm:$0xff]
        %v338 = vld [vmem:[%s1 + $0x98] sm:$0xff]
        %v339 = vld [vmem:[%s1 + $0xa0] sm:$0xff]
        %v340 = vld [vmem:[%s1 + $0xa8] sm:$0xff]
        %v341 = vld [vmem:[%s1 + $0xb0] sm:$0xff]
        %v342 = vld [vmem:[%s1 + $0xb8] sm:$0xff]
        %v343 = vld [vmem:[%s1 + $0xc0] sm:$0xff]
        %v344 = vld [vmem:[%s1 + $0xc8] sm:$0xff]
        %v345 = vld [vmem:[%s1 + $0xd0] sm:$0xff]
        %v346 = vld [vmem:[%s1 + $0xd8] sm:$0xff]
        %v347 = vld [vmem:[%s1 + $0xe0] sm:$0xff]
        %v348 = vld [vmem:[%s1 + $0xe8] sm:$0xff]
        %v349 = vld [vmem:[%s1 + $0xf0] sm:$0xff]
        %v350 = vld [vmem:[%s1 + $0xf8] sm:$0xff]
        %v351 = vld [vmem:[%s1 + $0x100] sm:$0xff]
        %v352 = vld [vmem:[%s1 + $0x108] sm:$0xff]
        %v353 = vld [vmem:[%s1 + $0x110] sm:$0xff]
        %v354 = vld [vmem:[%s1 + $0x118] sm:$0xff]
        %v355 = vld [vmem:[%s1 + $0x120] sm:$0xff]
        %v356 = vld [vmem:[%s1 + $0x128] sm:$0xff]
        %v357 = vld [vmem:[%s1 + $0x130] sm:$0xff]
        %v358 = vld [vmem:[%s1 + $0x138] sm:$0xff]
        %v359 = vld [vmem:[%s1 + $0x140] sm:$0xff]
        %v360 = vld [vmem:[%s1 + $0x148] sm:$0xff]
        %v361 = vld [vmem:[%s1 + $0x150] sm:$0xff]
        %v362 = vld [vmem:[%s1 + $0x158] sm:$0xff]
        %v363 = vld [vmem:[%s1 + $0x160] sm:$0xff]
        %v364 = vld [vmem:[%s1 + $0x168] sm:$0xff]
        %v365 = vld [vmem:[%s1 + $0x170] sm:$0xff]
        %v366 = vld [vmem:[%s1 + $0x178] sm:$0xff]
        %v367 = vld [vmem:[%s1 + $0x180] sm:$0xff]
        %v368 = vld [vmem:[%s1 + $0x188] sm:$0xff]
        %v369 = vld [vmem:[%s1 + $0x190] sm:$0xff]
        %v370 = vld [vmem:[%s1 + $0x198] sm:$0xf]
        %v371 = vld [vmem:[%s1 + $0x1a0] sm:$0xf]
        %v372 = vld [vmem:[%s1 + $0x1a8] sm:$0xf]
        %vm373 = vcmask 97280
        %v375 = vsel %vm373, %v314, 0
        %v378 = vsel %vm373, %v316, 0
        %v381 = vsel %vm373, %v318, 0
        %vm383 = vcmask 1043456
        %v385 = vsel %vm383, %v370, 0
        %v388 = vsel %vm383, %v371, 0
        %v391 = vsel %vm383, %v372, 0
        %393 = vmatprep.subr.mxu0 %v365
        %394 = vmatpush1.msra.mxu0 %v364
        %395 = vmatprep.subr.mxu0 %v362
        %396 = vmatpush1.msra.mxu0 %v361
        %397 = vmatprep.subr.mxu0 %v359
        %398 = vmatpush1.msra.mxu0 %v358
        %399 = vmatprep.subr.mxu0 %v356
        %400 = vmatpush1.msra.mxu0 %v355
        %401 = vmatprep.subr.mxu0 %v353
        %402 = vmatpush1.msra.mxu0 %v352
        %403 = vmatprep.subr.mxu0 %v350
        %404 = vmatpush1.msra.mxu0 %v349
        %405 = vmatprep.subr.mxu0 %v347
        %406 = vmatpush1.msra.mxu0 %v346
        %407 = vmatprep.subr.mxu0 %v344
        %408 = vmatpush1.msra.mxu0 %v343
        %409 = vmatprep.subr.mxu0 %v341
        %410 = vmatpush1.msra.mxu0 %v340
        %411 = vmatprep.subr.mxu0 %v338
        %412 = vmatpush1.msra.mxu0 %v337
        %413 = vmatprep.subr.mxu0 %v335
        %414 = vmatpush1.msra.mxu0 %v334
        %415 = vmatprep.subr.mxu0 %v332
        %416 = vmatpush1.msra.mxu0 %v331
        %417 = vmatprep.subr.mxu0 %v329
        %418 = vmatpush1.msra.mxu0 %v328
        %419 = vmatprep.subr.mxu0 %v326
        %420 = vmatpush1.msra.mxu0 %v325
        %421 = vmatprep.subr.mxu0 %v323
        %422 = vmatpush1.msra.mxu0 %v322
        %423 = vmatprep.subr.mxu0 %v320
        %424 = vmatpush1.msra.mxu0 %v319
        %425 = vmatprep.subr.mxu0 0.0
        %426 = vmatpush2.msra.mxu0 0.0
        %427 = vmatprep.subr.mxu0 0.0
        %428 = vmatpush2.msra.mxu0 0.0
        %429 = vmatprep.subr.mxu0 0.0
        %430 = vmatpush2.msra.mxu0 0.0
        %431 = vmatprep.subr.mxu0 0.0
        %432 = vmatpush2.msra.mxu0 0.0
        %433 = vmatprep.subr.mxu0 0.0
        %434 = vmatpush2.msra.mxu0 0.0
        %435 = vmatprep.subr.mxu0 0.0
        %436 = vmatpush2.msra.mxu0 0.0
        %437 = vmatprep.subr.mxu0 0.0
        %438 = vmatpush2.msra.mxu0 0.0
        %439 = vmatprep.subr.mxu0 0.0
        %440 = vmatpush2.msra.mxu0 0.0
        %441 = vmatprep.subr.mxu0 0.0
        %442 = vmatpush2.msra.mxu0 0.0
        %443 = vmatprep.subr.mxu0 0.0
        %444 = vmatpush2.msra.mxu0 0.0
        %445 = vmatprep.subr.mxu0 0.0
        %446 = vmatpush2.msra.mxu0 0.0
        %447 = vmatprep.subr.mxu0 0.0
        %448 = vmatpush2.msra.mxu0 0.0
        %449 = vmatprep.subr.mxu0 0.0
        %450 = vmatpush2.msra.mxu0 0.0
        %451 = vmatprep.subr.mxu0 0.0
        %452 = vmatpush2.msra.mxu0 0.0
        %453 = vmatprep.subr.mxu0 %v388
        %454 = vmatpush2.msra.mxu0 %v385
        %455 = vmatprep.subr.mxu0 %v368
        %456 = vmatpush2.msra.mxu0 %v367
        %457 = vmatprep.mubr.f32.mxu0 %v375
        %458 = vmatmul.mubr.f32.gmra.mxu0 %v313
        %v459 = vpop.f32.mrf.mxu0
        %v460 = vadd.f32 0.0, %v459
        %v461 = vpop.f32.mrf.mxu0
        %v462 = vadd.f32 0.0, %v461
        %463 = vmatprep.mubr.f32.mxu0 %v378
        %464 = vmatmul.mubr.f32.gmra.mxu0 %v315
        %v465 = vpop.f32.mrf.mxu0
        %v466 = vadd.f32 0.0, %v465
        %v467 = vpop.f32.mrf.mxu0
        %v468 = vadd.f32 0.0, %v467
        %469 = vmatprep.mubr.f32.mxu0 %v381
        %470 = vmatmul.mubr.f32.gmra.mxu0 %v317
        %v471 = vpop.f32.mrf.mxu0
        %v472 = vadd.f32 0.0, %v471
        %v473 = vpop.f32.mrf.mxu0
        %v474 = vadd.f32 0.0, %v473
        %475 = vdwg.mxu0
        %476 = vmatprep.subr.mxu0 0.0
        %477 = vmatpush1.msra.mxu0 %v366
        %478 = vmatprep.subr.mxu0 0.0
        %479 = vmatpush1.msra.mxu0 %v363
        %480 = vmatprep.subr.mxu0 0.0
        %481 = vmatpush1.msra.mxu0 %v360
        %482 = vmatprep.subr.mxu0 0.0
        %483 = vmatpush1.msra.mxu0 %v357
        %484 = vmatprep.subr.mxu0 0.0
        %485 = vmatpush1.msra.mxu0 %v354
        %486 = vmatprep.subr.mxu0 0.0
        %487 = vmatpush1.msra.mxu0 %v351
        %488 = vmatprep.subr.mxu0 0.0
        %489 = vmatpush1.msra.mxu0 %v348
        %490 = vmatprep.subr.mxu0 0.0
        %491 = vmatpush1.msra.mxu0 %v345
        %492 = vmatprep.subr.mxu0 0.0
        %493 = vmatpush1.msra.mxu0 %v342
        %494 = vmatprep.subr.mxu0 0.0
        %495 = vmatpush1.msra.mxu0 %v339
        %496 = vmatprep.subr.mxu0 0.0
        %497 = vmatpush1.msra.mxu0 %v336
        %498 = vmatprep.subr.mxu0 0.0
        %499 = vmatpush1.msra.mxu0 %v333
        %500 = vmatprep.subr.mxu0 0.0
        %501 = vmatpush1.msra.mxu0 %v330
        %502 = vmatprep.subr.mxu0 0.0
        %503 = vmatpush1.msra.mxu0 %v327
        %504 = vmatprep.subr.mxu0 0.0
        %505 = vmatpush1.msra.mxu0 %v324
        %506 = vmatprep.subr.mxu0 0.0
        %507 = vmatpush1.msra.mxu0 %v321
        %508 = vmatprep.subr.mxu0 0.0
        %509 = vmatpush2.msra.mxu0 0.0
        %510 = vmatprep.subr.mxu0 0.0
        %511 = vmatpush2.msra.mxu0 0.0
        %512 = vmatprep.subr.mxu0 0.0
        %513 = vmatpush2.msra.mxu0 0.0
        %514 = vmatprep.subr.mxu0 0.0
        %515 = vmatpush2.msra.mxu0 0.0
        %516 = vmatprep.subr.mxu0 0.0
        %517 = vmatpush2.msra.mxu0 0.0
        %518 = vmatprep.subr.mxu0 0.0
        %519 = vmatpush2.msra.mxu0 0.0
        %520 = vmatprep.subr.mxu0 0.0
        %521 = vmatpush2.msra.mxu0 0.0
        %522 = vmatprep.subr.mxu0 0.0
        %523 = vmatpush2.msra.mxu0 0.0
        %524 = vmatprep.subr.mxu0 0.0
        %525 = vmatpush2.msra.mxu0 0.0
        %526 = vmatprep.subr.mxu0 0.0
        %527 = vmatpush2.msra.mxu0 0.0
        %528 = vmatprep.subr.mxu0 0.0
        %529 = vmatpush2.msra.mxu0 0.0
        %530 = vmatprep.subr.mxu0 0.0
        %531 = vmatpush2.msra.mxu0 0.0
        %532 = vmatprep.subr.mxu0 0.0
        %533 = vmatpush2.msra.mxu0 0.0
        %534 = vmatprep.subr.mxu0 0.0
        %535 = vmatpush2.msra.mxu0 0.0
        %536 = vmatprep.subr.mxu0 0.0
        %537 = vmatpush2.msra.mxu0 %v391
        %538 = vmatprep.subr.mxu0 0.0
        %539 = vmatpush2.msra.mxu0 %v369
        %540 = vmatprep.mubr.f32.mxu0 %v375
        %541 = vmatmul.mubr.f32.gmra.mxu0 %v313
        %v542 = vpop.f32.mrf.mxu0
        %v543 = vadd.f32 0.0, %v542
        %v544 = vpop.f32.mrf.mxu0
        %545 = vmatprep.mubr.f32.mxu0 %v378
        %546 = vmatmul.mubr.f32.gmra.mxu0 %v315
        %v547 = vpop.f32.mrf.mxu0
        %v548 = vadd.f32 0.0, %v547
        %v549 = vpop.f32.mrf.mxu0
        %550 = vmatprep.mubr.f32.mxu0 %v381
        %551 = vmatmul.mubr.f32.gmra.mxu0 %v317
        %v552 = vpop.f32.mrf.mxu0
        %v553 = vadd.f32 0.0, %v552
        %v554 = vpop.f32.mrf.mxu0
        %555 = vdwg.mxu0
        %v562 = vrot.slane %v466, 4
        %v563 = vrot.slane %v472, 4
        %v564 = vsel %vm383, %v562, %v563
        %v565 = vrot.slane %v468, 4
        %v566 = vrot.slane %v474, 4
        %v567 = vsel %vm383, %v565, %v566
        %v568 = vrot.slane %v548, 4
        %v569 = vrot.slane %v553, 4
        %v570 = vsel %vm383, %v568, %v569
        %v577 = vmax.f32 %v460, %v564
        %v578 = vmax.f32 %v462, %v567
        %v579 = vmax.f32 %v543, %v570
        %v580 = vmax.f32 %v466, %v563
        %v581 = vmax.f32 %v468, %v566
        %v582 = vmax.f32 %v548, %v569
        %587 = vrot.lane.b32.xlu0 %v578, 64
        %v588 = vpop.permute.xlu0 %587
        %589 = vrot.lane.b32.xlu0 %v579, 64
        %v590 = vpop.permute.xlu0 %589
        %591 = vrot.lane.b32.xlu0 %v581, 64
        %v592 = vpop.permute.xlu0 %591
        %593 = vrot.lane.b32.xlu0 %v582, 64
        %v594 = vpop.permute.xlu0 %593
        %vm595 = vcmask 523264
        %v596 = vsel %vm595, %v588, %v590
        %v597 = vsel %vm595, %v592, %v594
        %v602 = vmax.f32 %v577, %v596
        %v603 = vmax.f32 %v578, %v590
        %v604 = vmax.f32 %v580, %v597
        %v605 = vmax.f32 %v581, %v594
        %v606 = vld [vmem:[%s2] sm:$0x3]
        %v608 = vlaneseq
        %v609 = vshrl.u32 %v608, 7
        %v610 = vsub.s32 0, %v609
        %v611 = vrot.slane %v606, %v610
        %v612 = vlaneseq
        %v613 = vshrl.u32 %v612, 7
        %v614 = vsub.s32 1, %v613
        %v615 = vrot.slane %v606, %v614
        %v618 = vadd.f32 %v602, %v611
        %v619 = vadd.f32 %v603, %v615
        %v620 = vadd.f32 %v604, %v611
        %v621 = vadd.f32 %v605, %v615
        %vm622 = vcmp.gt.f32.partialorder %v618, 1.0
        %vm623 = vcmp.gt.f32.partialorder %v619, 1.0
        %vm624 = vcmp.gt.f32.partialorder %v620, 1.0
        %vm625 = vcmp.gt.f32.partialorder %v621, 1.0
        %v626 = vsel %vm622, 1, 0
        %v627 = vsel %vm623, 1, 0
        %v628 = vsel %vm624, 1, 0
        %v629 = vsel %vm625, 1, 0
        %v630 = vcvt.s32.f32 %v626
        %v631 = vcvt.s32.f32 %v627
        %v632 = vcvt.s32.f32 %v628
        %v633 = vcvt.s32.f32 %v629
        %v634 = vld [vmem:[%s3] sm:$0xff]
        %v635 = vld [vmem:[%s3 + $0x8] sm:$0xff]
        %v636 = vld [vmem:[%s3 + $0x10] sm:$0xff]
        %v637 = vld [vmem:[%s3 + $0x18] sm:$0xff]
        %v638 = vld [vmem:[%s3 + $0x20] sm:$0xff]
        %v639 = vld [vmem:[%s3 + $0x28] sm:$0xff]
        %v640 = vld [vmem:[%s3 + $0x30] sm:$0xff]
        %v641 = vld [vmem:[%s3 + $0x38] sm:$0xff]
        %v642 = vld [vmem:[%s3 + $0x40] sm:$0xff]
        %v643 = vld [vmem:[%s3 + $0x48] sm:$0xff]
        %v644 = vld [vmem:[%s3 + $0x50] sm:$0xff]
        %v645 = vld [vmem:[%s3 + $0x58] sm:$0xff]
        %v646 = vld [vmem:[%s3 + $0x60] sm:$0xff]
        %v647 = vld [vmem:[%s3 + $0x68] sm:$0xff]
        %v648 = vld [vmem:[%s3 + $0x70] sm:$0xff]
        %v649 = vld [vmem:[%s3 + $0x78] sm:$0xff]
        %v650 = vld [vmem:[%s3 + $0x80] sm:$0xff]
        %v651 = vld [vmem:[%s3 + $0x88] sm:$0xff]
        %v652 = vld [vmem:[%s3 + $0x90] sm:$0xff]
        %v653 = vld [vmem:[%s3 + $0x98] sm:$0xff]
        %v654 = vld [vmem:[%s3 + $0xa0] sm:$0xff]
        %v655 = vld [vmem:[%s3 + $0xa8] sm:$0xff]
        %v656 = vld [vmem:[%s3 + $0xb0] sm:$0xff]
        %v657 = vld [vmem:[%s3 + $0xb8] sm:$0xff]
        %v658 = vld [vmem:[%s3 + $0xc0] sm:$0xff]
        %v659 = vld [vmem:[%s3 + $0xc8] sm:$0xff]
        %v660 = vld [vmem:[%s3 + $0xd0] sm:$0xff]
        %v661 = vld [vmem:[%s3 + $0xd8] sm:$0xff]
        %v662 = vld [vmem:[%s3 + $0xe0] sm:$0xff]
        %v663 = vld [vmem:[%s3 + $0xe8] sm:$0xff]
        %v664 = vld [vmem:[%s3 + $0xf0] sm:$0xff]
        %v665 = vld [vmem:[%s3 + $0xf8] sm:$0xff]
        %v666 = vld [vmem:[%s3 + $0x100] sm:$0xff]
        %v667 = vld [vmem:[%s3 + $0x108] sm:$0xff]
        %v668 = vld [vmem:[%s3 + $0x110] sm:$0xff]
        %v669 = vld [vmem:[%s3 + $0x118] sm:$0xff]
        %v670 = vld [vmem:[%s3 + $0x120] sm:$0xff]
        %v671 = vld [vmem:[%s3 + $0x128] sm:$0xff]
        %v672 = vld [vmem:[%s3 + $0x130] sm:$0xff]
        %v673 = vld [vmem:[%s3 + $0x138] sm:$0xff]
        %v674 = vld [vmem:[%s3 + $0x140] sm:$0xff]
        %v675 = vld [vmem:[%s3 + $0x148] sm:$0xff]
        %v676 = vld [vmem:[%s3 + $0x150] sm:$0xff]
        %v677 = vld [vmem:[%s3 + $0x158] sm:$0xff]
        %v678 = vld [vmem:[%s3 + $0x160] sm:$0xff]
        %v679 = vld [vmem:[%s3 + $0x168] sm:$0xff]
        %v680 = vld [vmem:[%s3 + $0x170] sm:$0xff]
        %v681 = vld [vmem:[%s3 + $0x178] sm:$0xff]
        %v682 = vld [vmem:[%s3 + $0x180] sm:$0xff]
        %v683 = vld [vmem:[%s3 + $0x188] sm:$0xff]
        %v684 = vld [vmem:[%s3 + $0x190] sm:$0xff]
        %v685 = vld [vmem:[%s3 + $0x198] sm:$0xff]
        %v686 = vld [vmem:[%s3 + $0x1a0] sm:$0xff]
        %v687 = vld [vmem:[%s3 + $0x1a8] sm:$0xff]
        %v688 = vld [vmem:[%s3 + $0x1b0] sm:$0xff]
        %v689 = vld [vmem:[%s3 + $0x1b8] sm:$0xff]
        %v690 = vld [vmem:[%s3 + $0x1c0] sm:$0xff]
        %v691 = vld [vmem:[%s3 + $0x1c8] sm:$0xff]
        %v692 = vld [vmem:[%s3 + $0x1d0] sm:$0xff]
        %v693 = vld [vmem:[%s3 + $0x1d8] sm:$0xff]
        %v694 = vld [vmem:[%s3 + $0x1e0] sm:$0xff]
        %v695 = vld [vmem:[%s3 + $0x1e8] sm:$0xff]
        %v696 = vld [vmem:[%s3 + $0x1f0] sm:$0xff]
        %v697 = vld [vmem:[%s3 + $0x1f8] sm:$0xff]
        %v698 = vld [vmem:[%s3 + $0x200] sm:$0xff]
        %v699 = vld [vmem:[%s3 + $0x208] sm:$0xff]
        %v700 = vld [vmem:[%s3 + $0x210] sm:$0xff]
        %v701 = vld [vmem:[%s3 + $0x218] sm:$0xff]
        %v702 = vld [vmem:[%s3 + $0x220] sm:$0xff]
        %v703 = vld [vmem:[%s3 + $0x228] sm:$0xff]
        %v704 = vld [vmem:[%s3 + $0x230] sm:$0xff]
        %v705 = vld [vmem:[%s3 + $0x238] sm:$0xff]
        %v706 = vld [vmem:[%s3 + $0x240] sm:$0xff]
        %v707 = vld [vmem:[%s3 + $0x248] sm:$0xff]
        %v708 = vld [vmem:[%s3 + $0x250] sm:$0xff]
        %v709 = vld [vmem:[%s3 + $0x258] sm:$0xff]
        %v710 = vld [vmem:[%s3 + $0x260] sm:$0xff]
        %v711 = vld [vmem:[%s3 + $0x268] sm:$0xff]
        %v712 = vld [vmem:[%s3 + $0x270] sm:$0xff]
        %v713 = vld [vmem:[%s3 + $0x278] sm:$0xff]
        %v714 = vld [vmem:[%s3 + $0x280] sm:$0xff]
        %v715 = vld [vmem:[%s3 + $0x288] sm:$0xff]
        %v716 = vld [vmem:[%s3 + $0x290] sm:$0xff]
        %v717 = vld [vmem:[%s3 + $0x298] sm:$0xff]
        %v718 = vld [vmem:[%s3 + $0x2a0] sm:$0xff]
        %v719 = vld [vmem:[%s3 + $0x2a8] sm:$0xff]
        %v720 = vld [vmem:[%s3 + $0x2b0] sm:$0xff]
        %v721 = vld [vmem:[%s3 + $0x2b8] sm:$0xff]
        %v722 = vld [vmem:[%s3 + $0x2c0] sm:$0xff]
        %v723 = vld [vmem:[%s3 + $0x2c8] sm:$0xff]
        %v724 = vld [vmem:[%s3 + $0x2d0] sm:$0xff]
        %v725 = vld [vmem:[%s3 + $0x2d8] sm:$0xff]
        %v726 = vld [vmem:[%s3 + $0x2e0] sm:$0xff]
        %v727 = vld [vmem:[%s3 + $0x2e8] sm:$0xff]
        %v728 = vld [vmem:[%s3 + $0x2f0] sm:$0xff]
        %v729 = vld [vmem:[%s3 + $0x2f8] sm:$0xff]
        %v730 = vld [vmem:[%s3 + $0x300] sm:$0xff]
        %v731 = vld [vmem:[%s3 + $0x308] sm:$0xff]
        %v732 = vld [vmem:[%s3 + $0x310] sm:$0xff]
        %v733 = vld [vmem:[%s3 + $0x318] sm:$0xff]
        %v734 = vld [vmem:[%s3 + $0x320] sm:$0xff]
        %v735 = vld [vmem:[%s3 + $0x328] sm:$0xff]
        %v736 = vld [vmem:[%s3 + $0x330] sm:$0xff]
        %v737 = vld [vmem:[%s3 + $0x338] sm:$0xff]
        %v738 = vld [vmem:[%s3 + $0x340] sm:$0xff]
        %v739 = vld [vmem:[%s3 + $0x348] sm:$0xff]
        %v740 = vld [vmem:[%s3 + $0x350] sm:$0xff]
        %v741 = vld [vmem:[%s3 + $0x358] sm:$0xff]
        %v742 = vld [vmem:[%s3 + $0x360] sm:$0xff]
        %v743 = vld [vmem:[%s3 + $0x368] sm:$0xff]
        %v744 = vld [vmem:[%s3 + $0x370] sm:$0xff]
        %v745 = vld [vmem:[%s3 + $0x378] sm:$0xff]
        %v746 = vld [vmem:[%s3 + $0x380] sm:$0xff]
        %v747 = vld [vmem:[%s3 + $0x388] sm:$0xff]
        %v748 = vld [vmem:[%s3 + $0x390] sm:$0xff]
        %v749 = vld [vmem:[%s3 + $0x398] sm:$0xff]
        %v750 = vld [vmem:[%s3 + $0x3a0] sm:$0xff]
        %v751 = vld [vmem:[%s3 + $0x3a8] sm:$0xff]
        %v752 = vld [vmem:[%s3 + $0x3b0] sm:$0xff]
        %v753 = vld [vmem:[%s3 + $0x3b8] sm:$0xff]
        %v754 = vld [vmem:[%s3 + $0x3c0] sm:$0xff]
        %v755 = vld [vmem:[%s3 + $0x3c8] sm:$0xff]
        %v756 = vld [vmem:[%s3 + $0x3d0] sm:$0xff]
        %v757 = vld [vmem:[%s3 + $0x3d8] sm:$0xff]
        %v758 = vld [vmem:[%s3 + $0x3e0] sm:$0xff]
        %v759 = vld [vmem:[%s3 + $0x3e8] sm:$0xff]
        %v760 = vld [vmem:[%s3 + $0x3f0] sm:$0xff]
        %v761 = vld [vmem:[%s3 + $0x3f8] sm:$0xff]
        %v762 = vld [vmem:[%s3 + $0x400] sm:$0xff]
        %v763 = vld [vmem:[%s3 + $0x408] sm:$0xff]
        %v764 = vld [vmem:[%s3 + $0x410] sm:$0xff]
        %v765 = vld [vmem:[%s3 + $0x418] sm:$0xff]
        %v766 = vld [vmem:[%s3 + $0x420] sm:$0xff]
        %v767 = vld [vmem:[%s3 + $0x428] sm:$0xff]
        %v768 = vld [vmem:[%s3 + $0x430] sm:$0xff]
        %v769 = vld [vmem:[%s3 + $0x438] sm:$0xff]
        %v770 = vld [vmem:[%s3 + $0x440] sm:$0xff]
        %v771 = vld [vmem:[%s3 + $0x448] sm:$0xff]
        %v772 = vld [vmem:[%s3 + $0x450] sm:$0xff]
        %v773 = vld [vmem:[%s3 + $0x458] sm:$0xff]
        %v774 = vld [vmem:[%s3 + $0x460] sm:$0xff]
        %v775 = vld [vmem:[%s3 + $0x468] sm:$0xff]
        %v776 = vld [vmem:[%s3 + $0x470] sm:$0xff]
        %v777 = vld [vmem:[%s3 + $0x478] sm:$0xff]
        %v778 = vld [vmem:[%s3 + $0x480] sm:$0xff]
        %v779 = vld [vmem:[%s3 + $0x488] sm:$0xff]
        %v780 = vld [vmem:[%s3 + $0x490] sm:$0xff]
        %v781 = vld [vmem:[%s3 + $0x498] sm:$0xff]
        %v782 = vld [vmem:[%s3 + $0x4a0] sm:$0xff]
        %v783 = vld [vmem:[%s3 + $0x4a8] sm:$0xff]
        %v784 = vld [vmem:[%s3 + $0x4b0] sm:$0xff]
        %v785 = vld [vmem:[%s3 + $0x4b8] sm:$0xff]
        %v786 = vld [vmem:[%s3 + $0x4c0] sm:$0xff]
        %v787 = vld [vmem:[%s3 + $0x4c8] sm:$0xff]
        %v788 = vld [vmem:[%s3 + $0x4d0] sm:$0xff]
        %v789 = vld [vmem:[%s3 + $0x4d8] sm:$0xff]
        %v790 = vld [vmem:[%s3 + $0x4e0] sm:$0xff]
        %v791 = vld [vmem:[%s3 + $0x4e8] sm:$0xff]
        %v792 = vld [vmem:[%s3 + $0x4f0] sm:$0xff]
        %v793 = vld [vmem:[%s3 + $0x4f8] sm:$0xff]
        %v794 = vld [vmem:[%s3 + $0x500] sm:$0xff]
        %v795 = vld [vmem:[%s3 + $0x508] sm:$0xff]
        %v796 = vld [vmem:[%s3 + $0x510] sm:$0xff]
        %v797 = vld [vmem:[%s3 + $0x518] sm:$0xff]
        %v798 = vld [vmem:[%s3 + $0x520] sm:$0xff]
        %v799 = vld [vmem:[%s3 + $0x528] sm:$0xff]
        %v800 = vld [vmem:[%s3 + $0x530] sm:$0xff]
        %v801 = vld [vmem:[%s3 + $0x538] sm:$0xff]
        %v802 = vld [vmem:[%s3 + $0x540] sm:$0xff]
        %v803 = vld [vmem:[%s3 + $0x548] sm:$0xff]
        %v804 = vld [vmem:[%s3 + $0x550] sm:$0xff]
        %v805 = vld [vmem:[%s3 + $0x558] sm:$0xff]
        %v806 = vld [vmem:[%s3 + $0x560] sm:$0xff]
        %v807 = vld [vmem:[%s3 + $0x568] sm:$0xff]
        %v808 = vld [vmem:[%s3 + $0x570] sm:$0xff]
        %v809 = vld [vmem:[%s3 + $0x578] sm:$0xff]
        %v810 = vld [vmem:[%s3 + $0x580] sm:$0xff]
        %v811 = vld [vmem:[%s3 + $0x588] sm:$0xff]
        %v812 = vld [vmem:[%s3 + $0x590] sm:$0xff]
        %v813 = vld [vmem:[%s3 + $0x598] sm:$0xff]
        %v814 = vld [vmem:[%s3 + $0x5a0] sm:$0xff]
        %v815 = vld [vmem:[%s3 + $0x5a8] sm:$0xff]
        %v816 = vld [vmem:[%s3 + $0x5b0] sm:$0xff]
        %v817 = vld [vmem:[%s3 + $0x5b8] sm:$0xff]
        %v818 = vld [vmem:[%s3 + $0x5c0] sm:$0xff]
        %v819 = vld [vmem:[%s3 + $0x5c8] sm:$0xff]
        %v820 = vld [vmem:[%s3 + $0x5d0] sm:$0xff]
        %v821 = vld [vmem:[%s3 + $0x5d8] sm:$0xff]
        %v822 = vld [vmem:[%s3 + $0x5e0] sm:$0xff]
        %v823 = vld [vmem:[%s3 + $0x5e8] sm:$0xff]
        %v824 = vld [vmem:[%s3 + $0x5f0] sm:$0xff]
        %v825 = vld [vmem:[%s3 + $0x5f8] sm:$0xff]
        %vm830 = vcmask 1046528
        %v831 = vrot.slane %v630, 1
        %v832 = vrot.slane %v632, 1
        %v833 = vsel %vm830, %v831, %v832
        %v834 = vrot.slane %v631, 1
        %v835 = vrot.slane %v633, 1
        %v836 = vsel %vm830, %v834, %v835
        %v838 = vsel %vm595, %v836, 0
        %840 = vmatprep.subr.mxu0 %v791
        %841 = vmatpush1.msra.mxu0 %v790
        %842 = vmatprep.subr.mxu0 %v787
        %843 = vmatpush1.msra.mxu0 %v786
        %844 = vmatprep.subr.mxu0 %v783
        %845 = vmatpush1.msra.mxu0 %v782
        %846 = vmatprep.subr.mxu0 %v779
        %847 = vmatpush1.msra.mxu0 %v778
        %848 = vmatprep.subr.mxu0 %v775
        %849 = vmatpush1.msra.mxu0 %v774
        %850 = vmatprep.subr.mxu0 %v771
        %851 = vmatpush1.msra.mxu0 %v770
        %852 = vmatprep.subr.mxu0 %v767
        %853 = vmatpush1.msra.mxu0 %v766
        %854 = vmatprep.subr.mxu0 %v763
        %855 = vmatpush1.msra.mxu0 %v762
        %856 = vmatprep.subr.mxu0 %v759
        %857 = vmatpush1.msra.mxu0 %v758
        %858 = vmatprep.subr.mxu0 %v755
        %859 = vmatpush1.msra.mxu0 %v754
        %860 = vmatprep.subr.mxu0 %v751
        %861 = vmatpush1.msra.mxu0 %v750
        %862 = vmatprep.subr.mxu0 %v747
        %863 = vmatpush1.msra.mxu0 %v746
        %864 = vmatprep.subr.mxu0 %v743
        %865 = vmatpush1.msra.mxu0 %v742
        %866 = vmatprep.subr.mxu0 %v739
        %867 = vmatpush1.msra.mxu0 %v738
        %868 = vmatprep.subr.mxu0 %v735
        %869 = vmatpush1.msra.mxu0 %v734
        %870 = vmatprep.subr.mxu0 %v731
        %871 = vmatpush1.msra.mxu0 %v730
        %872 = vmatprep.subr.mxu0 0.0
        %873 = vmatpush2.msra.mxu0 0.0
        %874 = vmatprep.subr.mxu0 0.0
        %875 = vmatpush2.msra.mxu0 0.0
        %876 = vmatprep.subr.mxu0 0.0
        %877 = vmatpush2.msra.mxu0 0.0
        %878 = vmatprep.subr.mxu0 0.0
        %879 = vmatpush2.msra.mxu0 0.0
        %880 = vmatprep.subr.mxu0 0.0
        %881 = vmatpush2.msra.mxu0 0.0
        %882 = vmatprep.subr.mxu0 0.0
        %883 = vmatpush2.msra.mxu0 0.0
        %884 = vmatprep.subr.mxu0 0.0
        %885 = vmatpush2.msra.mxu0 0.0
        %886 = vmatprep.subr.mxu0 0.0
        %887 = vmatpush2.msra.mxu0 0.0
        %888 = vmatprep.subr.mxu0 %v823
        %889 = vmatpush2.msra.mxu0 %v822
        %890 = vmatprep.subr.mxu0 %v819
        %891 = vmatpush2.msra.mxu0 %v818
        %892 = vmatprep.subr.mxu0 %v815
        %893 = vmatpush2.msra.mxu0 %v814
        %894 = vmatprep.subr.mxu0 %v811
        %895 = vmatpush2.msra.mxu0 %v810
        %896 = vmatprep.subr.mxu0 %v807
        %897 = vmatpush2.msra.mxu0 %v806
        %898 = vmatprep.subr.mxu0 %v803
        %899 = vmatpush2.msra.mxu0 %v802
        %900 = vmatprep.subr.mxu0 %v799
        %901 = vmatpush2.msra.mxu0 %v798
        %902 = vmatprep.subr.mxu0 %v795
        %903 = vmatpush2.msra.mxu0 %v794
        %904 = vmatprep.mubr.f32.mxu0 %v838
        %905 = vmatmul.mubr.f32.gmra.mxu0 %v833
        %v906 = vpop.f32.mrf.mxu0
        %v907 = vadd.f32 0.0, %v906
        %v908 = vpop.f32.mrf.mxu0
        %v909 = vadd.f32 0.0, %v908
        %910 = vdwg.mxu0
        %911 = vmatprep.subr.mxu0 %v793
        %912 = vmatpush1.msra.mxu0 %v792
        %913 = vmatprep.subr.mxu0 %v789
        %914 = vmatpush1.msra.mxu0 %v788
        %915 = vmatprep.subr.mxu0 %v785
        %916 = vmatpush1.msra.mxu0 %v784
        %917 = vmatprep.subr.mxu0 %v781
        %918 = vmatpush1.msra.mxu0 %v780
        %919 = vmatprep.subr.mxu0 %v777
        %920 = vmatpush1.msra.mxu0 %v776
        %921 = vmatprep.subr.mxu0 %v773
        %922 = vmatpush1.msra.mxu0 %v772
        %923 = vmatprep.subr.mxu0 %v769
        %924 = vmatpush1.msra.mxu0 %v768
        %925 = vmatprep.subr.mxu0 %v765
        %926 = vmatpush1.msra.mxu0 %v764
        %927 = vmatprep.subr.mxu0 %v761
        %928 = vmatpush1.msra.mxu0 %v760
        %929 = vmatprep.subr.mxu0 %v757
        %930 = vmatpush1.msra.mxu0 %v756
        %931 = vmatprep.subr.mxu0 %v753
        %932 = vmatpush1.msra.mxu0 %v752
        %933 = vmatprep.subr.mxu0 %v749
        %934 = vmatpush1.msra.mxu0 %v748
        %935 = vmatprep.subr.mxu0 %v745
        %936 = vmatpush1.msra.mxu0 %v744
        %937 = vmatprep.subr.mxu0 %v741
        %938 = vmatpush1.msra.mxu0 %v740
        %939 = vmatprep.subr.mxu0 %v737
        %940 = vmatpush1.msra.mxu0 %v736
        %941 = vmatprep.subr.mxu0 %v733
        %942 = vmatpush1.msra.mxu0 %v732
        %943 = vmatprep.subr.mxu0 0.0
        %944 = vmatpush2.msra.mxu0 0.0
        %945 = vmatprep.subr.mxu0 0.0
        %946 = vmatpush2.msra.mxu0 0.0
        %947 = vmatprep.subr.mxu0 0.0
        %948 = vmatpush2.msra.mxu0 0.0
        %949 = vmatprep.subr.mxu0 0.0
        %950 = vmatpush2.msra.mxu0 0.0
        %951 = vmatprep.subr.mxu0 0.0
        %952 = vmatpush2.msra.mxu0 0.0
        %953 = vmatprep.subr.mxu0 0.0
        %954 = vmatpush2.msra.mxu0 0.0
        %955 = vmatprep.subr.mxu0 0.0
        %956 = vmatpush2.msra.mxu0 0.0
        %957 = vmatprep.subr.mxu0 0.0
        %958 = vmatpush2.msra.mxu0 0.0
        %959 = vmatprep.subr.mxu0 %v825
        %960 = vmatpush2.msra.mxu0 %v824
        %961 = vmatprep.subr.mxu0 %v821
        %962 = vmatpush2.msra.mxu0 %v820
        %963 = vmatprep.subr.mxu0 %v817
        %964 = vmatpush2.msra.mxu0 %v816
        %965 = vmatprep.subr.mxu0 %v813
        %966 = vmatpush2.msra.mxu0 %v812
        %967 = vmatprep.subr.mxu0 %v809
        %968 = vmatpush2.msra.mxu0 %v808
        %969 = vmatprep.subr.mxu0 %v805
        %970 = vmatpush2.msra.mxu0 %v804
        %971 = vmatprep.subr.mxu0 %v801
        %972 = vmatpush2.msra.mxu0 %v800
        %973 = vmatprep.subr.mxu0 %v797
        %974 = vmatpush2.msra.mxu0 %v796
        %975 = vmatprep.mubr.f32.mxu0 %v838
        %976 = vmatmul.mubr.f32.gmra.mxu0 %v833
        %v977 = vpop.f32.mrf.mxu0
        %v978 = vadd.f32 0.0, %v977
        %v979 = vpop.f32.mrf.mxu0
        %v980 = vadd.f32 0.0, %v979
        %981 = vdwg.mxu0
        %v982 = vsel %vm595, %v631, 0
        %984 = vmatprep.subr.mxu0 %v695
        %985 = vmatpush1.msra.mxu0 %v694
        %986 = vmatprep.subr.mxu0 %v691
        %987 = vmatpush1.msra.mxu0 %v690
        %988 = vmatprep.subr.mxu0 %v687
        %989 = vmatpush1.msra.mxu0 %v686
        %990 = vmatprep.subr.mxu0 %v683
        %991 = vmatpush1.msra.mxu0 %v682
        %992 = vmatprep.subr.mxu0 %v679
        %993 = vmatpush1.msra.mxu0 %v678
        %994 = vmatprep.subr.mxu0 %v675
        %995 = vmatpush1.msra.mxu0 %v674
        %996 = vmatprep.subr.mxu0 %v671
        %997 = vmatpush1.msra.mxu0 %v670
        %998 = vmatprep.subr.mxu0 %v667
        %999 = vmatpush1.msra.mxu0 %v666
        %1000 = vmatprep.subr.mxu0 %v663
        %1001 = vmatpush1.msra.mxu0 %v662
        %1002 = vmatprep.subr.mxu0 %v659
        %1003 = vmatpush1.msra.mxu0 %v658
        %1004 = vmatprep.subr.mxu0 %v655
        %1005 = vmatpush1.msra.mxu0 %v654
        %1006 = vmatprep.subr.mxu0 %v651
        %1007 = vmatpush1.msra.mxu0 %v650
        %1008 = vmatprep.subr.mxu0 %v647
        %1009 = vmatpush1.msra.mxu0 %v646
        %1010 = vmatprep.subr.mxu0 %v643
        %1011 = vmatpush1.msra.mxu0 %v642
        %1012 = vmatprep.subr.mxu0 %v639
        %1013 = vmatpush1.msra.mxu0 %v638
        %1014 = vmatprep.subr.mxu0 %v635
        %1015 = vmatpush1.msra.mxu0 %v634
        %1016 = vmatprep.subr.mxu0 0.0
        %1017 = vmatpush2.msra.mxu0 0.0
        %1018 = vmatprep.subr.mxu0 0.0
        %1019 = vmatpush2.msra.mxu0 0.0
        %1020 = vmatprep.subr.mxu0 0.0
        %1021 = vmatpush2.msra.mxu0 0.0
        %1022 = vmatprep.subr.mxu0 0.0
        %1023 = vmatpush2.msra.mxu0 0.0
        %1024 = vmatprep.subr.mxu0 0.0
        %1025 = vmatpush2.msra.mxu0 0.0
        %1026 = vmatprep.subr.mxu0 0.0
        %1027 = vmatpush2.msra.mxu0 0.0
        %1028 = vmatprep.subr.mxu0 0.0
        %1029 = vmatpush2.msra.mxu0 0.0
        %1030 = vmatprep.subr.mxu0 0.0
        %1031 = vmatpush2.msra.mxu0 0.0
        %1032 = vmatprep.subr.mxu0 %v727
        %1033 = vmatpush2.msra.mxu0 %v726
        %1034 = vmatprep.subr.mxu0 %v723
        %1035 = vmatpush2.msra.mxu0 %v722
        %1036 = vmatprep.subr.mxu0 %v719
        %1037 = vmatpush2.msra.mxu0 %v718
        %1038 = vmatprep.subr.mxu0 %v715
        %1039 = vmatpush2.msra.mxu0 %v714
        %1040 = vmatprep.subr.mxu0 %v711
        %1041 = vmatpush2.msra.mxu0 %v710
        %1042 = vmatprep.subr.mxu0 %v707
        %1043 = vmatpush2.msra.mxu0 %v706
        %1044 = vmatprep.subr.mxu0 %v703
        %1045 = vmatpush2.msra.mxu0 %v702
        %1046 = vmatprep.subr.mxu0 %v699
        %1047 = vmatpush2.msra.mxu0 %v698
        %1048 = vmatprep.mubr.f32.mxu0 %v982
        %1049 = vmatmul.mubr.f32.gmra.mxu0 %v630
        %v1050 = vpop.f32.mrf.mxu0
        %v1051 = vadd.f32 %v907, %v1050
        %v1052 = vpop.f32.mrf.mxu0
        %v1053 = vadd.f32 %v909, %v1052
        %1054 = vdwg.mxu0
        %1055 = vmatprep.subr.mxu0 %v697
        %1056 = vmatpush1.msra.mxu0 %v696
        %1057 = vmatprep.subr.mxu0 %v693
        %1058 = vmatpush1.msra.mxu0 %v692
        %1059 = vmatprep.subr.mxu0 %v689
        %1060 = vmatpush1.msra.mxu0 %v688
        %1061 = vmatprep.subr.mxu0 %v685
        %1062 = vmatpush1.msra.mxu0 %v684
        %1063 = vmatprep.subr.mxu0 %v681
        %1064 = vmatpush1.msra.mxu0 %v680
        %1065 = vmatprep.subr.mxu0 %v677
        %1066 = vmatpush1.msra.mxu0 %v676
        %1067 = vmatprep.subr.mxu0 %v673
        %1068 = vmatpush1.msra.mxu0 %v672
        %1069 = vmatprep.subr.mxu0 %v669
        %1070 = vmatpush1.msra.mxu0 %v668
        %1071 = vmatprep.subr.mxu0 %v665
        %1072 = vmatpush1.msra.mxu0 %v664
        %1073 = vmatprep.subr.mxu0 %v661
        %1074 = vmatpush1.msra.mxu0 %v660
        %1075 = vmatprep.subr.mxu0 %v657
        %1076 = vmatpush1.msra.mxu0 %v656
        %1077 = vmatprep.subr.mxu0 %v653
        %1078 = vmatpush1.msra.mxu0 %v652
        %1079 = vmatprep.subr.mxu0 %v649
        %1080 = vmatpush1.msra.mxu0 %v648
        %1081 = vmatprep.subr.mxu0 %v645
        %1082 = vmatpush1.msra.mxu0 %v644
        %1083 = vmatprep.subr.mxu0 %v641
        %1084 = vmatpush1.msra.mxu0 %v640
        %1085 = vmatprep.subr.mxu0 %v637
        %1086 = vmatpush1.msra.mxu0 %v636
        %1087 = vmatprep.subr.mxu0 0.0
        %1088 = vmatpush2.msra.mxu0 0.0
        %1089 = vmatprep.subr.mxu0 0.0
        %1090 = vmatpush2.msra.mxu0 0.0
        %1091 = vmatprep.subr.mxu0 0.0
        %1092 = vmatpush2.msra.mxu0 0.0
        %1093 = vmatprep.subr.mxu0 0.0
        %1094 = vmatpush2.msra.mxu0 0.0
        %1095 = vmatprep.subr.mxu0 0.0
        %1096 = vmatpush2.msra.mxu0 0.0
        %1097 = vmatprep.subr.mxu0 0.0
        %1098 = vmatpush2.msra.mxu0 0.0
        %1099 = vmatprep.subr.mxu0 0.0
        %1100 = vmatpush2.msra.mxu0 0.0
        %1101 = vmatprep.subr.mxu0 0.0
        %1102 = vmatpush2.msra.mxu0 0.0
        %1103 = vmatprep.subr.mxu0 %v729
        %1104 = vmatpush2.msra.mxu0 %v728
        %1105 = vmatprep.subr.mxu0 %v725
        %1106 = vmatpush2.msra.mxu0 %v724
        %1107 = vmatprep.subr.mxu0 %v721
        %1108 = vmatpush2.msra.mxu0 %v720
        %1109 = vmatprep.subr.mxu0 %v717
        %1110 = vmatpush2.msra.mxu0 %v716
        %1111 = vmatprep.subr.mxu0 %v713
        %1112 = vmatpush2.msra.mxu0 %v712
        %1113 = vmatprep.subr.mxu0 %v709
        %1114 = vmatpush2.msra.mxu0 %v708
        %1115 = vmatprep.subr.mxu0 %v705
        %1116 = vmatpush2.msra.mxu0 %v704
        %1117 = vmatprep.subr.mxu0 %v701
        %1118 = vmatpush2.msra.mxu0 %v700
        %1119 = vmatprep.mubr.f32.mxu0 %v982
        %1120 = vmatmul.mubr.f32.gmra.mxu0 %v630
        %v1121 = vpop.f32.mrf.mxu0
        %v1122 = vadd.f32 %v978, %v1121
        %v1123 = vpop.f32.mrf.mxu0
        %v1124 = vadd.f32 %v980, %v1123
        %1125 = vdwg.mxu0
        %v1126 = vld [vmem:[%s3 + $0x600] sm:$0xff]
        %v1127 = vld [vmem:[%s3 + $0x608] sm:$0xff]
        %v1128 = vld [vmem:[%s3 + $0x610] sm:$0xff]
        %v1129 = vld [vmem:[%s3 + $0x618] sm:$0xff]
        %v1130 = vld [vmem:[%s3 + $0x620] sm:$0xff]
        %v1131 = vld [vmem:[%s3 + $0x628] sm:$0xff]
        %v1132 = vld [vmem:[%s3 + $0x630] sm:$0xff]
        %v1133 = vld [vmem:[%s3 + $0x638] sm:$0xff]
        %v1134 = vld [vmem:[%s3 + $0x640] sm:$0xff]
        %v1135 = vld [vmem:[%s3 + $0x648] sm:$0xff]
        %v1136 = vld [vmem:[%s3 + $0x650] sm:$0xff]
        %v1137 = vld [vmem:[%s3 + $0x658] sm:$0xff]
        %v1138 = vld [vmem:[%s3 + $0x660] sm:$0xff]
        %v1139 = vld [vmem:[%s3 + $0x668] sm:$0xff]
        %v1140 = vld [vmem:[%s3 + $0x670] sm:$0xff]
        %v1141 = vld [vmem:[%s3 + $0x678] sm:$0xff]
        %v1142 = vld [vmem:[%s3 + $0x680] sm:$0xff]
        %v1143 = vld [vmem:[%s3 + $0x688] sm:$0xff]
        %v1144 = vld [vmem:[%s3 + $0x690] sm:$0xff]
        %v1145 = vld [vmem:[%s3 + $0x698] sm:$0xff]
        %v1146 = vld [vmem:[%s3 + $0x6a0] sm:$0xff]
        %v1147 = vld [vmem:[%s3 + $0x6a8] sm:$0xff]
        %v1148 = vld [vmem:[%s3 + $0x6b0] sm:$0xff]
        %v1149 = vld [vmem:[%s3 + $0x6b8] sm:$0xff]
        %v1150 = vld [vmem:[%s3 + $0x6c0] sm:$0xff]
        %v1151 = vld [vmem:[%s3 + $0x6c8] sm:$0xff]
        %v1152 = vld [vmem:[%s3 + $0x6d0] sm:$0xff]
        %v1153 = vld [vmem:[%s3 + $0x6d8] sm:$0xff]
        %v1154 = vld [vmem:[%s3 + $0x6e0] sm:$0xff]
        %v1155 = vld [vmem:[%s3 + $0x6e8] sm:$0xff]
        %v1156 = vld [vmem:[%s3 + $0x6f0] sm:$0xff]
        %v1157 = vld [vmem:[%s3 + $0x6f8] sm:$0xff]
        %v1158 = vld [vmem:[%s3 + $0x700] sm:$0xff]
        %v1159 = vld [vmem:[%s3 + $0x708] sm:$0xff]
        %v1160 = vld [vmem:[%s3 + $0x710] sm:$0xff]
        %v1161 = vld [vmem:[%s3 + $0x718] sm:$0xff]
        %v1162 = vld [vmem:[%s3 + $0x720] sm:$0xff]
        %v1163 = vld [vmem:[%s3 + $0x728] sm:$0xff]
        %v1164 = vld [vmem:[%s3 + $0x730] sm:$0xff]
        %v1165 = vld [vmem:[%s3 + $0x738] sm:$0xff]
        %v1166 = vld [vmem:[%s3 + $0x740] sm:$0xff]
        %v1167 = vld [vmem:[%s3 + $0x748] sm:$0xff]
        %v1168 = vld [vmem:[%s3 + $0x750] sm:$0xff]
        %v1169 = vld [vmem:[%s3 + $0x758] sm:$0xff]
        %v1170 = vld [vmem:[%s3 + $0x760] sm:$0xff]
        %v1171 = vld [vmem:[%s3 + $0x768] sm:$0xff]
        %v1172 = vld [vmem:[%s3 + $0x770] sm:$0xff]
        %v1173 = vld [vmem:[%s3 + $0x778] sm:$0xff]
        %v1174 = vld [vmem:[%s3 + $0x780] sm:$0xff]
        %v1175 = vld [vmem:[%s3 + $0x788] sm:$0xff]
        %v1176 = vld [vmem:[%s3 + $0x790] sm:$0xff]
        %v1177 = vld [vmem:[%s3 + $0x798] sm:$0xff]
        %v1178 = vld [vmem:[%s3 + $0x7a0] sm:$0xff]
        %v1179 = vld [vmem:[%s3 + $0x7a8] sm:$0xff]
        %v1180 = vld [vmem:[%s3 + $0x7b0] sm:$0xff]
        %v1181 = vld [vmem:[%s3 + $0x7b8] sm:$0xff]
        %v1182 = vld [vmem:[%s3 + $0x7c0] sm:$0xff]
        %v1183 = vld [vmem:[%s3 + $0x7c8] sm:$0xff]
        %v1184 = vld [vmem:[%s3 + $0x7d0] sm:$0xff]
        %v1185 = vld [vmem:[%s3 + $0x7d8] sm:$0xff]
        %v1186 = vld [vmem:[%s3 + $0x7e0] sm:$0xff]
        %v1187 = vld [vmem:[%s3 + $0x7e8] sm:$0xff]
        %v1188 = vld [vmem:[%s3 + $0x7f0] sm:$0xff]
        %v1189 = vld [vmem:[%s3 + $0x7f8] sm:$0xff]
        %v1190 = vld [vmem:[%s3 + $0x800] sm:$0xff]
        %v1191 = vld [vmem:[%s3 + $0x808] sm:$0xff]
        %v1192 = vld [vmem:[%s3 + $0x810] sm:$0xff]
        %v1193 = vld [vmem:[%s3 + $0x818] sm:$0xff]
        %v1194 = vld [vmem:[%s3 + $0x820] sm:$0xff]
        %v1195 = vld [vmem:[%s3 + $0x828] sm:$0xff]
        %v1196 = vld [vmem:[%s3 + $0x830] sm:$0xff]
        %v1197 = vld [vmem:[%s3 + $0x838] sm:$0xff]
        %v1198 = vld [vmem:[%s3 + $0x840] sm:$0xff]
        %v1199 = vld [vmem:[%s3 + $0x848] sm:$0xff]
        %v1200 = vld [vmem:[%s3 + $0x850] sm:$0xff]
        %v1201 = vld [vmem:[%s3 + $0x858] sm:$0xff]
        %v1202 = vld [vmem:[%s3 + $0x860] sm:$0xff]
        %v1203 = vld [vmem:[%s3 + $0x868] sm:$0xff]
        %v1204 = vld [vmem:[%s3 + $0x870] sm:$0xff]
        %v1205 = vld [vmem:[%s3 + $0x878] sm:$0xff]
        %v1206 = vld [vmem:[%s3 + $0x880] sm:$0xff]
        %v1207 = vld [vmem:[%s3 + $0x888] sm:$0xff]
        %v1208 = vld [vmem:[%s3 + $0x890] sm:$0xff]
        %v1209 = vld [vmem:[%s3 + $0x898] sm:$0xff]
        %v1210 = vld [vmem:[%s3 + $0x8a0] sm:$0xff]
        %v1211 = vld [vmem:[%s3 + $0x8a8] sm:$0xff]
        %v1212 = vld [vmem:[%s3 + $0x8b0] sm:$0xff]
        %v1213 = vld [vmem:[%s3 + $0x8b8] sm:$0xff]
        %v1214 = vld [vmem:[%s3 + $0x8c0] sm:$0xff]
        %v1215 = vld [vmem:[%s3 + $0x8c8] sm:$0xff]
        %v1216 = vld [vmem:[%s3 + $0x8d0] sm:$0xff]
        %v1217 = vld [vmem:[%s3 + $0x8d8] sm:$0xff]
        %v1218 = vld [vmem:[%s3 + $0x8e0] sm:$0xff]
        %v1219 = vld [vmem:[%s3 + $0x8e8] sm:$0xff]
        %v1220 = vld [vmem:[%s3 + $0x8f0] sm:$0xff]
        %v1221 = vld [vmem:[%s3 + $0x8f8] sm:$0xff]
        %vm1222 = vcmask 1045504
        %v1223 = vrot.slane %v630, 2
        %v1224 = vrot.slane %v632, 2
        %v1225 = vsel %vm1222, %v1223, %v1224
        %v1226 = vrot.slane %v631, 2
        %v1227 = vrot.slane %v633, 2
        %v1228 = vsel %vm1222, %v1226, %v1227
        %v1230 = vsel %vm595, %v1228, 0
        %1232 = vmatprep.subr.mxu0 %v1187
        %1233 = vmatpush1.msra.mxu0 %v1186
        %1234 = vmatprep.subr.mxu0 %v1183
        %1235 = vmatpush1.msra.mxu0 %v1182
        %1236 = vmatprep.subr.mxu0 %v1179
        %1237 = vmatpush1.msra.mxu0 %v1178
        %1238 = vmatprep.subr.mxu0 %v1175
        %1239 = vmatpush1.msra.mxu0 %v1174
        %1240 = vmatprep.subr.mxu0 %v1171
        %1241 = vmatpush1.msra.mxu0 %v1170
        %1242 = vmatprep.subr.mxu0 %v1167
        %1243 = vmatpush1.msra.mxu0 %v1166
        %1244 = vmatprep.subr.mxu0 %v1163
        %1245 = vmatpush1.msra.mxu0 %v1162
        %1246 = vmatprep.subr.mxu0 %v1159
        %1247 = vmatpush1.msra.mxu0 %v1158
        %1248 = vmatprep.subr.mxu0 %v1155
        %1249 = vmatpush1.msra.mxu0 %v1154
        %1250 = vmatprep.subr.mxu0 %v1151
        %1251 = vmatpush1.msra.mxu0 %v1150
        %1252 = vmatprep.subr.mxu0 %v1147
        %1253 = vmatpush1.msra.mxu0 %v1146
        %1254 = vmatprep.subr.mxu0 %v1143
        %1255 = vmatpush1.msra.mxu0 %v1142
        %1256 = vmatprep.subr.mxu0 %v1139
        %1257 = vmatpush1.msra.mxu0 %v1138
        %1258 = vmatprep.subr.mxu0 %v1135
        %1259 = vmatpush1.msra.mxu0 %v1134
        %1260 = vmatprep.subr.mxu0 %v1131
        %1261 = vmatpush1.msra.mxu0 %v1130
        %1262 = vmatprep.subr.mxu0 %v1127
        %1263 = vmatpush1.msra.mxu0 %v1126
        %1264 = vmatprep.subr.mxu0 0.0
        %1265 = vmatpush2.msra.mxu0 0.0
        %1266 = vmatprep.subr.mxu0 0.0
        %1267 = vmatpush2.msra.mxu0 0.0
        %1268 = vmatprep.subr.mxu0 0.0
        %1269 = vmatpush2.msra.mxu0 0.0
        %1270 = vmatprep.subr.mxu0 0.0
        %1271 = vmatpush2.msra.mxu0 0.0
        %1272 = vmatprep.subr.mxu0 0.0
        %1273 = vmatpush2.msra.mxu0 0.0
        %1274 = vmatprep.subr.mxu0 0.0
        %1275 = vmatpush2.msra.mxu0 0.0
        %1276 = vmatprep.subr.mxu0 0.0
        %1277 = vmatpush2.msra.mxu0 0.0
        %1278 = vmatprep.subr.mxu0 0.0
        %1279 = vmatpush2.msra.mxu0 0.0
        %1280 = vmatprep.subr.mxu0 %v1219
        %1281 = vmatpush2.msra.mxu0 %v1218
        %1282 = vmatprep.subr.mxu0 %v1215
        %1283 = vmatpush2.msra.mxu0 %v1214
        %1284 = vmatprep.subr.mxu0 %v1211
        %1285 = vmatpush2.msra.mxu0 %v1210
        %1286 = vmatprep.subr.mxu0 %v1207
        %1287 = vmatpush2.msra.mxu0 %v1206
        %1288 = vmatprep.subr.mxu0 %v1203
        %1289 = vmatpush2.msra.mxu0 %v1202
        %1290 = vmatprep.subr.mxu0 %v1199
        %1291 = vmatpush2.msra.mxu0 %v1198
        %1292 = vmatprep.subr.mxu0 %v1195
        %1293 = vmatpush2.msra.mxu0 %v1194
        %1294 = vmatprep.subr.mxu0 %v1191
        %1295 = vmatpush2.msra.mxu0 %v1190
        %1296 = vmatprep.mubr.f32.mxu0 %v1230
        %1297 = vmatmul.mubr.f32.gmra.mxu0 %v1225
        %v1298 = vpop.f32.mrf.mxu0
        %v1299 = vadd.f32 0.0, %v1298
        %v1300 = vpop.f32.mrf.mxu0
        %v1301 = vadd.f32 0.0, %v1300
        %1302 = vdwg.mxu0
        %1303 = vmatprep.subr.mxu0 %v1189
        %1304 = vmatpush1.msra.mxu0 %v1188
        %1305 = vmatprep.subr.mxu0 %v1185
        %1306 = vmatpush1.msra.mxu0 %v1184
        %1307 = vmatprep.subr.mxu0 %v1181
        %1308 = vmatpush1.msra.mxu0 %v1180
        %1309 = vmatprep.subr.mxu0 %v1177
        %1310 = vmatpush1.msra.mxu0 %v1176
        %1311 = vmatprep.subr.mxu0 %v1173
        %1312 = vmatpush1.msra.mxu0 %v1172
        %1313 = vmatprep.subr.mxu0 %v1169
        %1314 = vmatpush1.msra.mxu0 %v1168
        %1315 = vmatprep.subr.mxu0 %v1165
        %1316 = vmatpush1.msra.mxu0 %v1164
        %1317 = vmatprep.subr.mxu0 %v1161
        %1318 = vmatpush1.msra.mxu0 %v1160
        %1319 = vmatprep.subr.mxu0 %v1157
        %1320 = vmatpush1.msra.mxu0 %v1156
        %1321 = vmatprep.subr.mxu0 %v1153
        %1322 = vmatpush1.msra.mxu0 %v1152
        %1323 = vmatprep.subr.mxu0 %v1149
        %1324 = vmatpush1.msra.mxu0 %v1148
        %1325 = vmatprep.subr.mxu0 %v1145
        %1326 = vmatpush1.msra.mxu0 %v1144
        %1327 = vmatprep.subr.mxu0 %v1141
        %1328 = vmatpush1.msra.mxu0 %v1140
        %1329 = vmatprep.subr.mxu0 %v1137
        %1330 = vmatpush1.msra.mxu0 %v1136
        %1331 = vmatprep.subr.mxu0 %v1133
        %1332 = vmatpush1.msra.mxu0 %v1132
        %1333 = vmatprep.subr.mxu0 %v1129
        %1334 = vmatpush1.msra.mxu0 %v1128
        %1335 = vmatprep.subr.mxu0 0.0
        %1336 = vmatpush2.msra.mxu0 0.0
        %1337 = vmatprep.subr.mxu0 0.0
        %1338 = vmatpush2.msra.mxu0 0.0
        %1339 = vmatprep.subr.mxu0 0.0
        %1340 = vmatpush2.msra.mxu0 0.0
        %1341 = vmatprep.subr.mxu0 0.0
        %1342 = vmatpush2.msra.mxu0 0.0
        %1343 = vmatprep.subr.mxu0 0.0
        %1344 = vmatpush2.msra.mxu0 0.0
        %1345 = vmatprep.subr.mxu0 0.0
        %1346 = vmatpush2.msra.mxu0 0.0
        %1347 = vmatprep.subr.mxu0 0.0
        %1348 = vmatpush2.msra.mxu0 0.0
        %1349 = vmatprep.subr.mxu0 0.0
        %1350 = vmatpush2.msra.mxu0 0.0
        %1351 = vmatprep.subr.mxu0 %v1221
        %1352 = vmatpush2.msra.mxu0 %v1220
        %1353 = vmatprep.subr.mxu0 %v1217
        %1354 = vmatpush2.msra.mxu0 %v1216
        %1355 = vmatprep.subr.mxu0 %v1213
        %1356 = vmatpush2.msra.mxu0 %v1212
        %1357 = vmatprep.subr.mxu0 %v1209
        %1358 = vmatpush2.msra.mxu0 %v1208
        %1359 = vmatprep.subr.mxu0 %v1205
        %1360 = vmatpush2.msra.mxu0 %v1204
        %1361 = vmatprep.subr.mxu0 %v1201
        %1362 = vmatpush2.msra.mxu0 %v1200
        %1363 = vmatprep.subr.mxu0 %v1197
        %1364 = vmatpush2.msra.mxu0 %v1196
        %1365 = vmatprep.subr.mxu0 %v1193
        %1366 = vmatpush2.msra.mxu0 %v1192
        %1367 = vmatprep.mubr.f32.mxu0 %v1230
        %1368 = vmatmul.mubr.f32.gmra.mxu0 %v1225
        %v1369 = vpop.f32.mrf.mxu0
        %v1370 = vadd.f32 0.0, %v1369
        %v1371 = vpop.f32.mrf.mxu0
        %v1372 = vadd.f32 0.0, %v1371
        %1373 = vdwg.mxu0
        %v1374 = vadd.f32 %v1051, %v1299
        %v1375 = vadd.f32 %v1053, %v1301
        %v1376 = vadd.f32 %v1122, %v1370
        %v1377 = vadd.f32 %v1124, %v1372
        %v1378 = vld [vmem:[%s3 + $0x900] sm:$0xff]
        %v1379 = vld [vmem:[%s3 + $0x908] sm:$0xff]
        %v1380 = vld [vmem:[%s3 + $0x910] sm:$0xff]
        %v1381 = vld [vmem:[%s3 + $0x918] sm:$0xff]
        %v1382 = vld [vmem:[%s3 + $0x920] sm:$0xff]
        %v1383 = vld [vmem:[%s3 + $0x928] sm:$0xff]
        %v1384 = vld [vmem:[%s3 + $0x930] sm:$0xff]
        %v1385 = vld [vmem:[%s3 + $0x938] sm:$0xff]
        %v1386 = vld [vmem:[%s3 + $0x940] sm:$0xff]
        %v1387 = vld [vmem:[%s3 + $0x948] sm:$0xff]
        %v1388 = vld [vmem:[%s3 + $0x950] sm:$0xff]
        %v1389 = vld [vmem:[%s3 + $0x958] sm:$0xff]
        %v1390 = vld [vmem:[%s3 + $0x960] sm:$0xff]
        %v1391 = vld [vmem:[%s3 + $0x968] sm:$0xff]
        %v1392 = vld [vmem:[%s3 + $0x970] sm:$0xff]
        %v1393 = vld [vmem:[%s3 + $0x978] sm:$0xff]
        %v1394 = vld [vmem:[%s3 + $0x980] sm:$0xff]
        %v1395 = vld [vmem:[%s3 + $0x988] sm:$0xff]
        %v1396 = vld [vmem:[%s3 + $0x990] sm:$0xff]
        %v1397 = vld [vmem:[%s3 + $0x998] sm:$0xff]
        %v1398 = vld [vmem:[%s3 + $0x9a0] sm:$0xff]
        %v1399 = vld [vmem:[%s3 + $0x9a8] sm:$0xff]
        %v1400 = vld [vmem:[%s3 + $0x9b0] sm:$0xff]
        %v1401 = vld [vmem:[%s3 + $0x9b8] sm:$0xff]
        %v1402 = vld [vmem:[%s3 + $0x9c0] sm:$0xff]
        %v1403 = vld [vmem:[%s3 + $0x9c8] sm:$0xff]
        %v1404 = vld [vmem:[%s3 + $0x9d0] sm:$0xff]
        %v1405 = vld [vmem:[%s3 + $0x9d8] sm:$0xff]
        %v1406 = vld [vmem:[%s3 + $0x9e0] sm:$0xff]
        %v1407 = vld [vmem:[%s3 + $0x9e8] sm:$0xff]
        %v1408 = vld [vmem:[%s3 + $0x9f0] sm:$0xff]
        %v1409 = vld [vmem:[%s3 + $0x9f8] sm:$0xff]
        %v1410 = vld [vmem:[%s3 + $0xa00] sm:$0xff]
        %v1411 = vld [vmem:[%s3 + $0xa08] sm:$0xff]
        %v1412 = vld [vmem:[%s3 + $0xa10] sm:$0xff]
        %v1413 = vld [vmem:[%s3 + $0xa18] sm:$0xff]
        %v1414 = vld [vmem:[%s3 + $0xa20] sm:$0xff]
        %v1415 = vld [vmem:[%s3 + $0xa28] sm:$0xff]
        %v1416 = vld [vmem:[%s3 + $0xa30] sm:$0xff]
        %v1417 = vld [vmem:[%s3 + $0xa38] sm:$0xff]
        %v1418 = vld [vmem:[%s3 + $0xa40] sm:$0xff]
        %v1419 = vld [vmem:[%s3 + $0xa48] sm:$0xff]
        %v1420 = vld [vmem:[%s3 + $0xa50] sm:$0xff]
        %v1421 = vld [vmem:[%s3 + $0xa58] sm:$0xff]
        %v1422 = vld [vmem:[%s3 + $0xa60] sm:$0xff]
        %v1423 = vld [vmem:[%s3 + $0xa68] sm:$0xff]
        %v1424 = vld [vmem:[%s3 + $0xa70] sm:$0xff]
        %v1425 = vld [vmem:[%s3 + $0xa78] sm:$0xff]
        %v1426 = vld [vmem:[%s3 + $0xa80] sm:$0xff]
        %v1427 = vld [vmem:[%s3 + $0xa88] sm:$0xff]
        %v1428 = vld [vmem:[%s3 + $0xa90] sm:$0xff]
        %v1429 = vld [vmem:[%s3 + $0xa98] sm:$0xff]
        %v1430 = vld [vmem:[%s3 + $0xaa0] sm:$0xff]
        %v1431 = vld [vmem:[%s3 + $0xaa8] sm:$0xff]
        %v1432 = vld [vmem:[%s3 + $0xab0] sm:$0xff]
        %v1433 = vld [vmem:[%s3 + $0xab8] sm:$0xff]
        %v1434 = vld [vmem:[%s3 + $0xac0] sm:$0xff]
        %v1435 = vld [vmem:[%s3 + $0xac8] sm:$0xff]
        %v1436 = vld [vmem:[%s3 + $0xad0] sm:$0xff]
        %v1437 = vld [vmem:[%s3 + $0xad8] sm:$0xff]
        %v1438 = vld [vmem:[%s3 + $0xae0] sm:$0xff]
        %v1439 = vld [vmem:[%s3 + $0xae8] sm:$0xff]
        %v1440 = vld [vmem:[%s3 + $0xaf0] sm:$0xff]
        %v1441 = vld [vmem:[%s3 + $0xaf8] sm:$0xff]
        %v1442 = vld [vmem:[%s3 + $0xb00] sm:$0xff]
        %v1443 = vld [vmem:[%s3 + $0xb08] sm:$0xff]
        %v1444 = vld [vmem:[%s3 + $0xb10] sm:$0xff]
        %v1445 = vld [vmem:[%s3 + $0xb18] sm:$0xff]
        %v1446 = vld [vmem:[%s3 + $0xb20] sm:$0xff]
        %v1447 = vld [vmem:[%s3 + $0xb28] sm:$0xff]
        %v1448 = vld [vmem:[%s3 + $0xb30] sm:$0xff]
        %v1449 = vld [vmem:[%s3 + $0xb38] sm:$0xff]
        %v1450 = vld [vmem:[%s3 + $0xb40] sm:$0xff]
        %v1451 = vld [vmem:[%s3 + $0xb48] sm:$0xff]
        %v1452 = vld [vmem:[%s3 + $0xb50] sm:$0xff]
        %v1453 = vld [vmem:[%s3 + $0xb58] sm:$0xff]
        %v1454 = vld [vmem:[%s3 + $0xb60] sm:$0xff]
        %v1455 = vld [vmem:[%s3 + $0xb68] sm:$0xff]
        %v1456 = vld [vmem:[%s3 + $0xb70] sm:$0xff]
        %v1457 = vld [vmem:[%s3 + $0xb78] sm:$0xff]
        %v1458 = vld [vmem:[%s3 + $0xb80] sm:$0xff]
        %v1459 = vld [vmem:[%s3 + $0xb88] sm:$0xff]
        %v1460 = vld [vmem:[%s3 + $0xb90] sm:$0xff]
        %v1461 = vld [vmem:[%s3 + $0xb98] sm:$0xff]
        %v1462 = vld [vmem:[%s3 + $0xba0] sm:$0xff]
        %v1463 = vld [vmem:[%s3 + $0xba8] sm:$0xff]
        %v1464 = vld [vmem:[%s3 + $0xbb0] sm:$0xff]
        %v1465 = vld [vmem:[%s3 + $0xbb8] sm:$0xff]
        %v1466 = vld [vmem:[%s3 + $0xbc0] sm:$0xff]
        %v1467 = vld [vmem:[%s3 + $0xbc8] sm:$0xff]
        %v1468 = vld [vmem:[%s3 + $0xbd0] sm:$0xff]
        %v1469 = vld [vmem:[%s3 + $0xbd8] sm:$0xff]
        %v1470 = vld [vmem:[%s3 + $0xbe0] sm:$0xff]
        %v1471 = vld [vmem:[%s3 + $0xbe8] sm:$0xff]
        %v1472 = vld [vmem:[%s3 + $0xbf0] sm:$0xff]
        %v1473 = vld [vmem:[%s3 + $0xbf8] sm:$0xff]
        %vm1474 = vcmask 1044480
        %v1475 = vrot.slane %v630, 3
        %v1476 = vrot.slane %v632, 3
        %v1477 = vsel %vm1474, %v1475, %v1476
        %v1478 = vrot.slane %v631, 3
        %v1479 = vrot.slane %v633, 3
        %v1480 = vsel %vm1474, %v1478, %v1479
        %v1482 = vsel %vm595, %v1480, 0
        %1484 = vmatprep.subr.mxu0 %v1439
        %1485 = vmatpush1.msra.mxu0 %v1438
        %1486 = vmatprep.subr.mxu0 %v1435
        %1487 = vmatpush1.msra.mxu0 %v1434
        %1488 = vmatprep.subr.mxu0 %v1431
        %1489 = vmatpush1.msra.mxu0 %v1430
        %1490 = vmatprep.subr.mxu0 %v1427
        %1491 = vmatpush1.msra.mxu0 %v1426
        %1492 = vmatprep.subr.mxu0 %v1423
        %1493 = vmatpush1.msra.mxu0 %v1422
        %1494 = vmatprep.subr.mxu0 %v1419
        %1495 = vmatpush1.msra.mxu0 %v1418
        %1496 = vmatprep.subr.mxu0 %v1415
        %1497 = vmatpush1.msra.mxu0 %v1414
        %1498 = vmatprep.subr.mxu0 %v1411
        %1499 = vmatpush1.msra.mxu0 %v1410
        %1500 = vmatprep.subr.mxu0 %v1407
        %1501 = vmatpush1.msra.mxu0 %v1406
        %1502 = vmatprep.subr.mxu0 %v1403
        %1503 = vmatpush1.msra.mxu0 %v1402
        %1504 = vmatprep.subr.mxu0 %v1399
        %1505 = vmatpush1.msra.mxu0 %v1398
        %1506 = vmatprep.subr.mxu0 %v1395
        %1507 = vmatpush1.msra.mxu0 %v1394
        %1508 = vmatprep.subr.mxu0 %v1391
        %1509 = vmatpush1.msra.mxu0 %v1390
        %1510 = vmatprep.subr.mxu0 %v1387
        %1511 = vmatpush1.msra.mxu0 %v1386
        %1512 = vmatprep.subr.mxu0 %v1383
        %1513 = vmatpush1.msra.mxu0 %v1382
        %1514 = vmatprep.subr.mxu0 %v1379
        %1515 = vmatpush1.msra.mxu0 %v1378
        %1516 = vmatprep.subr.mxu0 0.0
        %1517 = vmatpush2.msra.mxu0 0.0
        %1518 = vmatprep.subr.mxu0 0.0
        %1519 = vmatpush2.msra.mxu0 0.0
        %1520 = vmatprep.subr.mxu0 0.0
        %1521 = vmatpush2.msra.mxu0 0.0
        %1522 = vmatprep.subr.mxu0 0.0
        %1523 = vmatpush2.msra.mxu0 0.0
        %1524 = vmatprep.subr.mxu0 0.0
        %1525 = vmatpush2.msra.mxu0 0.0
        %1526 = vmatprep.subr.mxu0 0.0
        %1527 = vmatpush2.msra.mxu0 0.0
        %1528 = vmatprep.subr.mxu0 0.0
        %1529 = vmatpush2.msra.mxu0 0.0
        %1530 = vmatprep.subr.mxu0 0.0
        %1531 = vmatpush2.msra.mxu0 0.0
        %1532 = vmatprep.subr.mxu0 %v1471
        %1533 = vmatpush2.msra.mxu0 %v1470
        %1534 = vmatprep.subr.mxu0 %v1467
        %1535 = vmatpush2.msra.mxu0 %v1466
        %1536 = vmatprep.subr.mxu0 %v1463
        %1537 = vmatpush2.msra.mxu0 %v1462
        %1538 = vmatprep.subr.mxu0 %v1459
        %1539 = vmatpush2.msra.mxu0 %v1458
        %1540 = vmatprep.subr.mxu0 %v1455
        %1541 = vmatpush2.msra.mxu0 %v1454
        %1542 = vmatprep.subr.mxu0 %v1451
        %1543 = vmatpush2.msra.mxu0 %v1450
        %1544 = vmatprep.subr.mxu0 %v1447
        %1545 = vmatpush2.msra.mxu0 %v1446
        %1546 = vmatprep.subr.mxu0 %v1443
        %1547 = vmatpush2.msra.mxu0 %v1442
        %1548 = vmatprep.mubr.f32.mxu0 %v1482
        %1549 = vmatmul.mubr.f32.gmra.mxu0 %v1477
        %v1550 = vpop.f32.mrf.mxu0
        %v1551 = vadd.f32 0.0, %v1550
        %v1552 = vpop.f32.mrf.mxu0
        %v1553 = vadd.f32 0.0, %v1552
        %1554 = vdwg.mxu0
        %1555 = vmatprep.subr.mxu0 %v1441
        %1556 = vmatpush1.msra.mxu0 %v1440
        %1557 = vmatprep.subr.mxu0 %v1437
        %1558 = vmatpush1.msra.mxu0 %v1436
        %1559 = vmatprep.subr.mxu0 %v1433
        %1560 = vmatpush1.msra.mxu0 %v1432
        %1561 = vmatprep.subr.mxu0 %v1429
        %1562 = vmatpush1.msra.mxu0 %v1428
        %1563 = vmatprep.subr.mxu0 %v1425
        %1564 = vmatpush1.msra.mxu0 %v1424
        %1565 = vmatprep.subr.mxu0 %v1421
        %1566 = vmatpush1.msra.mxu0 %v1420
        %1567 = vmatprep.subr.mxu0 %v1417
        %1568 = vmatpush1.msra.mxu0 %v1416
        %1569 = vmatprep.subr.mxu0 %v1413
        %1570 = vmatpush1.msra.mxu0 %v1412
        %1571 = vmatprep.subr.mxu0 %v1409
        %1572 = vmatpush1.msra.mxu0 %v1408
        %1573 = vmatprep.subr.mxu0 %v1405
        %1574 = vmatpush1.msra.mxu0 %v1404
        %1575 = vmatprep.subr.mxu0 %v1401
        %1576 = vmatpush1.msra.mxu0 %v1400
        %1577 = vmatprep.subr.mxu0 %v1397
        %1578 = vmatpush1.msra.mxu0 %v1396
        %1579 = vmatprep.subr.mxu0 %v1393
        %1580 = vmatpush1.msra.mxu0 %v1392
        %1581 = vmatprep.subr.mxu0 %v1389
        %1582 = vmatpush1.msra.mxu0 %v1388
        %1583 = vmatprep.subr.mxu0 %v1385
        %1584 = vmatpush1.msra.mxu0 %v1384
        %1585 = vmatprep.subr.mxu0 %v1381
        %1586 = vmatpush1.msra.mxu0 %v1380
        %1587 = vmatprep.subr.mxu0 0.0
        %1588 = vmatpush2.msra.mxu0 0.0
        %1589 = vmatprep.subr.mxu0 0.0
        %1590 = vmatpush2.msra.mxu0 0.0
        %1591 = vmatprep.subr.mxu0 0.0
        %1592 = vmatpush2.msra.mxu0 0.0
        %1593 = vmatprep.subr.mxu0 0.0
        %1594 = vmatpush2.msra.mxu0 0.0
        %1595 = vmatprep.subr.mxu0 0.0
        %1596 = vmatpush2.msra.mxu0 0.0
        %1597 = vmatprep.subr.mxu0 0.0
        %1598 = vmatpush2.msra.mxu0 0.0
        %1599 = vmatprep.subr.mxu0 0.0
        %1600 = vmatpush2.msra.mxu0 0.0
        %1601 = vmatprep.subr.mxu0 0.0
        %1602 = vmatpush2.msra.mxu0 0.0
        %1603 = vmatprep.subr.mxu0 %v1473
        %1604 = vmatpush2.msra.mxu0 %v1472
        %1605 = vmatprep.subr.mxu0 %v1469
        %1606 = vmatpush2.msra.mxu0 %v1468
        %1607 = vmatprep.subr.mxu0 %v1465
        %1608 = vmatpush2.msra.mxu0 %v1464
        %1609 = vmatprep.subr.mxu0 %v1461
        %1610 = vmatpush2.msra.mxu0 %v1460
        %1611 = vmatprep.subr.mxu0 %v1457
        %1612 = vmatpush2.msra.mxu0 %v1456
        %1613 = vmatprep.subr.mxu0 %v1453
        %1614 = vmatpush2.msra.mxu0 %v1452
        %1615 = vmatprep.subr.mxu0 %v1449
        %1616 = vmatpush2.msra.mxu0 %v1448
        %1617 = vmatprep.subr.mxu0 %v1445
        %1618 = vmatpush2.msra.mxu0 %v1444
        %1619 = vmatprep.mubr.f32.mxu0 %v1482
        %1620 = vmatmul.mubr.f32.gmra.mxu0 %v1477
        %v1621 = vpop.f32.mrf.mxu0
        %v1622 = vadd.f32 0.0, %v1621
        %v1623 = vpop.f32.mrf.mxu0
        %v1624 = vadd.f32 0.0, %v1623
        %1625 = vdwg.mxu0
        %v1626 = vadd.f32 %v1374, %v1551
        %v1627 = vadd.f32 %v1375, %v1553
        %v1628 = vadd.f32 %v1376, %v1622
        %v1629 = vadd.f32 %v1377, %v1624
        %v1630 = vld [vmem:[%s3 + $0xc00] sm:$0xff]
        %v1631 = vld [vmem:[%s3 + $0xc08] sm:$0xff]
        %v1632 = vld [vmem:[%s3 + $0xc10] sm:$0xff]
        %v1633 = vld [vmem:[%s3 + $0xc18] sm:$0xff]
        %v1634 = vld [vmem:[%s3 + $0xc20] sm:$0xff]
        %v1635 = vld [vmem:[%s3 + $0xc28] sm:$0xff]
        %v1636 = vld [vmem:[%s3 + $0xc30] sm:$0xff]
        %v1637 = vld [vmem:[%s3 + $0xc38] sm:$0xff]
        %v1638 = vld [vmem:[%s3 + $0xc40] sm:$0xff]
        %v1639 = vld [vmem:[%s3 + $0xc48] sm:$0xff]
        %v1640 = vld [vmem:[%s3 + $0xc50] sm:$0xff]
        %v1641 = vld [vmem:[%s3 + $0xc58] sm:$0xff]
        %v1642 = vld [vmem:[%s3 + $0xc60] sm:$0xff]
        %v1643 = vld [vmem:[%s3 + $0xc68] sm:$0xff]
        %v1644 = vld [vmem:[%s3 + $0xc70] sm:$0xff]
        %v1645 = vld [vmem:[%s3 + $0xc78] sm:$0xff]
        %v1646 = vld [vmem:[%s3 + $0xc80] sm:$0xff]
        %v1647 = vld [vmem:[%s3 + $0xc88] sm:$0xff]
        %v1648 = vld [vmem:[%s3 + $0xc90] sm:$0xff]
        %v1649 = vld [vmem:[%s3 + $0xc98] sm:$0xff]
        %v1650 = vld [vmem:[%s3 + $0xca0] sm:$0xff]
        %v1651 = vld [vmem:[%s3 + $0xca8] sm:$0xff]
        %v1652 = vld [vmem:[%s3 + $0xcb0] sm:$0xff]
        %v1653 = vld [vmem:[%s3 + $0xcb8] sm:$0xff]
        %v1654 = vld [vmem:[%s3 + $0xcc0] sm:$0xff]
        %v1655 = vld [vmem:[%s3 + $0xcc8] sm:$0xff]
        %v1656 = vld [vmem:[%s3 + $0xcd0] sm:$0xff]
        %v1657 = vld [vmem:[%s3 + $0xcd8] sm:$0xff]
        %v1658 = vld [vmem:[%s3 + $0xce0] sm:$0xff]
        %v1659 = vld [vmem:[%s3 + $0xce8] sm:$0xff]
        %v1660 = vld [vmem:[%s3 + $0xcf0] sm:$0xff]
        %v1661 = vld [vmem:[%s3 + $0xcf8] sm:$0xff]
        %v1662 = vld [vmem:[%s3 + $0xd00] sm:$0xff]
        %v1663 = vld [vmem:[%s3 + $0xd08] sm:$0xff]
        %v1664 = vld [vmem:[%s3 + $0xd10] sm:$0xff]
        %v1665 = vld [vmem:[%s3 + $0xd18] sm:$0xff]
        %v1666 = vld [vmem:[%s3 + $0xd20] sm:$0xff]
        %v1667 = vld [vmem:[%s3 + $0xd28] sm:$0xff]
        %v1668 = vld [vmem:[%s3 + $0xd30] sm:$0xff]
        %v1669 = vld [vmem:[%s3 + $0xd38] sm:$0xff]
        %v1670 = vld [vmem:[%s3 + $0xd40] sm:$0xff]
        %v1671 = vld [vmem:[%s3 + $0xd48] sm:$0xff]
        %v1672 = vld [vmem:[%s3 + $0xd50] sm:$0xff]
        %v1673 = vld [vmem:[%s3 + $0xd58] sm:$0xff]
        %v1674 = vld [vmem:[%s3 + $0xd60] sm:$0xff]
        %v1675 = vld [vmem:[%s3 + $0xd68] sm:$0xff]
        %v1676 = vld [vmem:[%s3 + $0xd70] sm:$0xff]
        %v1677 = vld [vmem:[%s3 + $0xd78] sm:$0xff]
        %v1678 = vld [vmem:[%s3 + $0xd80] sm:$0xff]
        %v1679 = vld [vmem:[%s3 + $0xd88] sm:$0xff]
        %v1680 = vld [vmem:[%s3 + $0xd90] sm:$0xff]
        %v1681 = vld [vmem:[%s3 + $0xd98] sm:$0xff]
        %v1682 = vld [vmem:[%s3 + $0xda0] sm:$0xff]
        %v1683 = vld [vmem:[%s3 + $0xda8] sm:$0xff]
        %v1684 = vld [vmem:[%s3 + $0xdb0] sm:$0xff]
        %v1685 = vld [vmem:[%s3 + $0xdb8] sm:$0xff]
        %v1686 = vld [vmem:[%s3 + $0xdc0] sm:$0xff]
        %v1687 = vld [vmem:[%s3 + $0xdc8] sm:$0xff]
        %v1688 = vld [vmem:[%s3 + $0xdd0] sm:$0xff]
        %v1689 = vld [vmem:[%s3 + $0xdd8] sm:$0xff]
        %v1690 = vld [vmem:[%s3 + $0xde0] sm:$0xff]
        %v1691 = vld [vmem:[%s3 + $0xde8] sm:$0xff]
        %v1692 = vld [vmem:[%s3 + $0xdf0] sm:$0xff]
        %v1693 = vld [vmem:[%s3 + $0xdf8] sm:$0xff]
        %v1694 = vld [vmem:[%s3 + $0xe00] sm:$0xff]
        %v1695 = vld [vmem:[%s3 + $0xe08] sm:$0xff]
        %v1696 = vld [vmem:[%s3 + $0xe10] sm:$0xff]
        %v1697 = vld [vmem:[%s3 + $0xe18] sm:$0xff]
        %v1698 = vld [vmem:[%s3 + $0xe20] sm:$0xff]
        %v1699 = vld [vmem:[%s3 + $0xe28] sm:$0xff]
        %v1700 = vld [vmem:[%s3 + $0xe30] sm:$0xff]
        %v1701 = vld [vmem:[%s3 + $0xe38] sm:$0xff]
        %v1702 = vld [vmem:[%s3 + $0xe40] sm:$0xff]
        %v1703 = vld [vmem:[%s3 + $0xe48] sm:$0xff]
        %v1704 = vld [vmem:[%s3 + $0xe50] sm:$0xff]
        %v1705 = vld [vmem:[%s3 + $0xe58] sm:$0xff]
        %v1706 = vld [vmem:[%s3 + $0xe60] sm:$0xff]
        %v1707 = vld [vmem:[%s3 + $0xe68] sm:$0xff]
        %v1708 = vld [vmem:[%s3 + $0xe70] sm:$0xff]
        %v1709 = vld [vmem:[%s3 + $0xe78] sm:$0xff]
        %v1710 = vld [vmem:[%s3 + $0xe80] sm:$0xff]
        %v1711 = vld [vmem:[%s3 + $0xe88] sm:$0xff]
        %v1712 = vld [vmem:[%s3 + $0xe90] sm:$0xff]
        %v1713 = vld [vmem:[%s3 + $0xe98] sm:$0xff]
        %v1714 = vld [vmem:[%s3 + $0xea0] sm:$0xff]
        %v1715 = vld [vmem:[%s3 + $0xea8] sm:$0xff]
        %v1716 = vld [vmem:[%s3 + $0xeb0] sm:$0xff]
        %v1717 = vld [vmem:[%s3 + $0xeb8] sm:$0xff]
        %v1718 = vld [vmem:[%s3 + $0xec0] sm:$0xff]
        %v1719 = vld [vmem:[%s3 + $0xec8] sm:$0xff]
        %v1720 = vld [vmem:[%s3 + $0xed0] sm:$0xff]
        %v1721 = vld [vmem:[%s3 + $0xed8] sm:$0xff]
        %v1722 = vld [vmem:[%s3 + $0xee0] sm:$0xff]
        %v1723 = vld [vmem:[%s3 + $0xee8] sm:$0xff]
        %v1724 = vld [vmem:[%s3 + $0xef0] sm:$0xff]
        %v1725 = vld [vmem:[%s3 + $0xef8] sm:$0xff]
        %v1726 = vrot.slane %v630, 4
        %v1727 = vrot.slane %v632, 4
        %v1728 = vsel %vm383, %v1726, %v1727
        %v1729 = vrot.slane %v631, 4
        %v1730 = vrot.slane %v633, 4
        %v1731 = vsel %vm383, %v1729, %v1730
        %v1733 = vsel %vm595, %v1731, 0
        %1735 = vmatprep.subr.mxu0 %v1691
        %1736 = vmatpush1.msra.mxu0 %v1690
        %1737 = vmatprep.subr.mxu0 %v1687
        %1738 = vmatpush1.msra.mxu0 %v1686
        %1739 = vmatprep.subr.mxu0 %v1683
        %1740 = vmatpush1.msra.mxu0 %v1682
        %1741 = vmatprep.subr.mxu0 %v1679
        %1742 = vmatpush1.msra.mxu0 %v1678
        %1743 = vmatprep.subr.mxu0 %v1675
        %1744 = vmatpush1.msra.mxu0 %v1674
        %1745 = vmatprep.subr.mxu0 %v1671
        %1746 = vmatpush1.msra.mxu0 %v1670
        %1747 = vmatprep.subr.mxu0 %v1667
        %1748 = vmatpush1.msra.mxu0 %v1666
        %1749 = vmatprep.subr.mxu0 %v1663
        %1750 = vmatpush1.msra.mxu0 %v1662
        %1751 = vmatprep.subr.mxu0 %v1659
        %1752 = vmatpush1.msra.mxu0 %v1658
        %1753 = vmatprep.subr.mxu0 %v1655
        %1754 = vmatpush1.msra.mxu0 %v1654
        %1755 = vmatprep.subr.mxu0 %v1651
        %1756 = vmatpush1.msra.mxu0 %v1650
        %1757 = vmatprep.subr.mxu0 %v1647
        %1758 = vmatpush1.msra.mxu0 %v1646
        %1759 = vmatprep.subr.mxu0 %v1643
        %1760 = vmatpush1.msra.mxu0 %v1642
        %1761 = vmatprep.subr.mxu0 %v1639
        %1762 = vmatpush1.msra.mxu0 %v1638
        %1763 = vmatprep.subr.mxu0 %v1635
        %1764 = vmatpush1.msra.mxu0 %v1634
        %1765 = vmatprep.subr.mxu0 %v1631
        %1766 = vmatpush1.msra.mxu0 %v1630
        %1767 = vmatprep.subr.mxu0 0.0
        %1768 = vmatpush2.msra.mxu0 0.0
        %1769 = vmatprep.subr.mxu0 0.0
        %1770 = vmatpush2.msra.mxu0 0.0
        %1771 = vmatprep.subr.mxu0 0.0
        %1772 = vmatpush2.msra.mxu0 0.0
        %1773 = vmatprep.subr.mxu0 0.0
        %1774 = vmatpush2.msra.mxu0 0.0
        %1775 = vmatprep.subr.mxu0 0.0
        %1776 = vmatpush2.msra.mxu0 0.0
        %1777 = vmatprep.subr.mxu0 0.0
        %1778 = vmatpush2.msra.mxu0 0.0
        %1779 = vmatprep.subr.mxu0 0.0
        %1780 = vmatpush2.msra.mxu0 0.0
        %1781 = vmatprep.subr.mxu0 0.0
        %1782 = vmatpush2.msra.mxu0 0.0
        %1783 = vmatprep.subr.mxu0 %v1723
        %1784 = vmatpush2.msra.mxu0 %v1722
        %1785 = vmatprep.subr.mxu0 %v1719
        %1786 = vmatpush2.msra.mxu0 %v1718
        %1787 = vmatprep.subr.mxu0 %v1715
        %1788 = vmatpush2.msra.mxu0 %v1714
        %1789 = vmatprep.subr.mxu0 %v1711
        %1790 = vmatpush2.msra.mxu0 %v1710
        %1791 = vmatprep.subr.mxu0 %v1707
        %1792 = vmatpush2.msra.mxu0 %v1706
        %1793 = vmatprep.subr.mxu0 %v1703
        %1794 = vmatpush2.msra.mxu0 %v1702
        %1795 = vmatprep.subr.mxu0 %v1699
        %1796 = vmatpush2.msra.mxu0 %v1698
        %1797 = vmatprep.subr.mxu0 %v1695
        %1798 = vmatpush2.msra.mxu0 %v1694
        %1799 = vmatprep.mubr.f32.mxu0 %v1733
        %1800 = vmatmul.mubr.f32.gmra.mxu0 %v1728
        %v1801 = vpop.f32.mrf.mxu0
        %v1802 = vadd.f32 0.0, %v1801
        %v1803 = vpop.f32.mrf.mxu0
        %v1804 = vadd.f32 0.0, %v1803
        %1805 = vdwg.mxu0
        %1806 = vmatprep.subr.mxu0 %v1693
        %1807 = vmatpush1.msra.mxu0 %v1692
        %1808 = vmatprep.subr.mxu0 %v1689
        %1809 = vmatpush1.msra.mxu0 %v1688
        %1810 = vmatprep.subr.mxu0 %v1685
        %1811 = vmatpush1.msra.mxu0 %v1684
        %1812 = vmatprep.subr.mxu0 %v1681
        %1813 = vmatpush1.msra.mxu0 %v1680
        %1814 = vmatprep.subr.mxu0 %v1677
        %1815 = vmatpush1.msra.mxu0 %v1676
        %1816 = vmatprep.subr.mxu0 %v1673
        %1817 = vmatpush1.msra.mxu0 %v1672
        %1818 = vmatprep.subr.mxu0 %v1669
        %1819 = vmatpush1.msra.mxu0 %v1668
        %1820 = vmatprep.subr.mxu0 %v1665
        %1821 = vmatpush1.msra.mxu0 %v1664
        %1822 = vmatprep.subr.mxu0 %v1661
        %1823 = vmatpush1.msra.mxu0 %v1660
        %1824 = vmatprep.subr.mxu0 %v1657
        %1825 = vmatpush1.msra.mxu0 %v1656
        %1826 = vmatprep.subr.mxu0 %v1653
        %1827 = vmatpush1.msra.mxu0 %v1652
        %1828 = vmatprep.subr.mxu0 %v1649
        %1829 = vmatpush1.msra.mxu0 %v1648
        %1830 = vmatprep.subr.mxu0 %v1645
        %1831 = vmatpush1.msra.mxu0 %v1644
        %1832 = vmatprep.subr.mxu0 %v1641
        %1833 = vmatpush1.msra.mxu0 %v1640
        %1834 = vmatprep.subr.mxu0 %v1637
        %1835 = vmatpush1.msra.mxu0 %v1636
        %1836 = vmatprep.subr.mxu0 %v1633
        %1837 = vmatpush1.msra.mxu0 %v1632
        %1838 = vmatprep.subr.mxu0 0.0
        %1839 = vmatpush2.msra.mxu0 0.0
        %1840 = vmatprep.subr.mxu0 0.0
        %1841 = vmatpush2.msra.mxu0 0.0
        %1842 = vmatprep.subr.mxu0 0.0
        %1843 = vmatpush2.msra.mxu0 0.0
        %1844 = vmatprep.subr.mxu0 0.0
        %1845 = vmatpush2.msra.mxu0 0.0
        %1846 = vmatprep.subr.mxu0 0.0
        %1847 = vmatpush2.msra.mxu0 0.0
        %1848 = vmatprep.subr.mxu0 0.0
        %1849 = vmatpush2.msra.mxu0 0.0
        %1850 = vmatprep.subr.mxu0 0.0
        %1851 = vmatpush2.msra.mxu0 0.0
        %1852 = vmatprep.subr.mxu0 0.0
        %1853 = vmatpush2.msra.mxu0 0.0
        %1854 = vmatprep.subr.mxu0 %v1725
        %1855 = vmatpush2.msra.mxu0 %v1724
        %1856 = vmatprep.subr.mxu0 %v1721
        %1857 = vmatpush2.msra.mxu0 %v1720
        %1858 = vmatprep.subr.mxu0 %v1717
        %1859 = vmatpush2.msra.mxu0 %v1716
        %1860 = vmatprep.subr.mxu0 %v1713
        %1861 = vmatpush2.msra.mxu0 %v1712
        %1862 = vmatprep.subr.mxu0 %v1709
        %1863 = vmatpush2.msra.mxu0 %v1708
        %1864 = vmatprep.subr.mxu0 %v1705
        %1865 = vmatpush2.msra.mxu0 %v1704
        %1866 = vmatprep.subr.mxu0 %v1701
        %1867 = vmatpush2.msra.mxu0 %v1700
        %1868 = vmatprep.subr.mxu0 %v1697
        %1869 = vmatpush2.msra.mxu0 %v1696
        %1870 = vmatprep.mubr.f32.mxu0 %v1733
        %1871 = vmatmul.mubr.f32.gmra.mxu0 %v1728
        %v1872 = vpop.f32.mrf.mxu0
        %v1873 = vadd.f32 0.0, %v1872
        %v1874 = vpop.f32.mrf.mxu0
        %v1875 = vadd.f32 0.0, %v1874
        %1876 = vdwg.mxu0
        %v1877 = vadd.f32 %v1626, %v1802
        %v1878 = vadd.f32 %v1627, %v1804
        %v1879 = vadd.f32 %v1628, %v1873
        %v1880 = vadd.f32 %v1629, %v1875
        %v1881 = vld [vmem:[%s4] sm:$0xf]
        %v1883 = vlaneseq
        %v1884 = vshrl.u32 %v1883, 7
        %v1885 = vsub.s32 0, %v1884
        %v1886 = vrot.slane %v1881, %v1885
        %v1887 = vlaneseq
        %v1888 = vshrl.u32 %v1887, 7
        %v1889 = vsub.s32 1, %v1888
        %v1890 = vrot.slane %v1881, %v1889
        %v1891 = vlaneseq
        %v1892 = vshrl.u32 %v1891, 7
        %v1893 = vsub.s32 2, %v1892
        %v1894 = vrot.slane %v1881, %v1893
        %v1895 = vlaneseq
        %v1896 = vshrl.u32 %v1895, 7
        %v1897 = vsub.s32 3, %v1896
        %v1898 = vrot.slane %v1881, %v1897
        %v1903 = vadd.f32 %v1877, %v1886
        %v1904 = vadd.f32 %v1878, %v1890
        %v1905 = vadd.f32 %v1879, %v1894
        %v1906 = vadd.f32 %v1880, %v1898
        %v1911 = vrot.slane %v1903, 1
        %v1912 = vrot.slane %v1904, 1
        %v1913 = vrot.slane %v1905, 1
        %v1914 = vrot.slane %v1906, 1
        %v1919 = vmax.f32 %v1903, %v1911
        %v1920 = vmax.f32 %v1904, %v1912
        %v1921 = vmax.f32 %v1905, %v1913
        %v1922 = vmax.f32 %v1906, %v1914
        %1927 = vrot.lane.b32.xlu0 %v1919, 64
        %v1928 = vpop.permute.xlu0 %1927
        %1929 = vrot.lane.b32.xlu0 %v1920, 64
        %v1930 = vpop.permute.xlu0 %1929
        %1931 = vrot.lane.b32.xlu0 %v1921, 64
        %v1932 = vpop.permute.xlu0 %1931
        %1933 = vrot.lane.b32.xlu0 %v1922, 64
        %v1934 = vpop.permute.xlu0 %1933
        %v1935 = vsel %vm595, %v1928, %v1930
        %v1936 = vsel %vm595, %v1930, %v1932
        %v1937 = vsel %vm595, %v1932, %v1934
        %v1942 = vmax.f32 %v1919, %v1935
        %v1943 = vmax.f32 %v1920, %v1936
        %v1944 = vmax.f32 %v1921, %v1937
        %v1945 = vmax.f32 %v1922, %v1934
        %vm1946 = vcmp.gt.f32.partialorder %v1942, 1.0
        %vm1947 = vcmp.gt.f32.partialorder %v1943, 1.0
        %vm1948 = vcmp.gt.f32.partialorder %v1944, 1.0
        %vm1949 = vcmp.gt.f32.partialorder %v1945, 1.0
        %v1950 = vsel %vm1946, 1, 0
        %v1951 = vsel %vm1947, 1, 0
        %v1952 = vsel %vm1948, 1, 0
        %v1953 = vsel %vm1949, 1, 0
        %v1954 = vcvt.s32.f32 %v1950
        %v1955 = vcvt.s32.f32 %v1951
        %v1956 = vcvt.s32.f32 %v1952
        %v1957 = vcvt.s32.f32 %v1953
        %v1958 = vld [vmem:[%s6] sm:$0x1]
        %v1959 = vld [vmem:[%s5] sm:$0xff]
        %v1960 = vld [vmem:[%s5 + $0x8] sm:$0xff]
        %v1961 = vld [vmem:[%s5 + $0x10] sm:$0xff]
        %v1962 = vld [vmem:[%s5 + $0x18] sm:$0xff]
        %v1963 = vld [vmem:[%s5 + $0x20] sm:$0xff]
        %v1964 = vld [vmem:[%s5 + $0x28] sm:$0xff]
        %v1965 = vld [vmem:[%s5 + $0x30] sm:$0xff]
        %v1966 = vld [vmem:[%s5 + $0x38] sm:$0xff]
        %v1967 = vld [vmem:[%s5 + $0x40] sm:$0xff]
        %v1968 = vld [vmem:[%s5 + $0x48] sm:$0xff]
        %v1969 = vld [vmem:[%s5 + $0x50] sm:$0xff]
        %v1970 = vld [vmem:[%s5 + $0x58] sm:$0xff]
        %v1971 = vld [vmem:[%s5 + $0x60] sm:$0xff]
        %v1972 = vld [vmem:[%s5 + $0x68] sm:$0xff]
        %v1973 = vld [vmem:[%s5 + $0x70] sm:$0xff]
        %v1974 = vld [vmem:[%s5 + $0x78] sm:$0xff]
        %v1975 = vld [vmem:[%s5 + $0x80] sm:$0xff]
        %v1976 = vld [vmem:[%s5 + $0x88] sm:$0xff]
        %v1977 = vld [vmem:[%s5 + $0x90] sm:$0xff]
        %v1978 = vld [vmem:[%s5 + $0x98] sm:$0xff]
        %v1979 = vld [vmem:[%s5 + $0xa0] sm:$0xff]
        %v1980 = vld [vmem:[%s5 + $0xa8] sm:$0xff]
        %v1981 = vld [vmem:[%s5 + $0xb0] sm:$0xff]
        %v1982 = vld [vmem:[%s5 + $0xb8] sm:$0xff]
        %v1983 = vld [vmem:[%s5 + $0xc0] sm:$0xff]
        %v1984 = vld [vmem:[%s5 + $0xc8] sm:$0xff]
        %v1985 = vld [vmem:[%s5 + $0xd0] sm:$0xff]
        %v1986 = vld [vmem:[%s5 + $0xd8] sm:$0xff]
        %v1987 = vld [vmem:[%s5 + $0xe0] sm:$0xff]
        %v1988 = vld [vmem:[%s5 + $0xe8] sm:$0xff]
        %v1989 = vld [vmem:[%s5 + $0xf0] sm:$0xff]
        %v1990 = vld [vmem:[%s5 + $0xf8] sm:$0xff]
        %v1991 = vld [vmem:[%s5 + $0x100] sm:$0xff]
        %v1992 = vld [vmem:[%s5 + $0x108] sm:$0xff]
        %v1993 = vld [vmem:[%s5 + $0x110] sm:$0xff]
        %v1994 = vld [vmem:[%s5 + $0x118] sm:$0xff]
        %v1995 = vld [vmem:[%s5 + $0x120] sm:$0xff]
        %v1996 = vld [vmem:[%s5 + $0x128] sm:$0xff]
        %v1997 = vld [vmem:[%s5 + $0x130] sm:$0xff]
        %v1998 = vld [vmem:[%s5 + $0x138] sm:$0xff]
        %v1999 = vld [vmem:[%s5 + $0x140] sm:$0xff]
        %v2000 = vld [vmem:[%s5 + $0x148] sm:$0xff]
        %v2001 = vld [vmem:[%s5 + $0x150] sm:$0xff]
        %v2002 = vld [vmem:[%s5 + $0x158] sm:$0xff]
        %v2003 = vld [vmem:[%s5 + $0x160] sm:$0xff]
        %v2004 = vld [vmem:[%s5 + $0x168] sm:$0xff]
        %v2005 = vld [vmem:[%s5 + $0x170] sm:$0xff]
        %v2006 = vld [vmem:[%s5 + $0x178] sm:$0xff]
        %v2007 = vld [vmem:[%s5 + $0x180] sm:$0xff]
        %v2008 = vld [vmem:[%s5 + $0x188] sm:$0xff]
        %v2009 = vld [vmem:[%s5 + $0x190] sm:$0xff]
        %v2010 = vld [vmem:[%s5 + $0x198] sm:$0xff]
        %v2011 = vld [vmem:[%s5 + $0x1a0] sm:$0xff]
        %v2012 = vld [vmem:[%s5 + $0x1a8] sm:$0xff]
        %v2013 = vld [vmem:[%s5 + $0x1b0] sm:$0xff]
        %v2014 = vld [vmem:[%s5 + $0x1b8] sm:$0xff]
        %v2016 = vsel %vm595, %v1957, 0
        %2018 = vmatprep.subr.mxu0 0.0
        %2019 = vmatpush1.msra.mxu0 %v1974
        %2020 = vmatprep.subr.mxu0 0.0
        %2021 = vmatpush1.msra.mxu0 %v1973
        %2022 = vmatprep.subr.mxu0 0.0
        %2023 = vmatpush1.msra.mxu0 %v1972
        %2024 = vmatprep.subr.mxu0 0.0
        %2025 = vmatpush1.msra.mxu0 %v1971
        %2026 = vmatprep.subr.mxu0 0.0
        %2027 = vmatpush1.msra.mxu0 %v1970
        %2028 = vmatprep.subr.mxu0 0.0
        %2029 = vmatpush1.msra.mxu0 %v1969
        %2030 = vmatprep.subr.mxu0 0.0
        %2031 = vmatpush1.msra.mxu0 %v1968
        %2032 = vmatprep.subr.mxu0 0.0
        %2033 = vmatpush1.msra.mxu0 %v1967
        %2034 = vmatprep.subr.mxu0 0.0
        %2035 = vmatpush1.msra.mxu0 %v1966
        %2036 = vmatprep.subr.mxu0 0.0
        %2037 = vmatpush1.msra.mxu0 %v1965
        %2038 = vmatprep.subr.mxu0 0.0
        %2039 = vmatpush1.msra.mxu0 %v1964
        %2040 = vmatprep.subr.mxu0 0.0
        %2041 = vmatpush1.msra.mxu0 %v1963
        %2042 = vmatprep.subr.mxu0 0.0
        %2043 = vmatpush1.msra.mxu0 %v1962
        %2044 = vmatprep.subr.mxu0 0.0
        %2045 = vmatpush1.msra.mxu0 %v1961
        %2046 = vmatprep.subr.mxu0 0.0
        %2047 = vmatpush1.msra.mxu0 %v1960
        %2048 = vmatprep.subr.mxu0 0.0
        %2049 = vmatpush1.msra.mxu0 %v1959
        %2050 = vmatprep.subr.mxu0 0.0
        %2051 = vmatpush2.msra.mxu0 %v1990
        %2052 = vmatprep.subr.mxu0 0.0
        %2053 = vmatpush2.msra.mxu0 %v1989
        %2054 = vmatprep.subr.mxu0 0.0
        %2055 = vmatpush2.msra.mxu0 %v1988
        %2056 = vmatprep.subr.mxu0 0.0
        %2057 = vmatpush2.msra.mxu0 %v1987
        %2058 = vmatprep.subr.mxu0 0.0
        %2059 = vmatpush2.msra.mxu0 %v1986
        %2060 = vmatprep.subr.mxu0 0.0
        %2061 = vmatpush2.msra.mxu0 %v1985
        %2062 = vmatprep.subr.mxu0 0.0
        %2063 = vmatpush2.msra.mxu0 %v1984
        %2064 = vmatprep.subr.mxu0 0.0
        %2065 = vmatpush2.msra.mxu0 %v1983
        %2066 = vmatprep.subr.mxu0 0.0
        %2067 = vmatpush2.msra.mxu0 %v1982
        %2068 = vmatprep.subr.mxu0 0.0
        %2069 = vmatpush2.msra.mxu0 %v1981
        %2070 = vmatprep.subr.mxu0 0.0
        %2071 = vmatpush2.msra.mxu0 %v1980
        %2072 = vmatprep.subr.mxu0 0.0
        %2073 = vmatpush2.msra.mxu0 %v1979
        %2074 = vmatprep.subr.mxu0 0.0
        %2075 = vmatpush2.msra.mxu0 %v1978
        %2076 = vmatprep.subr.mxu0 0.0
        %2077 = vmatpush2.msra.mxu0 %v1977
        %2078 = vmatprep.subr.mxu0 0.0
        %2079 = vmatpush2.msra.mxu0 %v1976
        %2080 = vmatprep.subr.mxu0 0.0
        %2081 = vmatpush2.msra.mxu0 %v1975
        %2082 = vmatprep.mubr.f32.mxu0 %v1955
        %2083 = vmatmul.mubr.f32.gmra.mxu0 %v1954
        %v2084 = vpop.f32.mrf.mxu0
        %v2085 = vadd.f32 0.0, %v2084
        %v2086 = vpop.f32.mrf.mxu0
        %2087 = vdwg.mxu0
        %2088 = vmatprep.subr.mxu0 0.0
        %2089 = vmatpush1.msra.mxu0 %v2006
        %2090 = vmatprep.subr.mxu0 0.0
        %2091 = vmatpush1.msra.mxu0 %v2005
        %2092 = vmatprep.subr.mxu0 0.0
        %2093 = vmatpush1.msra.mxu0 %v2004
        %2094 = vmatprep.subr.mxu0 0.0
        %2095 = vmatpush1.msra.mxu0 %v2003
        %2096 = vmatprep.subr.mxu0 0.0
        %2097 = vmatpush1.msra.mxu0 %v2002
        %2098 = vmatprep.subr.mxu0 0.0
        %2099 = vmatpush1.msra.mxu0 %v2001
        %2100 = vmatprep.subr.mxu0 0.0
        %2101 = vmatpush1.msra.mxu0 %v2000
        %2102 = vmatprep.subr.mxu0 0.0
        %2103 = vmatpush1.msra.mxu0 %v1999
        %2104 = vmatprep.subr.mxu0 0.0
        %2105 = vmatpush1.msra.mxu0 %v1998
        %2106 = vmatprep.subr.mxu0 0.0
        %2107 = vmatpush1.msra.mxu0 %v1997
        %2108 = vmatprep.subr.mxu0 0.0
        %2109 = vmatpush1.msra.mxu0 %v1996
        %2110 = vmatprep.subr.mxu0 0.0
        %2111 = vmatpush1.msra.mxu0 %v1995
        %2112 = vmatprep.subr.mxu0 0.0
        %2113 = vmatpush1.msra.mxu0 %v1994
        %2114 = vmatprep.subr.mxu0 0.0
        %2115 = vmatpush1.msra.mxu0 %v1993
        %2116 = vmatprep.subr.mxu0 0.0
        %2117 = vmatpush1.msra.mxu0 %v1992
        %2118 = vmatprep.subr.mxu0 0.0
        %2119 = vmatpush1.msra.mxu0 %v1991
        %2120 = vmatprep.subr.mxu0 0.0
        %2121 = vmatpush2.msra.mxu0 0.0
        %2122 = vmatprep.subr.mxu0 0.0
        %2123 = vmatpush2.msra.mxu0 0.0
        %2124 = vmatprep.subr.mxu0 0.0
        %2125 = vmatpush2.msra.mxu0 0.0
        %2126 = vmatprep.subr.mxu0 0.0
        %2127 = vmatpush2.msra.mxu0 0.0
        %2128 = vmatprep.subr.mxu0 0.0
        %2129 = vmatpush2.msra.mxu0 0.0
        %2130 = vmatprep.subr.mxu0 0.0
        %2131 = vmatpush2.msra.mxu0 0.0
        %2132 = vmatprep.subr.mxu0 0.0
        %2133 = vmatpush2.msra.mxu0 0.0
        %2134 = vmatprep.subr.mxu0 0.0
        %2135 = vmatpush2.msra.mxu0 0.0
        %2136 = vmatprep.subr.mxu0 0.0
        %2137 = vmatpush2.msra.mxu0 %v2014
        %2138 = vmatprep.subr.mxu0 0.0
        %2139 = vmatpush2.msra.mxu0 %v2013
        %2140 = vmatprep.subr.mxu0 0.0
        %2141 = vmatpush2.msra.mxu0 %v2012
        %2142 = vmatprep.subr.mxu0 0.0
        %2143 = vmatpush2.msra.mxu0 %v2011
        %2144 = vmatprep.subr.mxu0 0.0
        %2145 = vmatpush2.msra.mxu0 %v2010
        %2146 = vmatprep.subr.mxu0 0.0
        %2147 = vmatpush2.msra.mxu0 %v2009
        %2148 = vmatprep.subr.mxu0 0.0
        %2149 = vmatpush2.msra.mxu0 %v2008
        %2150 = vmatprep.subr.mxu0 0.0
        %2151 = vmatpush2.msra.mxu0 %v2007
        %2152 = vmatprep.mubr.f32.mxu0 %v2016
        %2153 = vmatmul.mubr.f32.gmra.mxu0 %v1956
        %v2154 = vpop.f32.mrf.mxu0
        %v2155 = vadd.f32 %v2085, %v2154
        %v2156 = vpop.f32.mrf.mxu0
        %2157 = vdwg.mxu0
        %v2158 = vadd.f32 %v1958, %v2155
        %v2159 = vld [vmem:[%s5 + $0x1c0] sm:$0xff]
        %v2160 = vld [vmem:[%s5 + $0x1c8] sm:$0xff]
        %v2161 = vld [vmem:[%s5 + $0x1d0] sm:$0xff]
        %v2162 = vld [vmem:[%s5 + $0x1d8] sm:$0xff]
        %v2163 = vld [vmem:[%s5 + $0x1e0] sm:$0xff]
        %v2164 = vld [vmem:[%s5 + $0x1e8] sm:$0xff]
        %v2165 = vld [vmem:[%s5 + $0x1f0] sm:$0xff]
        %v2166 = vld [vmem:[%s5 + $0x1f8] sm:$0xff]
        %v2167 = vld [vmem:[%s5 + $0x200] sm:$0xff]
        %v2168 = vld [vmem:[%s5 + $0x208] sm:$0xff]
        %v2169 = vld [vmem:[%s5 + $0x210] sm:$0xff]
        %v2170 = vld [vmem:[%s5 + $0x218] sm:$0xff]
        %v2171 = vld [vmem:[%s5 + $0x220] sm:$0xff]
        %v2172 = vld [vmem:[%s5 + $0x228] sm:$0xff]
        %v2173 = vld [vmem:[%s5 + $0x230] sm:$0xff]
        %v2174 = vld [vmem:[%s5 + $0x238] sm:$0xff]
        %v2175 = vld [vmem:[%s5 + $0x240] sm:$0xff]
        %v2176 = vld [vmem:[%s5 + $0x248] sm:$0xff]
        %v2177 = vld [vmem:[%s5 + $0x250] sm:$0xff]
        %v2178 = vld [vmem:[%s5 + $0x258] sm:$0xff]
        %v2179 = vld [vmem:[%s5 + $0x260] sm:$0xff]
        %v2180 = vld [vmem:[%s5 + $0x268] sm:$0xff]
        %v2181 = vld [vmem:[%s5 + $0x270] sm:$0xff]
        %v2182 = vld [vmem:[%s5 + $0x278] sm:$0xff]
        %v2183 = vld [vmem:[%s5 + $0x280] sm:$0xff]
        %v2184 = vld [vmem:[%s5 + $0x288] sm:$0xff]
        %v2185 = vld [vmem:[%s5 + $0x290] sm:$0xff]
        %v2186 = vld [vmem:[%s5 + $0x298] sm:$0xff]
        %v2187 = vld [vmem:[%s5 + $0x2a0] sm:$0xff]
        %v2188 = vld [vmem:[%s5 + $0x2a8] sm:$0xff]
        %v2189 = vld [vmem:[%s5 + $0x2b0] sm:$0xff]
        %v2190 = vld [vmem:[%s5 + $0x2b8] sm:$0xff]
        %v2191 = vld [vmem:[%s5 + $0x2c0] sm:$0xff]
        %v2192 = vld [vmem:[%s5 + $0x2c8] sm:$0xff]
        %v2193 = vld [vmem:[%s5 + $0x2d0] sm:$0xff]
        %v2194 = vld [vmem:[%s5 + $0x2d8] sm:$0xff]
        %v2195 = vld [vmem:[%s5 + $0x2e0] sm:$0xff]
        %v2196 = vld [vmem:[%s5 + $0x2e8] sm:$0xff]
        %v2197 = vld [vmem:[%s5 + $0x2f0] sm:$0xff]
        %v2198 = vld [vmem:[%s5 + $0x2f8] sm:$0xff]
        %v2199 = vld [vmem:[%s5 + $0x300] sm:$0xff]
        %v2200 = vld [vmem:[%s5 + $0x308] sm:$0xff]
        %v2201 = vld [vmem:[%s5 + $0x310] sm:$0xff]
        %v2202 = vld [vmem:[%s5 + $0x318] sm:$0xff]
        %v2203 = vld [vmem:[%s5 + $0x320] sm:$0xff]
        %v2204 = vld [vmem:[%s5 + $0x328] sm:$0xff]
        %v2205 = vld [vmem:[%s5 + $0x330] sm:$0xff]
        %v2206 = vld [vmem:[%s5 + $0x338] sm:$0xff]
        %v2207 = vld [vmem:[%s5 + $0x340] sm:$0xff]
        %v2208 = vld [vmem:[%s5 + $0x348] sm:$0xff]
        %v2209 = vld [vmem:[%s5 + $0x350] sm:$0xff]
        %v2210 = vld [vmem:[%s5 + $0x358] sm:$0xff]
        %v2211 = vld [vmem:[%s5 + $0x360] sm:$0xff]
        %v2212 = vld [vmem:[%s5 + $0x368] sm:$0xff]
        %v2213 = vld [vmem:[%s5 + $0x370] sm:$0xff]
        %v2214 = vld [vmem:[%s5 + $0x378] sm:$0xff]
        %v2218 = vrot.slane %v1954, 2
        %v2219 = vrot.slane %v1955, 2
        %v2220 = vrot.slane %v1956, 2
        %v2221 = vrot.slane %v1957, 2
        %v2225 = vsel %vm595, %v2221, 0
        %2227 = vmatprep.subr.mxu0 0.0
        %2228 = vmatpush1.msra.mxu0 %v2174
        %2229 = vmatprep.subr.mxu0 0.0
        %2230 = vmatpush1.msra.mxu0 %v2173
        %2231 = vmatprep.subr.mxu0 0.0
        %2232 = vmatpush1.msra.mxu0 %v2172
        %2233 = vmatprep.subr.mxu0 0.0
        %2234 = vmatpush1.msra.mxu0 %v2171
        %2235 = vmatprep.subr.mxu0 0.0
        %2236 = vmatpush1.msra.mxu0 %v2170
        %2237 = vmatprep.subr.mxu0 0.0
        %2238 = vmatpush1.msra.mxu0 %v2169
        %2239 = vmatprep.subr.mxu0 0.0
        %2240 = vmatpush1.msra.mxu0 %v2168
        %2241 = vmatprep.subr.mxu0 0.0
        %2242 = vmatpush1.msra.mxu0 %v2167
        %2243 = vmatprep.subr.mxu0 0.0
        %2244 = vmatpush1.msra.mxu0 %v2166
        %2245 = vmatprep.subr.mxu0 0.0
        %2246 = vmatpush1.msra.mxu0 %v2165
        %2247 = vmatprep.subr.mxu0 0.0
        %2248 = vmatpush1.msra.mxu0 %v2164
        %2249 = vmatprep.subr.mxu0 0.0
        %2250 = vmatpush1.msra.mxu0 %v2163
        %2251 = vmatprep.subr.mxu0 0.0
        %2252 = vmatpush1.msra.mxu0 %v2162
        %2253 = vmatprep.subr.mxu0 0.0
        %2254 = vmatpush1.msra.mxu0 %v2161
        %2255 = vmatprep.subr.mxu0 0.0
        %2256 = vmatpush1.msra.mxu0 %v2160
        %2257 = vmatprep.subr.mxu0 0.0
        %2258 = vmatpush1.msra.mxu0 %v2159
        %2259 = vmatprep.subr.mxu0 0.0
        %2260 = vmatpush2.msra.mxu0 %v2190
        %2261 = vmatprep.subr.mxu0 0.0
        %2262 = vmatpush2.msra.mxu0 %v2189
        %2263 = vmatprep.subr.mxu0 0.0
        %2264 = vmatpush2.msra.mxu0 %v2188
        %2265 = vmatprep.subr.mxu0 0.0
        %2266 = vmatpush2.msra.mxu0 %v2187
        %2267 = vmatprep.subr.mxu0 0.0
        %2268 = vmatpush2.msra.mxu0 %v2186
        %2269 = vmatprep.subr.mxu0 0.0
        %2270 = vmatpush2.msra.mxu0 %v2185
        %2271 = vmatprep.subr.mxu0 0.0
        %2272 = vmatpush2.msra.mxu0 %v2184
        %2273 = vmatprep.subr.mxu0 0.0
        %2274 = vmatpush2.msra.mxu0 %v2183
        %2275 = vmatprep.subr.mxu0 0.0
        %2276 = vmatpush2.msra.mxu0 %v2182
        %2277 = vmatprep.subr.mxu0 0.0
        %2278 = vmatpush2.msra.mxu0 %v2181
        %2279 = vmatprep.subr.mxu0 0.0
        %2280 = vmatpush2.msra.mxu0 %v2180
        %2281 = vmatprep.subr.mxu0 0.0
        %2282 = vmatpush2.msra.mxu0 %v2179
        %2283 = vmatprep.subr.mxu0 0.0
        %2284 = vmatpush2.msra.mxu0 %v2178
        %2285 = vmatprep.subr.mxu0 0.0
        %2286 = vmatpush2.msra.mxu0 %v2177
        %2287 = vmatprep.subr.mxu0 0.0
        %2288 = vmatpush2.msra.mxu0 %v2176
        %2289 = vmatprep.subr.mxu0 0.0
        %2290 = vmatpush2.msra.mxu0 %v2175
        %2291 = vmatprep.mubr.f32.mxu0 %v2219
        %2292 = vmatmul.mubr.f32.gmra.mxu0 %v2218
        %v2293 = vpop.f32.mrf.mxu0
        %v2294 = vadd.f32 0.0, %v2293
        %v2295 = vpop.f32.mrf.mxu0
        %2296 = vdwg.mxu0
        %2297 = vmatprep.subr.mxu0 0.0
        %2298 = vmatpush1.msra.mxu0 %v2206
        %2299 = vmatprep.subr.mxu0 0.0
        %2300 = vmatpush1.msra.mxu0 %v2205
        %2301 = vmatprep.subr.mxu0 0.0
        %2302 = vmatpush1.msra.mxu0 %v2204
        %2303 = vmatprep.subr.mxu0 0.0
        %2304 = vmatpush1.msra.mxu0 %v2203
        %2305 = vmatprep.subr.mxu0 0.0
        %2306 = vmatpush1.msra.mxu0 %v2202
        %2307 = vmatprep.subr.mxu0 0.0
        %2308 = vmatpush1.msra.mxu0 %v2201
        %2309 = vmatprep.subr.mxu0 0.0
        %2310 = vmatpush1.msra.mxu0 %v2200
        %2311 = vmatprep.subr.mxu0 0.0
        %2312 = vmatpush1.msra.mxu0 %v2199
        %2313 = vmatprep.subr.mxu0 0.0
        %2314 = vmatpush1.msra.mxu0 %v2198
        %2315 = vmatprep.subr.mxu0 0.0
        %2316 = vmatpush1.msra.mxu0 %v2197
        %2317 = vmatprep.subr.mxu0 0.0
        %2318 = vmatpush1.msra.mxu0 %v2196
        %2319 = vmatprep.subr.mxu0 0.0
        %2320 = vmatpush1.msra.mxu0 %v2195
        %2321 = vmatprep.subr.mxu0 0.0
        %2322 = vmatpush1.msra.mxu0 %v2194
        %2323 = vmatprep.subr.mxu0 0.0
        %2324 = vmatpush1.msra.mxu0 %v2193
        %2325 = vmatprep.subr.mxu0 0.0
        %2326 = vmatpush1.msra.mxu0 %v2192
        %2327 = vmatprep.subr.mxu0 0.0
        %2328 = vmatpush1.msra.mxu0 %v2191
        %2329 = vmatprep.subr.mxu0 0.0
        %2330 = vmatpush2.msra.mxu0 0.0
        %2331 = vmatprep.subr.mxu0 0.0
        %2332 = vmatpush2.msra.mxu0 0.0
        %2333 = vmatprep.subr.mxu0 0.0
        %2334 = vmatpush2.msra.mxu0 0.0
        %2335 = vmatprep.subr.mxu0 0.0
        %2336 = vmatpush2.msra.mxu0 0.0
        %2337 = vmatprep.subr.mxu0 0.0
        %2338 = vmatpush2.msra.mxu0 0.0
        %2339 = vmatprep.subr.mxu0 0.0
        %2340 = vmatpush2.msra.mxu0 0.0
        %2341 = vmatprep.subr.mxu0 0.0
        %2342 = vmatpush2.msra.mxu0 0.0
        %2343 = vmatprep.subr.mxu0 0.0
        %2344 = vmatpush2.msra.mxu0 0.0
        %2345 = vmatprep.subr.mxu0 0.0
        %2346 = vmatpush2.msra.mxu0 %v2214
        %2347 = vmatprep.subr.mxu0 0.0
        %2348 = vmatpush2.msra.mxu0 %v2213
        %2349 = vmatprep.subr.mxu0 0.0
        %2350 = vmatpush2.msra.mxu0 %v2212
        %2351 = vmatprep.subr.mxu0 0.0
        %2352 = vmatpush2.msra.mxu0 %v2211
        %2353 = vmatprep.subr.mxu0 0.0
        %2354 = vmatpush2.msra.mxu0 %v2210
        %2355 = vmatprep.subr.mxu0 0.0
        %2356 = vmatpush2.msra.mxu0 %v2209
        %2357 = vmatprep.subr.mxu0 0.0
        %2358 = vmatpush2.msra.mxu0 %v2208
        %2359 = vmatprep.subr.mxu0 0.0
        %2360 = vmatpush2.msra.mxu0 %v2207
        %2361 = vmatprep.mubr.f32.mxu0 %v2225
        %2362 = vmatmul.mubr.f32.gmra.mxu0 %v2220
        %v2363 = vpop.f32.mrf.mxu0
        %v2364 = vadd.f32 %v2294, %v2363
        %v2365 = vpop.f32.mrf.mxu0
        %2366 = vdwg.mxu0
        %v2367 = vadd.f32 %v2158, %v2364
        %v2368 = vld [vmem:[%s5 + $0x380] sm:$0xff]
        %v2369 = vld [vmem:[%s5 + $0x388] sm:$0xff]
        %v2370 = vld [vmem:[%s5 + $0x390] sm:$0xff]
        %v2371 = vld [vmem:[%s5 + $0x398] sm:$0xff]
        %v2372 = vld [vmem:[%s5 + $0x3a0] sm:$0xff]
        %v2373 = vld [vmem:[%s5 + $0x3a8] sm:$0xff]
        %v2374 = vld [vmem:[%s5 + $0x3b0] sm:$0xff]
        %v2375 = vld [vmem:[%s5 + $0x3b8] sm:$0xff]
        %v2376 = vld [vmem:[%s5 + $0x3c0] sm:$0xff]
        %v2377 = vld [vmem:[%s5 + $0x3c8] sm:$0xff]
        %v2378 = vld [vmem:[%s5 + $0x3d0] sm:$0xff]
        %v2379 = vld [vmem:[%s5 + $0x3d8] sm:$0xff]
        %v2380 = vld [vmem:[%s5 + $0x3e0] sm:$0xff]
        %v2381 = vld [vmem:[%s5 + $0x3e8] sm:$0xff]
        %v2382 = vld [vmem:[%s5 + $0x3f0] sm:$0xff]
        %v2383 = vld [vmem:[%s5 + $0x3f8] sm:$0xff]
        %v2384 = vld [vmem:[%s5 + $0x400] sm:$0xff]
        %v2385 = vld [vmem:[%s5 + $0x408] sm:$0xff]
        %v2386 = vld [vmem:[%s5 + $0x410] sm:$0xff]
        %v2387 = vld [vmem:[%s5 + $0x418] sm:$0xff]
        %v2388 = vld [vmem:[%s5 + $0x420] sm:$0xff]
        %v2389 = vld [vmem:[%s5 + $0x428] sm:$0xff]
        %v2390 = vld [vmem:[%s5 + $0x430] sm:$0xff]
        %v2391 = vld [vmem:[%s5 + $0x438] sm:$0xff]
        %v2392 = vld [vmem:[%s5 + $0x440] sm:$0xff]
        %v2393 = vld [vmem:[%s5 + $0x448] sm:$0xff]
        %v2394 = vld [vmem:[%s5 + $0x450] sm:$0xff]
        %v2395 = vld [vmem:[%s5 + $0x458] sm:$0xff]
        %v2396 = vld [vmem:[%s5 + $0x460] sm:$0xff]
        %v2397 = vld [vmem:[%s5 + $0x468] sm:$0xff]
        %v2398 = vld [vmem:[%s5 + $0x470] sm:$0xff]
        %v2399 = vld [vmem:[%s5 + $0x478] sm:$0xff]
        %v2400 = vld [vmem:[%s5 + $0x480] sm:$0xff]
        %v2401 = vld [vmem:[%s5 + $0x488] sm:$0xff]
        %v2402 = vld [vmem:[%s5 + $0x490] sm:$0xff]
        %v2403 = vld [vmem:[%s5 + $0x498] sm:$0xff]
        %v2404 = vld [vmem:[%s5 + $0x4a0] sm:$0xff]
        %v2405 = vld [vmem:[%s5 + $0x4a8] sm:$0xff]
        %v2406 = vld [vmem:[%s5 + $0x4b0] sm:$0xff]
        %v2407 = vld [vmem:[%s5 + $0x4b8] sm:$0xff]
        %v2408 = vld [vmem:[%s5 + $0x4c0] sm:$0xff]
        %v2409 = vld [vmem:[%s5 + $0x4c8] sm:$0xff]
        %v2410 = vld [vmem:[%s5 + $0x4d0] sm:$0xff]
        %v2411 = vld [vmem:[%s5 + $0x4d8] sm:$0xff]
        %v2412 = vld [vmem:[%s5 + $0x4e0] sm:$0xff]
        %v2413 = vld [vmem:[%s5 + $0x4e8] sm:$0xff]
        %v2414 = vld [vmem:[%s5 + $0x4f0] sm:$0xff]
        %v2415 = vld [vmem:[%s5 + $0x4f8] sm:$0xff]
        %v2416 = vld [vmem:[%s5 + $0x500] sm:$0xff]
        %v2417 = vld [vmem:[%s5 + $0x508] sm:$0xff]
        %v2418 = vld [vmem:[%s5 + $0x510] sm:$0xff]
        %v2419 = vld [vmem:[%s5 + $0x518] sm:$0xff]
        %v2420 = vld [vmem:[%s5 + $0x520] sm:$0xff]
        %v2421 = vld [vmem:[%s5 + $0x528] sm:$0xff]
        %v2422 = vld [vmem:[%s5 + $0x530] sm:$0xff]
        %v2423 = vld [vmem:[%s5 + $0x538] sm:$0xff]
        %v2424 = vrot.slane %v1954, 4
        %v2425 = vrot.slane %v1955, 4
        %v2426 = vrot.slane %v1956, 4
        %v2427 = vrot.slane %v1957, 4
        %v2431 = vsel %vm595, %v2427, 0
        %2433 = vmatprep.subr.mxu0 0.0
        %2434 = vmatpush1.msra.mxu0 %v2383
        %2435 = vmatprep.subr.mxu0 0.0
        %2436 = vmatpush1.msra.mxu0 %v2382
        %2437 = vmatprep.subr.mxu0 0.0
        %2438 = vmatpush1.msra.mxu0 %v2381
        %2439 = vmatprep.subr.mxu0 0.0
        %2440 = vmatpush1.msra.mxu0 %v2380
        %2441 = vmatprep.subr.mxu0 0.0
        %2442 = vmatpush1.msra.mxu0 %v2379
        %2443 = vmatprep.subr.mxu0 0.0
        %2444 = vmatpush1.msra.mxu0 %v2378
        %2445 = vmatprep.subr.mxu0 0.0
        %2446 = vmatpush1.msra.mxu0 %v2377
        %2447 = vmatprep.subr.mxu0 0.0
        %2448 = vmatpush1.msra.mxu0 %v2376
        %2449 = vmatprep.subr.mxu0 0.0
        %2450 = vmatpush1.msra.mxu0 %v2375
        %2451 = vmatprep.subr.mxu0 0.0
        %2452 = vmatpush1.msra.mxu0 %v2374
        %2453 = vmatprep.subr.mxu0 0.0
        %2454 = vmatpush1.msra.mxu0 %v2373
        %2455 = vmatprep.subr.mxu0 0.0
        %2456 = vmatpush1.msra.mxu0 %v2372
        %2457 = vmatprep.subr.mxu0 0.0
        %2458 = vmatpush1.msra.mxu0 %v2371
        %2459 = vmatprep.subr.mxu0 0.0
        %2460 = vmatpush1.msra.mxu0 %v2370
        %2461 = vmatprep.subr.mxu0 0.0
        %2462 = vmatpush1.msra.mxu0 %v2369
        %2463 = vmatprep.subr.mxu0 0.0
        %2464 = vmatpush1.msra.mxu0 %v2368
        %2465 = vmatprep.subr.mxu0 0.0
        %2466 = vmatpush2.msra.mxu0 %v2399
        %2467 = vmatprep.subr.mxu0 0.0
        %2468 = vmatpush2.msra.mxu0 %v2398
        %2469 = vmatprep.subr.mxu0 0.0
        %2470 = vmatpush2.msra.mxu0 %v2397
        %2471 = vmatprep.subr.mxu0 0.0
        %2472 = vmatpush2.msra.mxu0 %v2396
        %2473 = vmatprep.subr.mxu0 0.0
        %2474 = vmatpush2.msra.mxu0 %v2395
        %2475 = vmatprep.subr.mxu0 0.0
        %2476 = vmatpush2.msra.mxu0 %v2394
        %2477 = vmatprep.subr.mxu0 0.0
        %2478 = vmatpush2.msra.mxu0 %v2393
        %2479 = vmatprep.subr.mxu0 0.0
        %2480 = vmatpush2.msra.mxu0 %v2392
        %2481 = vmatprep.subr.mxu0 0.0
        %2482 = vmatpush2.msra.mxu0 %v2391
        %2483 = vmatprep.subr.mxu0 0.0
        %2484 = vmatpush2.msra.mxu0 %v2390
        %2485 = vmatprep.subr.mxu0 0.0
        %2486 = vmatpush2.msra.mxu0 %v2389
        %2487 = vmatprep.subr.mxu0 0.0
        %2488 = vmatpush2.msra.mxu0 %v2388
        %2489 = vmatprep.subr.mxu0 0.0
        %2490 = vmatpush2.msra.mxu0 %v2387
        %2491 = vmatprep.subr.mxu0 0.0
        %2492 = vmatpush2.msra.mxu0 %v2386
        %2493 = vmatprep.subr.mxu0 0.0
        %2494 = vmatpush2.msra.mxu0 %v2385
        %2495 = vmatprep.subr.mxu0 0.0
        %2496 = vmatpush2.msra.mxu0 %v2384
        %2497 = vmatprep.mubr.f32.mxu0 %v2425
        %2498 = vmatmul.mubr.f32.gmra.mxu0 %v2424
        %v2499 = vpop.f32.mrf.mxu0
        %v2500 = vadd.f32 0.0, %v2499
        %v2501 = vpop.f32.mrf.mxu0
        %2502 = vdwg.mxu0
        %2503 = vmatprep.subr.mxu0 0.0
        %2504 = vmatpush1.msra.mxu0 %v2415
        %2505 = vmatprep.subr.mxu0 0.0
        %2506 = vmatpush1.msra.mxu0 %v2414
        %2507 = vmatprep.subr.mxu0 0.0
        %2508 = vmatpush1.msra.mxu0 %v2413
        %2509 = vmatprep.subr.mxu0 0.0
        %2510 = vmatpush1.msra.mxu0 %v2412
        %2511 = vmatprep.subr.mxu0 0.0
        %2512 = vmatpush1.msra.mxu0 %v2411
        %2513 = vmatprep.subr.mxu0 0.0
        %2514 = vmatpush1.msra.mxu0 %v2410
        %2515 = vmatprep.subr.mxu0 0.0
        %2516 = vmatpush1.msra.mxu0 %v2409
        %2517 = vmatprep.subr.mxu0 0.0
        %2518 = vmatpush1.msra.mxu0 %v2408
        %2519 = vmatprep.subr.mxu0 0.0
        %2520 = vmatpush1.msra.mxu0 %v2407
        %2521 = vmatprep.subr.mxu0 0.0
        %2522 = vmatpush1.msra.mxu0 %v2406
        %2523 = vmatprep.subr.mxu0 0.0
        %2524 = vmatpush1.msra.mxu0 %v2405
        %2525 = vmatprep.subr.mxu0 0.0
        %2526 = vmatpush1.msra.mxu0 %v2404
        %2527 = vmatprep.subr.mxu0 0.0
        %2528 = vmatpush1.msra.mxu0 %v2403
        %2529 = vmatprep.subr.mxu0 0.0
        %2530 = vmatpush1.msra.mxu0 %v2402
        %2531 = vmatprep.subr.mxu0 0.0
        %2532 = vmatpush1.msra.mxu0 %v2401
        %2533 = vmatprep.subr.mxu0 0.0
        %2534 = vmatpush1.msra.mxu0 %v2400
        %2535 = vmatprep.subr.mxu0 0.0
        %2536 = vmatpush2.msra.mxu0 0.0
        %2537 = vmatprep.subr.mxu0 0.0
        %2538 = vmatpush2.msra.mxu0 0.0
        %2539 = vmatprep.subr.mxu0 0.0
        %2540 = vmatpush2.msra.mxu0 0.0
        %2541 = vmatprep.subr.mxu0 0.0
        %2542 = vmatpush2.msra.mxu0 0.0
        %2543 = vmatprep.subr.mxu0 0.0
        %2544 = vmatpush2.msra.mxu0 0.0
        %2545 = vmatprep.subr.mxu0 0.0
        %2546 = vmatpush2.msra.mxu0 0.0
        %2547 = vmatprep.subr.mxu0 0.0
        %2548 = vmatpush2.msra.mxu0 0.0
        %2549 = vmatprep.subr.mxu0 0.0
        %2550 = vmatpush2.msra.mxu0 0.0
        %2551 = vmatprep.subr.mxu0 0.0
        %2552 = vmatpush2.msra.mxu0 %v2423
        %2553 = vmatprep.subr.mxu0 0.0
        %2554 = vmatpush2.msra.mxu0 %v2422
        %2555 = vmatprep.subr.mxu0 0.0
        %2556 = vmatpush2.msra.mxu0 %v2421
        %2557 = vmatprep.subr.mxu0 0.0
        %2558 = vmatpush2.msra.mxu0 %v2420
        %2559 = vmatprep.subr.mxu0 0.0
        %2560 = vmatpush2.msra.mxu0 %v2419
        %2561 = vmatprep.subr.mxu0 0.0
        %2562 = vmatpush2.msra.mxu0 %v2418
        %2563 = vmatprep.subr.mxu0 0.0
        %2564 = vmatpush2.msra.mxu0 %v2417
        %2565 = vmatprep.subr.mxu0 0.0
        %2566 = vmatpush2.msra.mxu0 %v2416
        %2567 = vmatprep.mubr.f32.mxu0 %v2431
        %2568 = vmatmul.mubr.f32.gmra.mxu0 %v2426
        %v2569 = vpop.f32.mrf.mxu0
        %v2570 = vadd.f32 %v2500, %v2569
        %v2571 = vpop.f32.mrf.mxu0
        %2572 = vdwg.mxu0
        %v2573 = vadd.f32 %v2367, %v2570
        %v2574 = vld [vmem:[%s5 + $0x540] sm:$0xff]
        %v2575 = vld [vmem:[%s5 + $0x548] sm:$0xff]
        %v2576 = vld [vmem:[%s5 + $0x550] sm:$0xff]
        %v2577 = vld [vmem:[%s5 + $0x558] sm:$0xff]
        %v2578 = vld [vmem:[%s5 + $0x560] sm:$0xff]
        %v2579 = vld [vmem:[%s5 + $0x568] sm:$0xff]
        %v2580 = vld [vmem:[%s5 + $0x570] sm:$0xff]
        %v2581 = vld [vmem:[%s5 + $0x578] sm:$0xff]
        %v2582 = vld [vmem:[%s5 + $0x580] sm:$0xff]
        %v2583 = vld [vmem:[%s5 + $0x588] sm:$0xff]
        %v2584 = vld [vmem:[%s5 + $0x590] sm:$0xff]
        %v2585 = vld [vmem:[%s5 + $0x598] sm:$0xff]
        %v2586 = vld [vmem:[%s5 + $0x5a0] sm:$0xff]
        %v2587 = vld [vmem:[%s5 + $0x5a8] sm:$0xff]
        %v2588 = vld [vmem:[%s5 + $0x5b0] sm:$0xff]
        %v2589 = vld [vmem:[%s5 + $0x5b8] sm:$0xff]
        %v2590 = vld [vmem:[%s5 + $0x5c0] sm:$0xff]
        %v2591 = vld [vmem:[%s5 + $0x5c8] sm:$0xff]
        %v2592 = vld [vmem:[%s5 + $0x5d0] sm:$0xff]
        %v2593 = vld [vmem:[%s5 + $0x5d8] sm:$0xff]
        %v2594 = vld [vmem:[%s5 + $0x5e0] sm:$0xff]
        %v2595 = vld [vmem:[%s5 + $0x5e8] sm:$0xff]
        %v2596 = vld [vmem:[%s5 + $0x5f0] sm:$0xff]
        %v2597 = vld [vmem:[%s5 + $0x5f8] sm:$0xff]
        %v2598 = vld [vmem:[%s5 + $0x600] sm:$0xff]
        %v2599 = vld [vmem:[%s5 + $0x608] sm:$0xff]
        %v2600 = vld [vmem:[%s5 + $0x610] sm:$0xff]
        %v2601 = vld [vmem:[%s5 + $0x618] sm:$0xff]
        %v2602 = vld [vmem:[%s5 + $0x620] sm:$0xff]
        %v2603 = vld [vmem:[%s5 + $0x628] sm:$0xff]
        %v2604 = vld [vmem:[%s5 + $0x630] sm:$0xff]
        %v2605 = vld [vmem:[%s5 + $0x638] sm:$0xff]
        %v2606 = vld [vmem:[%s5 + $0x640] sm:$0xff]
        %v2607 = vld [vmem:[%s5 + $0x648] sm:$0xff]
        %v2608 = vld [vmem:[%s5 + $0x650] sm:$0xff]
        %v2609 = vld [vmem:[%s5 + $0x658] sm:$0xff]
        %v2610 = vld [vmem:[%s5 + $0x660] sm:$0xff]
        %v2611 = vld [vmem:[%s5 + $0x668] sm:$0xff]
        %v2612 = vld [vmem:[%s5 + $0x670] sm:$0xff]
        %v2613 = vld [vmem:[%s5 + $0x678] sm:$0xff]
        %v2614 = vld [vmem:[%s5 + $0x680] sm:$0xff]
        %v2615 = vld [vmem:[%s5 + $0x688] sm:$0xff]
        %v2616 = vld [vmem:[%s5 + $0x690] sm:$0xff]
        %v2617 = vld [vmem:[%s5 + $0x698] sm:$0xff]
        %v2618 = vld [vmem:[%s5 + $0x6a0] sm:$0xff]
        %v2619 = vld [vmem:[%s5 + $0x6a8] sm:$0xff]
        %v2620 = vld [vmem:[%s5 + $0x6b0] sm:$0xff]
        %v2621 = vld [vmem:[%s5 + $0x6b8] sm:$0xff]
        %v2622 = vld [vmem:[%s5 + $0x6c0] sm:$0xff]
        %v2623 = vld [vmem:[%s5 + $0x6c8] sm:$0xff]
        %v2624 = vld [vmem:[%s5 + $0x6d0] sm:$0xff]
        %v2625 = vld [vmem:[%s5 + $0x6d8] sm:$0xff]
        %v2626 = vld [vmem:[%s5 + $0x6e0] sm:$0xff]
        %v2627 = vld [vmem:[%s5 + $0x6e8] sm:$0xff]
        %v2628 = vld [vmem:[%s5 + $0x6f0] sm:$0xff]
        %v2629 = vld [vmem:[%s5 + $0x6f8] sm:$0xff]
        %v2630 = vrot.slane %v1954, 6
        %v2631 = vrot.slane %v1955, 6
        %v2632 = vrot.slane %v1956, 6
        %v2633 = vrot.slane %v1957, 6
        %v2637 = vsel %vm595, %v2633, 0
        %2639 = vmatprep.subr.mxu0 0.0
        %2640 = vmatpush1.msra.mxu0 %v2589
        %2641 = vmatprep.subr.mxu0 0.0
        %2642 = vmatpush1.msra.mxu0 %v2588
        %2643 = vmatprep.subr.mxu0 0.0
        %2644 = vmatpush1.msra.mxu0 %v2587
        %2645 = vmatprep.subr.mxu0 0.0
        %2646 = vmatpush1.msra.mxu0 %v2586
        %2647 = vmatprep.subr.mxu0 0.0
        %2648 = vmatpush1.msra.mxu0 %v2585
        %2649 = vmatprep.subr.mxu0 0.0
        %2650 = vmatpush1.msra.mxu0 %v2584
        %2651 = vmatprep.subr.mxu0 0.0
        %2652 = vmatpush1.msra.mxu0 %v2583
        %2653 = vmatprep.subr.mxu0 0.0
        %2654 = vmatpush1.msra.mxu0 %v2582
        %2655 = vmatprep.subr.mxu0 0.0
        %2656 = vmatpush1.msra.mxu0 %v2581
        %2657 = vmatprep.subr.mxu0 0.0
        %2658 = vmatpush1.msra.mxu0 %v2580
        %2659 = vmatprep.subr.mxu0 0.0
        %2660 = vmatpush1.msra.mxu0 %v2579
        %2661 = vmatprep.subr.mxu0 0.0
        %2662 = vmatpush1.msra.mxu0 %v2578
        %2663 = vmatprep.subr.mxu0 0.0
        %2664 = vmatpush1.msra.mxu0 %v2577
        %2665 = vmatprep.subr.mxu0 0.0
        %2666 = vmatpush1.msra.mxu0 %v2576
        %2667 = vmatprep.subr.mxu0 0.0
        %2668 = vmatpush1.msra.mxu0 %v2575
        %2669 = vmatprep.subr.mxu0 0.0
        %2670 = vmatpush1.msra.mxu0 %v2574
        %2671 = vmatprep.subr.mxu0 0.0
        %2672 = vmatpush2.msra.mxu0 %v2605
        %2673 = vmatprep.subr.mxu0 0.0
        %2674 = vmatpush2.msra.mxu0 %v2604
        %2675 = vmatprep.subr.mxu0 0.0
        %2676 = vmatpush2.msra.mxu0 %v2603
        %2677 = vmatprep.subr.mxu0 0.0
        %2678 = vmatpush2.msra.mxu0 %v2602
        %2679 = vmatprep.subr.mxu0 0.0
        %2680 = vmatpush2.msra.mxu0 %v2601
        %2681 = vmatprep.subr.mxu0 0.0
        %2682 = vmatpush2.msra.mxu0 %v2600
        %2683 = vmatprep.subr.mxu0 0.0
        %2684 = vmatpush2.msra.mxu0 %v2599
        %2685 = vmatprep.subr.mxu0 0.0
        %2686 = vmatpush2.msra.mxu0 %v2598
        %2687 = vmatprep.subr.mxu0 0.0
        %2688 = vmatpush2.msra.mxu0 %v2597
        %2689 = vmatprep.subr.mxu0 0.0
        %2690 = vmatpush2.msra.mxu0 %v2596
        %2691 = vmatprep.subr.mxu0 0.0
        %2692 = vmatpush2.msra.mxu0 %v2595
        %2693 = vmatprep.subr.mxu0 0.0
        %2694 = vmatpush2.msra.mxu0 %v2594
        %2695 = vmatprep.subr.mxu0 0.0
        %2696 = vmatpush2.msra.mxu0 %v2593
        %2697 = vmatprep.subr.mxu0 0.0
        %2698 = vmatpush2.msra.mxu0 %v2592
        %2699 = vmatprep.subr.mxu0 0.0
        %2700 = vmatpush2.msra.mxu0 %v2591
        %2701 = vmatprep.subr.mxu0 0.0
        %2702 = vmatpush2.msra.mxu0 %v2590
        %2703 = vmatprep.mubr.f32.mxu0 %v2631
        %2704 = vmatmul.mubr.f32.gmra.mxu0 %v2630
        %v2705 = vpop.f32.mrf.mxu0
        %v2706 = vadd.f32 0.0, %v2705
        %v2707 = vpop.f32.mrf.mxu0
        %2708 = vdwg.mxu0
        %2709 = vmatprep.subr.mxu0 0.0
        %2710 = vmatpush1.msra.mxu0 %v2621
        %2711 = vmatprep.subr.mxu0 0.0
        %2712 = vmatpush1.msra.mxu0 %v2620
        %2713 = vmatprep.subr.mxu0 0.0
        %2714 = vmatpush1.msra.mxu0 %v2619
        %2715 = vmatprep.subr.mxu0 0.0
        %2716 = vmatpush1.msra.mxu0 %v2618
        %2717 = vmatprep.subr.mxu0 0.0
        %2718 = vmatpush1.msra.mxu0 %v2617
        %2719 = vmatprep.subr.mxu0 0.0
        %2720 = vmatpush1.msra.mxu0 %v2616
        %2721 = vmatprep.subr.mxu0 0.0
        %2722 = vmatpush1.msra.mxu0 %v2615
        %2723 = vmatprep.subr.mxu0 0.0
        %2724 = vmatpush1.msra.mxu0 %v2614
        %2725 = vmatprep.subr.mxu0 0.0
        %2726 = vmatpush1.msra.mxu0 %v2613
        %2727 = vmatprep.subr.mxu0 0.0
        %2728 = vmatpush1.msra.mxu0 %v2612
        %2729 = vmatprep.subr.mxu0 0.0
        %2730 = vmatpush1.msra.mxu0 %v2611
        %2731 = vmatprep.subr.mxu0 0.0
        %2732 = vmatpush1.msra.mxu0 %v2610
        %2733 = vmatprep.subr.mxu0 0.0
        %2734 = vmatpush1.msra.mxu0 %v2609
        %2735 = vmatprep.subr.mxu0 0.0
        %2736 = vmatpush1.msra.mxu0 %v2608
        %2737 = vmatprep.subr.mxu0 0.0
        %2738 = vmatpush1.msra.mxu0 %v2607
        %2739 = vmatprep.subr.mxu0 0.0
        %2740 = vmatpush1.msra.mxu0 %v2606
        %2741 = vmatprep.subr.mxu0 0.0
        %2742 = vmatpush2.msra.mxu0 0.0
        %2743 = vmatprep.subr.mxu0 0.0
        %2744 = vmatpush2.msra.mxu0 0.0
        %2745 = vmatprep.subr.mxu0 0.0
        %2746 = vmatpush2.msra.mxu0 0.0
        %2747 = vmatprep.subr.mxu0 0.0
        %2748 = vmatpush2.msra.mxu0 0.0
        %2749 = vmatprep.subr.mxu0 0.0
        %2750 = vmatpush2.msra.mxu0 0.0
        %2751 = vmatprep.subr.mxu0 0.0
        %2752 = vmatpush2.msra.mxu0 0.0
        %2753 = vmatprep.subr.mxu0 0.0
        %2754 = vmatpush2.msra.mxu0 0.0
        %2755 = vmatprep.subr.mxu0 0.0
        %2756 = vmatpush2.msra.mxu0 0.0
        %2757 = vmatprep.subr.mxu0 0.0
        %2758 = vmatpush2.msra.mxu0 %v2629
        %2759 = vmatprep.subr.mxu0 0.0
        %2760 = vmatpush2.msra.mxu0 %v2628
        %2761 = vmatprep.subr.mxu0 0.0
        %2762 = vmatpush2.msra.mxu0 %v2627
        %2763 = vmatprep.subr.mxu0 0.0
        %2764 = vmatpush2.msra.mxu0 %v2626
        %2765 = vmatprep.subr.mxu0 0.0
        %2766 = vmatpush2.msra.mxu0 %v2625
        %2767 = vmatprep.subr.mxu0 0.0
        %2768 = vmatpush2.msra.mxu0 %v2624
        %2769 = vmatprep.subr.mxu0 0.0
        %2770 = vmatpush2.msra.mxu0 %v2623
        %2771 = vmatprep.subr.mxu0 0.0
        %2772 = vmatpush2.msra.mxu0 %v2622
        %2773 = vmatprep.mubr.f32.mxu0 %v2637
        %2774 = vmatmul.mubr.f32.gmra.mxu0 %v2632
        %v2775 = vpop.f32.mrf.mxu0
        %v2776 = vadd.f32 %v2706, %v2775
        %v2777 = vpop.f32.mrf.mxu0
        %2778 = vdwg.mxu0
        %v2779 = vadd.f32 %v2573, %v2776
        %vm2780 = vcmask 73728
        %2781 = vst.msk [vmem:[%s307] sm:$0x1] %vm2780, %v2779
        %vm2782 = vcmp.gt.f32.partialorder %v2779, 1.0
        %v2783 = vsel %vm2782, 1, 0
        %v2784 = vcvt.s32.f32 %v2783
        %2785 = vst.msk [vmem:[%s301] sm:$0x1] %vm2780, %v2784
        %s2786 = sand.u32 %s186, 1
        %s2787 = scalar_lea.sflag [#allocation3], %s2786
        %s2788 = sand.u32 %s186, 1
        %s2789 = scalar_lea.vmem [#allocation2], %s2788
        %s2790 = sand.u32 %s212, 1
        %s2791 = scalar_lea.sflag [#allocation5], %s2790
        %s2792 = sand.u32 %s212, 1
        %s2793 = scalar_lea.vmem [#allocation4], %s2792
        // Predicated region
        $region49: #{net_forward.1} parent=47 // pred_check
          %p2794 = pneg %p196
        $region50: #{net_forward.1} parent=47 // pred_check_branch
          %2796 = sbr.rel (%p2794) target = $region52
        $region51: #{net_forward.1} parent=47 // pred_region
          %s2798 = ssub.s32 16, 16
          %2799 = vsyncadd %s2787, %s2798
          %s2800 = smul.addr %s26, 16
          %s2801 = scalar_lea.hbm %s7, %s2800
          %s2803 = sshll.u32 %s2789, 4
          %s2804 = int_to_ptr.vmem [resolvable:$true] %s2803
          %2806 = dma.vmem_to_hbm [thread:$0]  %s2804, 16, %s2801, %s2787
        $region52: #{net_forward.1} parent=47 // pred_fallthru
          _
        // Predicated region
        $region53: #{net_forward.1} parent=47 // pred_check
          %p2807 = pneg %p222
        $region54: #{net_forward.1} parent=47 // pred_check_branch
          %2809 = sbr.rel (%p2807) target = $region56
        $region55: #{net_forward.1} parent=47 // pred_region
          %s2811 = ssub.s32 16, 16
          %2812 = vsyncadd %s2791, %s2811
          %s2813 = smul.addr %s26, 16
          %s2814 = scalar_lea.hbm %s8, %s2813
          %s2816 = sshll.u32 %s2793, 4
          %s2817 = int_to_ptr.vmem [resolvable:$true] %s2816
          %2819 = dma.vmem_to_hbm [thread:$0]  %s2817, 16, %s2814, %s2791
        $region56: #{net_forward.1} parent=47 // pred_fallthru
          _
      $region48: #{net_forward.1} parent=5 // pred_fallthru
        _
      %p2820 = scmp.le.s32.totalorder 2, %s21
      // Predicated region
      $region57: #{net_forward.1} parent=5 // pred_check
        %p2821 = pneg %p2820
      $region58: #{net_forward.1} parent=5 // pred_check_branch
        %2823 = sbr.rel (%p2821) target = $region60
      $region59: #{net_forward.1} parent=5 // pred_region
        %s2824 = ssub.s32 %s21, 2
        // Predicated region
        $region61: #{net_forward.1} parent=59 // pred_check
          %p2825 = pneg %p202
        $region62: #{net_forward.1} parent=59 // pred_check_branch
          %2827 = sbr.rel (%p2825) target = $region64
        $region63: #{net_forward.1} parent=59 // pred_region
          %s2828 = sand.u32 %s187, 1
          %s2829 = scalar_lea.sflag [#allocation3], %s2828
          %s2830 = sand.u32 %s187, 1
          %s2831 = scalar_lea.vmem [#allocation2], %s2830
          %2832 = dma.done %s2829, 16
        $region64: #{net_forward.1} parent=59 // pred_fallthru
          _
        // Predicated region
        $region65: #{net_forward.1} parent=59 // pred_check
          %p2833 = pneg %p228
        $region66: #{net_forward.1} parent=59 // pred_check_branch
          %2835 = sbr.rel (%p2833) target = $region68
        $region67: #{net_forward.1} parent=59 // pred_region
          %s2836 = sand.u32 %s213, 1
          %s2837 = scalar_lea.sflag [#allocation5], %s2836
          %s2838 = sand.u32 %s213, 1
          %s2839 = scalar_lea.vmem [#allocation4], %s2838
          %2840 = dma.done %s2837, 16
        $region68: #{net_forward.1} parent=59 // pred_fallthru
          _
      $region60: #{net_forward.1} parent=5 // pred_fallthru
        _
    $region6: #{net_forward.1} parent=1 // loop_footer
      %s25 = sadd.s32 1, %s21
    $region7: #{net_forward.1} parent=1 // loop_footer_branch
      %20 = sbr.rel target = $region3
    $region8: #{net_forward.1} parent=1 // loop_exit
      _
    %2841 = vsyncpa [#allocation3], 1
    %s2842 = scalar_lea.sflag [#allocation3], 1
    %2843 = vsyncpa %s2842, 1
    %2844 = vsyncpa [#allocation5], 1
    %s2845 = scalar_lea.sflag [#allocation5], 1
    %2846 = vsyncpa %s2845, 1

</llo_original>
